<compile_context>
chip_gen: v5e
topology: v5e:2x2
jax: 0.10.0
libtpu: 0.0.40
codegen_flags: <defaults>
</compile_context>

<pallas_src>
import jax
import jax.numpy as jnp
from jax.experimental import pallas as pl
from jax.experimental.pallas import tpu as pltpu


def mlp_kernel(src_ref, dst_ref, w1s_ref, w1d_ref, b1_ref,
               w2_ref, b2_ref, w3_ref, b3_ref, o_ref):
    # Fused 3-layer MLP on one tile of edges (dropout = identity in eval mode):
    #   h = relu([src,dst] @ W1 + b1) = relu(src @ W1[:in] + dst @ W1[in:] + b1)
    #   h = relu(h @ W2 + b2)
    #   o = sigmoid(h @ W3 + b3)
    # Operands are bf16 (halves streamed HBM bytes); accumulation / bias / ReLU /
    # sigmoid stay in f32 (required on v5e, harmless elsewhere).
    h = (jnp.dot(src_ref[...], w1s_ref[...], preferred_element_type=jnp.float32)
         + jnp.dot(dst_ref[...], w1d_ref[...], preferred_element_type=jnp.float32)
         + b1_ref[...])
    h = jnp.maximum(h, 0.0)

    h = jnp.dot(h.astype(w2_ref.dtype), w2_ref[...],
                preferred_element_type=jnp.float32) + b2_ref[...]
    h = jnp.maximum(h, 0.0)

    h = jnp.dot(h.astype(w3_ref.dtype), w3_ref[...],
                preferred_element_type=jnp.float32) + b3_ref[...]
    o_ref[...] = jax.nn.sigmoid(h)


def mlp_link_predict(node_feat, src, dst, params, *, tm=512):
    """Gather src/dst node features and run the fused MLP Pallas kernel.

    node_feat: (N, in_size) float32
    src, dst : (E,) int32 node indices
    params   : dict with w1 (2*in, hid), b1 (hid,), w2 (hid, hid), b2 (hid,),
               w3 (hid, 1), b3 (1,)
    returns  : (E,) float32 sigmoid scores
    """
    E = src.shape[0]
    in_size = node_feat.shape[1]
    hid = params["w1"].shape[1]
    out_size = params["w3"].shape[1]

    # Gather endpoint features (XLA gather) and cast streamed operands to bf16.
    # TODO(synk): for very large E, fuse this gather into the kernel (the node table
    # easily fits VMEM) so only the int32 indices are streamed from HBM.
    compute_dtype = jnp.bfloat16
    src_h = node_feat[src].astype(compute_dtype)
    dst_h = node_feat[dst].astype(compute_dtype)

    # Split W1 so the (E, 2*in) concatenated array never exists in HBM.
    w1 = params["w1"].astype(compute_dtype)
    w1_src = w1[:in_size]
    w1_dst = w1[in_size:]
    w2 = params["w2"].astype(compute_dtype)
    w3 = params["w3"].astype(compute_dtype)

    # Biases stay f32 (added to the f32 MXU accumulators), as (1, dim) rows.
    b1 = params["b1"].reshape(1, hid).astype(jnp.float32)
    b2 = params["b2"].reshape(1, hid).astype(jnp.float32)
    b3 = params["b3"].reshape(1, out_size).astype(jnp.float32)

    # Large edge tile for HBM-bandwidth efficiency (sweep 512-2048). cdiv grid +
    # Pallas' automatic boundary masking handles arbitrary E (no divisibility needed).
    tm = max(8, min(tm, ((E + 7) // 8) * 8))
    grid = (pl.cdiv(E, tm),)

    const = lambda i: (0, 0)   # resident operands (weights / biases), fetched once
    tiled = lambda i: (i, 0)   # streamed per-edge operands

    out = pl.pallas_call(
        mlp_kernel,
        out_shape=jax.ShapeDtypeStruct((E, out_size), jnp.float32),
        grid_spec=pltpu.PrefetchScalarGridSpec(
            num_scalar_prefetch=0,
            grid=grid,
            in_specs=[
                pl.BlockSpec((tm, in_size), tiled),      # src feature tile
                pl.BlockSpec((tm, in_size), tiled),      # dst feature tile
                pl.BlockSpec((in_size, hid), const),     # W1 (src half)
                pl.BlockSpec((in_size, hid), const),     # W1 (dst half)
                pl.BlockSpec((1, hid), const),           # b1
                pl.BlockSpec((hid, hid), const),         # W2
                pl.BlockSpec((1, hid), const),           # b2
                pl.BlockSpec((hid, out_size), const),    # W3
                pl.BlockSpec((1, out_size), const),      # b3
            ],
            out_specs=pl.BlockSpec((tm, out_size), tiled),
        ),
        compiler_params=pltpu.CompilerParams(
            dimension_semantics=("parallel",),           # shards grid across v7x TCs
            # Tiny working set here; explicit cap keeps the same config safe on
            # v5e (16 MiB default scoped limit) and v7x (64 MiB physical VMEM).
            # If hid is ever scaled up (>=2048), also single-buffer the constant
            # weight BlockSpecs (pipeline_mode=pl.Buffered) to halve their footprint.
            vmem_limit_bytes=32 * 1024 * 1024,
        ),
    )(src_h, dst_h, w1_src, w1_dst, b1, w2, b2, w3, b3)

    # torch.sigmoid(h).squeeze() with out_size==1 -> shape (E,)
    return jnp.squeeze(out, axis=-1)


def init_params(key, in_size, hid_size, out_size):
    """Deterministic init mimicking nn.Linear default (uniform ±1/sqrt(fan_in))."""
    ks = jax.random.split(key, 6)
    def lin(kw, kb, fan_in, fan_out):
        bound = 1.0 / jnp.sqrt(fan_in)
        w = jax.random.uniform(kw, (fan_in, fan_out), jnp.float32, -bound, bound)
        b = jax.random.uniform(kb, (fan_out,), jnp.float32, -bound, bound)
        return w, b
    w1, b1 = lin(ks[0], ks[1], in_size * 2, hid_size)
    w2, b2 = lin(ks[2], ks[3], hid_size, hid_size)
    w3, b3 = lin(ks[4], ks[5], hid_size, out_size)
    return {"w1": w1, "b1": b1, "w2": w2, "b2": b2, "w3": w3, "b3": b3}


if __name__ == "__main__":
    key = jax.random.PRNGKey(0)
    k_feat, k_src, k_dst, k_params = jax.random.split(key, 4)

    # Small synthetic "graph": node feature table + edge endpoints.
    num_nodes = 64
    in_size = 16
    hid_size = 32
    out_size = 1
    num_edges = 600            # deliberately not a multiple of the tile (tail path)

    node_feat = jax.random.normal(k_feat, (num_nodes, in_size), jnp.float32)
    src = jax.random.randint(k_src, (num_edges,), 0, num_nodes, jnp.int32)
    dst = jax.random.randint(k_dst, (num_edges,), 0, num_nodes, jnp.int32)

    params = init_params(k_params, in_size, hid_size, out_size)

    # TODO(synk): dropout is omitted (module evaluated in eval mode -> identity).
    scores = mlp_link_predict(node_feat, src, dst, params, tm=512)
    jax.block_until_ready(scores)

    # Sanity check against pure-f32 JAX reference (tolerance loosened for bf16 operands).
    x = jnp.concatenate([node_feat[src], node_feat[dst]], axis=-1)
    h = jnp.maximum(x @ params["w1"] + params["b1"], 0.0)
    h = jnp.maximum(h @ params["w2"] + params["b2"], 0.0)
    ref = jax.nn.sigmoid(h @ params["w3"] + params["b3"]).squeeze(-1)
    assert scores.shape == (num_edges,)
    assert jnp.allclose(scores, ref, atol=2e-2), "mismatch vs reference"

    print("KERNEL_OK")
</pallas_src>

<mosaic_0001>
module attributes {stable_mosaic.version = 11 : i64} {
  func.func @mlp_kernel(%arg0: i32, %arg1: memref<512x16xbf16, #tpu.memory_space<vmem>>, %arg2: memref<512x16xbf16, #tpu.memory_space<vmem>>, %arg3: memref<16x32xbf16, #tpu.memory_space<vmem>>, %arg4: memref<16x32xbf16, #tpu.memory_space<vmem>>, %arg5: memref<1x32xf32, #tpu.memory_space<vmem>>, %arg6: memref<32x32xbf16, #tpu.memory_space<vmem>>, %arg7: memref<1x32xf32, #tpu.memory_space<vmem>>, %arg8: memref<32x1xbf16, #tpu.memory_space<vmem>>, %arg9: memref<1x1xf32, #tpu.memory_space<vmem>>, %arg10: memref<512x1xf32, #tpu.memory_space<vmem>>) attributes {dimension_semantics = [#tpu.dimension_semantics<parallel>], iteration_bounds = array<i64: 2>, scalar_prefetch = 0 : i64, scratch_operands = 0 : i64, tpu.core_type = #tpu.core_type<tc>, window_params = [{transform_indices = @transform_0, window_bounds = array<i64: 512, 16>}, {transform_indices = @transform_1, window_bounds = array<i64: 512, 16>}, {pipeline_mode = #tpu.pipeline_mode<synchronous>, transform_indices = @transform_2, window_bounds = array<i64: 16, 32>}, {pipeline_mode = #tpu.pipeline_mode<synchronous>, transform_indices = @transform_3, window_bounds = array<i64: 16, 32>}, {pipeline_mode = #tpu.pipeline_mode<synchronous>, transform_indices = @transform_4, window_bounds = array<i64: 1, 32>}, {pipeline_mode = #tpu.pipeline_mode<synchronous>, transform_indices = @transform_5, window_bounds = array<i64: 32, 32>}, {pipeline_mode = #tpu.pipeline_mode<synchronous>, transform_indices = @transform_6, window_bounds = array<i64: 1, 32>}, {pipeline_mode = #tpu.pipeline_mode<synchronous>, transform_indices = @transform_7, window_bounds = array<i64: 32, 1>}, {pipeline_mode = #tpu.pipeline_mode<synchronous>, transform_indices = @transform_8, window_bounds = array<i64: 1, 1>}, {transform_indices = @transform_9, window_bounds = array<i64: 512, 1>}]} {
    %c0 = arith.constant 0 : index
    %c0_0 = arith.constant 0 : index
    %0 = vector.load %arg1[%c0, %c0_0] : memref<512x16xbf16, #tpu.memory_space<vmem>>, vector<512x16xbf16>
    %c0_1 = arith.constant 0 : index
    %c0_2 = arith.constant 0 : index
    %1 = vector.load %arg3[%c0_1, %c0_2] : memref<16x32xbf16, #tpu.memory_space<vmem>>, vector<16x32xbf16>
    %cst = arith.constant dense<0.000000e+00> : vector<512x32xf32>
    %2 = tpu.matmul %0, %1, %cst {dimension_numbers = #tpu.dot_dimension_numbers<[1], [0], [0], [1], [0, 0, 1, 1], [], []>} : vector<512x16xbf16>, vector<16x32xbf16>, vector<512x32xf32> -> vector<512x32xf32>
    %c0_3 = arith.constant 0 : index
    %c0_4 = arith.constant 0 : index
    %3 = vector.load %arg2[%c0_3, %c0_4] : memref<512x16xbf16, #tpu.memory_space<vmem>>, vector<512x16xbf16>
    %c0_5 = arith.constant 0 : index
    %c0_6 = arith.constant 0 : index
    %4 = vector.load %arg4[%c0_5, %c0_6] : memref<16x32xbf16, #tpu.memory_space<vmem>>, vector<16x32xbf16>
    %cst_7 = arith.constant dense<0.000000e+00> : vector<512x32xf32>
    %5 = tpu.matmul %3, %4, %cst_7 {dimension_numbers = #tpu.dot_dimension_numbers<[1], [0], [0], [1], [0, 0, 1, 1], [], []>} : vector<512x16xbf16>, vector<16x32xbf16>, vector<512x32xf32> -> vector<512x32xf32>
    %6 = arith.addf %2, %5 : vector<512x32xf32>
    %c0_8 = arith.constant 0 : index
    %c0_9 = arith.constant 0 : index
    %7 = vector.load %arg5[%c0_8, %c0_9] : memref<1x32xf32, #tpu.memory_space<vmem>>, vector<1x32xf32>
    %8 = vector.broadcast %7 : vector<1x32xf32> to vector<512x32xf32>
    %9 = arith.addf %6, %8 : vector<512x32xf32>
    %cst_10 = arith.constant 0.000000e+00 : f32
    %10 = vector.broadcast %cst_10 : f32 to vector<512x32xf32>
    %11 = arith.maximumf %9, %10 : vector<512x32xf32>
    %12 = arith.truncf %11 : vector<512x32xf32> to vector<512x32xbf16>
    %c0_11 = arith.constant 0 : index
    %c0_12 = arith.constant 0 : index
    %13 = vector.load %arg6[%c0_11, %c0_12] : memref<32x32xbf16, #tpu.memory_space<vmem>>, vector<32x32xbf16>
    %cst_13 = arith.constant dense<0.000000e+00> : vector<512x32xf32>
    %14 = tpu.matmul %12, %13, %cst_13 {dimension_numbers = #tpu.dot_dimension_numbers<[1], [0], [0], [1], [0, 0, 1, 1], [], []>} : vector<512x32xbf16>, vector<32x32xbf16>, vector<512x32xf32> -> vector<512x32xf32>
    %c0_14 = arith.constant 0 : index
    %c0_15 = arith.constant 0 : index
    %15 = vector.load %arg7[%c0_14, %c0_15] : memref<1x32xf32, #tpu.memory_space<vmem>>, vector<1x32xf32>
    %16 = vector.broadcast %15 : vector<1x32xf32> to vector<512x32xf32>
    %17 = arith.addf %14, %16 : vector<512x32xf32>
    %cst_16 = arith.constant 0.000000e+00 : f32
    %18 = vector.broadcast %cst_16 : f32 to vector<512x32xf32>
    %19 = arith.maximumf %17, %18 : vector<512x32xf32>
    %20 = arith.truncf %19 : vector<512x32xf32> to vector<512x32xbf16>
    %c0_17 = arith.constant 0 : index
    %c0_18 = arith.constant 0 : index
    %21 = vector.load %arg8[%c0_17, %c0_18] : memref<32x1xbf16, #tpu.memory_space<vmem>>, vector<32x1xbf16>
    %cst_19 = arith.constant dense<0.000000e+00> : vector<512x1xf32>
    %22 = tpu.matmul %20, %21, %cst_19 {dimension_numbers = #tpu.dot_dimension_numbers<[1], [0], [0], [1], [0, 0, 1, 1], [], []>} : vector<512x32xbf16>, vector<32x1xbf16>, vector<512x1xf32> -> vector<512x1xf32>
    %c0_20 = arith.constant 0 : index
    %c0_21 = arith.constant 0 : index
    %23 = vector.load %arg9[%c0_20, %c0_21] : memref<1x1xf32, #tpu.memory_space<vmem>>, vector<1x1xf32>
    %24 = vector.broadcast %23 : vector<1x1xf32> to vector<512x1xf32>
    %25 = arith.addf %22, %24 : vector<512x1xf32>
    %26 = arith.negf %25 : vector<512x1xf32>
    %27 = math.exp %26 : vector<512x1xf32>
    %cst_22 = arith.constant 1.000000e+00 : f32
    %28 = vector.broadcast %cst_22 : f32 to vector<512x1xf32>
    %29 = arith.addf %28, %27 : vector<512x1xf32>
    %30 = arith.divf %28, %29 : vector<512x1xf32>
    %c0_23 = arith.constant 0 : index
    %c0_24 = arith.constant 0 : index
    %31 = vector.load %arg10[%c0_23, %c0_24] : memref<512x1xf32, #tpu.memory_space<vmem>>, vector<512x1xf32>
    tpu.vector_store %arg10[%c0_23, %c0_24], %30 {strides = array<i32>} : memref<512x1xf32, #tpu.memory_space<vmem>>, vector<512x1xf32>,
    return
  }
  func.func @transform_0(%arg0: i32) -> (i32, i32) {
    %c0_i32 = arith.constant 0 : i32
    %c0_i32_0 = arith.constant 0 : i32
    return %arg0, %c0_i32 : i32, i32
  }
  func.func @transform_1(%arg0: i32) -> (i32, i32) {
    %c0_i32 = arith.constant 0 : i32
    %c0_i32_0 = arith.constant 0 : i32
    return %arg0, %c0_i32 : i32, i32
  }
  func.func @transform_2(%arg0: i32) -> (i32, i32) {
    %c0_i32 = arith.constant 0 : i32
    %c0_i32_0 = arith.constant 0 : i32
    %c0_i32_1 = arith.constant 0 : i32
    return %c0_i32, %c0_i32_0 : i32, i32
  }
  func.func @transform_3(%arg0: i32) -> (i32, i32) {
    %c0_i32 = arith.constant 0 : i32
    %c0_i32_0 = arith.constant 0 : i32
    %c0_i32_1 = arith.constant 0 : i32
    return %c0_i32, %c0_i32_0 : i32, i32
  }
  func.func @transform_4(%arg0: i32) -> (i32, i32) {
    %c0_i32 = arith.constant 0 : i32
    %c0_i32_0 = arith.constant 0 : i32
    %c0_i32_1 = arith.constant 0 : i32
    return %c0_i32, %c0_i32_0 : i32, i32
  }
  func.func @transform_5(%arg0: i32) -> (i32, i32) {
    %c0_i32 = arith.constant 0 : i32
    %c0_i32_0 = arith.constant 0 : i32
    %c0_i32_1 = arith.constant 0 : i32
    return %c0_i32, %c0_i32_0 : i32, i32
  }
  func.func @transform_6(%arg0: i32) -> (i32, i32) {
    %c0_i32 = arith.constant 0 : i32
    %c0_i32_0 = arith.constant 0 : i32
    %c0_i32_1 = arith.constant 0 : i32
    return %c0_i32, %c0_i32_0 : i32, i32
  }
  func.func @transform_7(%arg0: i32) -> (i32, i32) {
    %c0_i32 = arith.constant 0 : i32
    %c0_i32_0 = arith.constant 0 : i32
    %c0_i32_1 = arith.constant 0 : i32
    return %c0_i32, %c0_i32_0 : i32, i32
  }
  func.func @transform_8(%arg0: i32) -> (i32, i32) {
    %c0_i32 = arith.constant 0 : i32
    %c0_i32_0 = arith.constant 0 : i32
    %c0_i32_1 = arith.constant 0 : i32
    return %c0_i32, %c0_i32_0 : i32, i32
  }
  func.func @transform_9(%arg0: i32) -> (i32, i32) {
    %c0_i32 = arith.constant 0 : i32
    %c0_i32_0 = arith.constant 0 : i32
    return %arg0, %c0_i32 : i32, i32
  }
}

</mosaic_0001>

<llo_original>
// kernel: tpu_custom_call.1
$region0: #{tpu_custom_call.1}
  #allocation0 [shape = 'u32[]', space=smem, size = 0x4, offset = 0x4, fixed_abs, tag = 'smem constant byte address 0x4 - core index']
  #allocation1 [shape = 'u32[72,128]{1,0:T(1,128)}', space=vmem, size = 0x9000, scoped, tag = 'internal scratch']
  #allocation2 [shape = 'f32[1,1]{1,0:T(1,128)S(1)}', space=vmem, size = 0x200, scoped, tag = 'scoped memory for tpu_custom_call.1']
  %s0 = inlined_call_operand.vmem [shape: bf16[600,16], index: 0, kind: input, shape index: {}]
  %s1 = inlined_call_operand.vmem [shape: bf16[600,16], index: 1, kind: input, shape index: {}]
  %s2 = inlined_call_operand.vmem [shape: bf16[16,32], index: 2, kind: input, shape index: {}]
  %s3 = inlined_call_operand.vmem [shape: bf16[16,32], index: 3, kind: input, shape index: {}]
  %s4 = inlined_call_operand.vmem [shape: f32[1,32], index: 4, kind: input, shape index: {}]
  %s5 = inlined_call_operand.vmem [shape: bf16[32,32], index: 5, kind: input, shape index: {}]
  %s6 = inlined_call_operand.vmem [shape: f32[1,32], index: 6, kind: input, shape index: {}]
  %s7 = inlined_call_operand.vmem [shape: bf16[32,1], index: 7, kind: input, shape index: {}]
  %s8 = inlined_call_operand.<no memory space> [shape: f32[1,1], index: 8, kind: input, shape index: {}]
  %s9 = inlined_call_operand.vmem [shape: f32[600,1], index: 9, kind: output, shape index: {}]
  %s10 = sld [smem:[#allocation0]]
  $region117: #{tpu_custom_call.1} parent=0
    _
  %s12 = ssub.s32 1, %s10
  %s13 = scalar_select 0, %s12, %s10
  %v14 = vstv %s8
  %15 = vst [vmem:[#allocation2] sm:$0x1] %v14
  $region1: #{tpu_custom_call.1} parent=0
    #allocation3 [shape = 'u8[524288]{0}', space=vmem, size = 0x80000, scoped, tag = 'output window, operand 0']
    loop: start=0, step=1, limit=4
    $region2: #{tpu_custom_call.1} parent=1 // loop_pre_header
      _
    $region3: #{tpu_custom_call.1} parent=1 // loop_header
      %s17 = sphi 0, %s21
      %p18 = scmp.ge.s32.totalorder %s17, 4
      %s27 = sphi 0, %s29
      %s30 = sphi 0, %s27
      %s31 = sphi 0, %s30
      %s47 = sphi 0, %s31
      %s53 = sphi 0, %s55
      %s56 = sphi 0, %s53
      %s57 = sphi 0, %s56
      %s73 = sphi 0, %s57
      %s77 = sphi 0, %s77
      %s79 = sphi 0, %s77
      %s80 = sphi 0, %s79
      %s94 = sphi 0, %s80
      %s98 = sphi 0, %s98
      %s100 = sphi 0, %s98
      %s101 = sphi 0, %s100
      %s115 = sphi 0, %s101
      %s119 = sphi 0, %s119
      %s121 = sphi 0, %s119
      %s122 = sphi 0, %s121
      %s136 = sphi 0, %s122
      %s140 = sphi 0, %s140
      %s142 = sphi 0, %s140
      %s143 = sphi 0, %s142
      %s157 = sphi 0, %s143
      %s161 = sphi 0, %s161
      %s163 = sphi 0, %s161
      %s164 = sphi 0, %s163
      %s178 = sphi 0, %s164
      %s182 = sphi 0, %s182
      %s184 = sphi 0, %s182
      %s185 = sphi 0, %s184
      %s199 = sphi 0, %s185
      %s203 = sphi 0, %s203
      %s205 = sphi 0, %s203
      %s206 = sphi 0, %s205
      %s220 = sphi 0, %s206
      %s226 = sphi 0, %s228
      %s229 = sphi 0, %s226
      %s230 = sphi 0, %s229
      %s246 = sphi 0, %s230
    $region4: #{tpu_custom_call.1} parent=1 // loop_header_branch
      %20 = sbr.rel (%p18) target = $region8
    $region5: #{tpu_custom_call.1} parent=1 // loop_body
      %s22 = ssub.s32 %s17, 1
      %s23 = ssub.s32 %s17, 2
      %s24 = sadd.s32 %s17, 1
      %s25 = ssub.s32 %s17, %s24
      %p26 = scmp.eq.s32.totalorder %s25, 0
      %s28 = sadd.s32 %s27, 1
      %s29 = scalar_select %p26, %s27, %s28
      %p32 = pneg %p26
      %p33 = scmp.eq.s32.totalorder %s17, 1
      %p34 = por %p32, %p33
      %p35 = scmp.ne.s32.totalorder %s27, %s30
      %p36 = scmp.eq.s32.totalorder %s17, 0
      %p37 = por %p35, %p36
      %p38 = scmp.ne.s32.totalorder %s27, %s30
      %p39 = scmp.eq.s32.totalorder %s22, 1
      %p40 = por %p38, %p39
      %p41 = scmp.ne.s32.totalorder %s30, %s31
      %p42 = scmp.eq.s32.totalorder %s22, 0
      %p43 = por %p41, %p42
      %p44 = scmp.ne.s32.totalorder %s30, %s31
      %p45 = scmp.eq.s32.totalorder %s23, 1
      %p46 = por %p44, %p45
      %p48 = scmp.ne.s32.totalorder %s31, %s47
      %p49 = scmp.eq.s32.totalorder %s23, 0
      %p50 = por %p48, %p49
      %s51 = ssub.s32 %s17, %s24
      %p52 = scmp.eq.s32.totalorder %s51, 0
      %s54 = sadd.s32 %s53, 1
      %s55 = scalar_select %p52, %s53, %s54
      %p58 = pneg %p52
      %p59 = scmp.eq.s32.totalorder %s17, 1
      %p60 = por %p58, %p59
      %p61 = scmp.ne.s32.totalorder %s53, %s56
      %p62 = scmp.eq.s32.totalorder %s17, 0
      %p63 = por %p61, %p62
      %p64 = scmp.ne.s32.totalorder %s53, %s56
      %p65 = scmp.eq.s32.totalorder %s22, 1
      %p66 = por %p64, %p65
      %p67 = scmp.ne.s32.totalorder %s56, %s57
      %p68 = scmp.eq.s32.totalorder %s22, 0
      %p69 = por %p67, %p68
      %p70 = scmp.ne.s32.totalorder %s56, %s57
      %p71 = scmp.eq.s32.totalorder %s23, 1
      %p72 = por %p70, %p71
      %p74 = scmp.ne.s32.totalorder %s57, %s73
      %p75 = scmp.eq.s32.totalorder %s23, 0
      %p76 = por %p74, %p75
      %s78 = sadd.s32 %s77, 1
      %p81 = scmp.eq.s32.totalorder %s17, 1
      %p82 = scmp.ne.s32.totalorder %s77, %s79
      %p83 = scmp.eq.s32.totalorder %s17, 0
      %p84 = por %p82, %p83
      %p85 = scmp.ne.s32.totalorder %s77, %s79
      %p86 = scmp.eq.s32.totalorder %s22, 1
      %p87 = por %p85, %p86
      %p88 = scmp.ne.s32.totalorder %s79, %s80
      %p89 = scmp.eq.s32.totalorder %s22, 0
      %p90 = por %p88, %p89
      %p91 = scmp.ne.s32.totalorder %s79, %s80
      %p92 = scmp.eq.s32.totalorder %s23, 1
      %p93 = por %p91, %p92
      %p95 = scmp.ne.s32.totalorder %s80, %s94
      %p96 = scmp.eq.s32.totalorder %s23, 0
      %p97 = por %p95, %p96
      %s99 = sadd.s32 %s98, 1
      %p102 = scmp.eq.s32.totalorder %s17, 1
      %p103 = scmp.ne.s32.totalorder %s98, %s100
      %p104 = scmp.eq.s32.totalorder %s17, 0
      %p105 = por %p103, %p104
      %p106 = scmp.ne.s32.totalorder %s98, %s100
      %p107 = scmp.eq.s32.totalorder %s22, 1
      %p108 = por %p106, %p107
      %p109 = scmp.ne.s32.totalorder %s100, %s101
      %p110 = scmp.eq.s32.totalorder %s22, 0
      %p111 = por %p109, %p110
      %p112 = scmp.ne.s32.totalorder %s100, %s101
      %p113 = scmp.eq.s32.totalorder %s23, 1
      %p114 = por %p112, %p113
      %p116 = scmp.ne.s32.totalorder %s101, %s115
      %p117 = scmp.eq.s32.totalorder %s23, 0
      %p118 = por %p116, %p117
      %s120 = sadd.s32 %s119, 1
      %p123 = scmp.eq.s32.totalorder %s17, 1
      %p124 = scmp.ne.s32.totalorder %s119, %s121
      %p125 = scmp.eq.s32.totalorder %s17, 0
      %p126 = por %p124, %p125
      %p127 = scmp.ne.s32.totalorder %s119, %s121
      %p128 = scmp.eq.s32.totalorder %s22, 1
      %p129 = por %p127, %p128
      %p130 = scmp.ne.s32.totalorder %s121, %s122
      %p131 = scmp.eq.s32.totalorder %s22, 0
      %p132 = por %p130, %p131
      %p133 = scmp.ne.s32.totalorder %s121, %s122
      %p134 = scmp.eq.s32.totalorder %s23, 1
      %p135 = por %p133, %p134
      %p137 = scmp.ne.s32.totalorder %s122, %s136
      %p138 = scmp.eq.s32.totalorder %s23, 0
      %p139 = por %p137, %p138
      %s141 = sadd.s32 %s140, 1
      %p144 = scmp.eq.s32.totalorder %s17, 1
      %p145 = scmp.ne.s32.totalorder %s140, %s142
      %p146 = scmp.eq.s32.totalorder %s17, 0
      %p147 = por %p145, %p146
      %p148 = scmp.ne.s32.totalorder %s140, %s142
      %p149 = scmp.eq.s32.totalorder %s22, 1
      %p150 = por %p148, %p149
      %p151 = scmp.ne.s32.totalorder %s142, %s143
      %p152 = scmp.eq.s32.totalorder %s22, 0
      %p153 = por %p151, %p152
      %p154 = scmp.ne.s32.totalorder %s142, %s143
      %p155 = scmp.eq.s32.totalorder %s23, 1
      %p156 = por %p154, %p155
      %p158 = scmp.ne.s32.totalorder %s143, %s157
      %p159 = scmp.eq.s32.totalorder %s23, 0
      %p160 = por %p158, %p159
      %s162 = sadd.s32 %s161, 1
      %p165 = scmp.eq.s32.totalorder %s17, 1
      %p166 = scmp.ne.s32.totalorder %s161, %s163
      %p167 = scmp.eq.s32.totalorder %s17, 0
      %p168 = por %p166, %p167
      %p169 = scmp.ne.s32.totalorder %s161, %s163
      %p170 = scmp.eq.s32.totalorder %s22, 1
      %p171 = por %p169, %p170
      %p172 = scmp.ne.s32.totalorder %s163, %s164
      %p173 = scmp.eq.s32.totalorder %s22, 0
      %p174 = por %p172, %p173
      %p175 = scmp.ne.s32.totalorder %s163, %s164
      %p176 = scmp.eq.s32.totalorder %s23, 1
      %p177 = por %p175, %p176
      %p179 = scmp.ne.s32.totalorder %s164, %s178
      %p180 = scmp.eq.s32.totalorder %s23, 0
      %p181 = por %p179, %p180
      %s183 = sadd.s32 %s182, 1
      %p186 = scmp.eq.s32.totalorder %s17, 1
      %p187 = scmp.ne.s32.totalorder %s182, %s184
      %p188 = scmp.eq.s32.totalorder %s17, 0
      %p189 = por %p187, %p188
      %p190 = scmp.ne.s32.totalorder %s182, %s184
      %p191 = scmp.eq.s32.totalorder %s22, 1
      %p192 = por %p190, %p191
      %p193 = scmp.ne.s32.totalorder %s184, %s185
      %p194 = scmp.eq.s32.totalorder %s22, 0
      %p195 = por %p193, %p194
      %p196 = scmp.ne.s32.totalorder %s184, %s185
      %p197 = scmp.eq.s32.totalorder %s23, 1
      %p198 = por %p196, %p197
      %p200 = scmp.ne.s32.totalorder %s185, %s199
      %p201 = scmp.eq.s32.totalorder %s23, 0
      %p202 = por %p200, %p201
      %s204 = sadd.s32 %s203, 1
      %p207 = scmp.eq.s32.totalorder %s17, 1
      %p208 = scmp.ne.s32.totalorder %s203, %s205
      %p209 = scmp.eq.s32.totalorder %s17, 0
      %p210 = por %p208, %p209
      %p211 = scmp.ne.s32.totalorder %s203, %s205
      %p212 = scmp.eq.s32.totalorder %s22, 1
      %p213 = por %p211, %p212
      %p214 = scmp.ne.s32.totalorder %s205, %s206
      %p215 = scmp.eq.s32.totalorder %s22, 0
      %p216 = por %p214, %p215
      %p217 = scmp.ne.s32.totalorder %s205, %s206
      %p218 = scmp.eq.s32.totalorder %s23, 1
      %p219 = por %p217, %p218
      %p221 = scmp.ne.s32.totalorder %s206, %s220
      %p222 = scmp.eq.s32.totalorder %s23, 0
      %p223 = por %p221, %p222
      %s224 = ssub.s32 %s17, %s24
      %p225 = scmp.eq.s32.totalorder %s224, 0
      %s227 = sadd.s32 %s226, 1
      %s228 = scalar_select %p225, %s226, %s227
      %p231 = pneg %p225
      %p232 = scmp.eq.s32.totalorder %s17, 1
      %p233 = por %p231, %p232
      %p234 = scmp.ne.s32.totalorder %s226, %s229
      %p235 = scmp.eq.s32.totalorder %s17, 0
      %p236 = por %p234, %p235
      %p237 = scmp.ne.s32.totalorder %s226, %s229
      %p238 = scmp.eq.s32.totalorder %s22, 1
      %p239 = por %p237, %p238
      %p240 = scmp.ne.s32.totalorder %s229, %s230
      %p241 = scmp.eq.s32.totalorder %s22, 0
      %p242 = por %p240, %p241
      %p243 = scmp.ne.s32.totalorder %s229, %s230
      %p244 = scmp.eq.s32.totalorder %s23, 1
      %p245 = por %p243, %p244
      %p247 = scmp.ne.s32.totalorder %s230, %s246
      %p248 = scmp.eq.s32.totalorder %s23, 0
      %p249 = por %p247, %p248
      %p250 = scmp.le.s32.totalorder 1, %s17
      %p251 = scmp.lt.s32.totalorder %s17, 3
      %p252 = pnand %p250, %p251
      %p253 = pneg %p252
      // Predicated region
      $region9: #{tpu_custom_call.1} parent=5 // pred_check
        _
      $region10: #{tpu_custom_call.1} parent=5 // pred_check_branch
        %255 = sbr.rel (%p252) target = $region12
      $region11: #{tpu_custom_call.1} parent=5 // pred_region
        %s256 = ssub.s32 %s17, 1
        // Predicated region
        $region13: #{tpu_custom_call.1} parent=11 // pred_check
          %p257 = pneg %p90
        $region14: #{tpu_custom_call.1} parent=11 // pred_check_branch
          %259 = sbr.rel (%p257) target = $region16
        $region15: #{tpu_custom_call.1} parent=11 // pred_region
          _
        $region16: #{tpu_custom_call.1} parent=11 // pred_fallthru
          _
        // Predicated region
        $region17: #{tpu_custom_call.1} parent=11 // pred_check
          %p260 = pneg %p111
        $region18: #{tpu_custom_call.1} parent=11 // pred_check_branch
          %262 = sbr.rel (%p260) target = $region20
        $region19: #{tpu_custom_call.1} parent=11 // pred_region
          _
        $region20: #{tpu_custom_call.1} parent=11 // pred_fallthru
          _
        // Predicated region
        $region21: #{tpu_custom_call.1} parent=11 // pred_check
          %p263 = pneg %p132
        $region22: #{tpu_custom_call.1} parent=11 // pred_check_branch
          %265 = sbr.rel (%p263) target = $region24
        $region23: #{tpu_custom_call.1} parent=11 // pred_region
          _
        $region24: #{tpu_custom_call.1} parent=11 // pred_fallthru
          _
        // Predicated region
        $region25: #{tpu_custom_call.1} parent=11 // pred_check
          %p266 = pneg %p153
        $region26: #{tpu_custom_call.1} parent=11 // pred_check_branch
          %268 = sbr.rel (%p266) target = $region28
        $region27: #{tpu_custom_call.1} parent=11 // pred_region
          _
        $region28: #{tpu_custom_call.1} parent=11 // pred_fallthru
          _
        // Predicated region
        $region29: #{tpu_custom_call.1} parent=11 // pred_check
          %p269 = pneg %p174
        $region30: #{tpu_custom_call.1} parent=11 // pred_check_branch
          %271 = sbr.rel (%p269) target = $region32
        $region31: #{tpu_custom_call.1} parent=11 // pred_region
          _
        $region32: #{tpu_custom_call.1} parent=11 // pred_fallthru
          _
        // Predicated region
        $region33: #{tpu_custom_call.1} parent=11 // pred_check
          %p272 = pneg %p195
        $region34: #{tpu_custom_call.1} parent=11 // pred_check_branch
          %274 = sbr.rel (%p272) target = $region36
        $region35: #{tpu_custom_call.1} parent=11 // pred_region
          _
        $region36: #{tpu_custom_call.1} parent=11 // pred_fallthru
          _
        // Predicated region
        $region37: #{tpu_custom_call.1} parent=11 // pred_check
          %p275 = pneg %p216
        $region38: #{tpu_custom_call.1} parent=11 // pred_check_branch
          %277 = sbr.rel (%p275) target = $region40
        $region39: #{tpu_custom_call.1} parent=11 // pred_region
          _
        $region40: #{tpu_custom_call.1} parent=11 // pred_fallthru
          _
      $region12: #{tpu_custom_call.1} parent=5 // pred_fallthru
        _
      %p278 = scmp.lt.s32.totalorder %s17, 2
      // Predicated region
      $region41: #{tpu_custom_call.1} parent=5 // pred_check
        %p279 = pneg %p278
      $region42: #{tpu_custom_call.1} parent=5 // pred_check_branch
        %281 = sbr.rel (%p279) target = $region44
      $region43: #{tpu_custom_call.1} parent=5 // pred_region
        // Predicated region
        $region45: #{tpu_custom_call.1} parent=43 // pred_check
          %p282 = pneg %p37
        $region46: #{tpu_custom_call.1} parent=43 // pred_check_branch
          %284 = sbr.rel (%p282) target = $region48
        $region47: #{tpu_custom_call.1} parent=43 // pred_region
          %s285 = smul.u32 64, %s17
          %s286 = ssub.s32 75, %s285
          %p287 = scmp.lt.s32.totalorder %s286, 64
          %s288 = scalar_select %p287, %s286, 64
          %s289 = smul.u32 4, %s288
          %p290 = scmp.lt.s32.totalorder %s285, 74
          %s291 = scalar_select %p290, %s285, 74
          %s292 = smul.addr %s291, 4
          %s293 = scalar_lea.vmem %s0, %s292
          %s294 = smul.u32 64, %s17
          %s295 = ssub.s32 75, %s294
          %p296 = scmp.lt.s32.totalorder %s295, 64
          %s297 = scalar_select %p296, %s295, 64
          %s298 = smul.u32 4, %s297
        $region48: #{tpu_custom_call.1} parent=43 // pred_fallthru
          _
        // Predicated region
        $region49: #{tpu_custom_call.1} parent=43 // pred_check
          %p299 = pneg %p63
        $region50: #{tpu_custom_call.1} parent=43 // pred_check_branch
          %301 = sbr.rel (%p299) target = $region52
        $region51: #{tpu_custom_call.1} parent=43 // pred_region
          %s302 = smul.u32 64, %s17
          %s303 = ssub.s32 75, %s302
          %p304 = scmp.lt.s32.totalorder %s303, 64
          %s305 = scalar_select %p304, %s303, 64
          %s306 = smul.u32 4, %s305
          %p307 = scmp.lt.s32.totalorder %s302, 74
          %s308 = scalar_select %p307, %s302, 74
          %s309 = smul.addr %s308, 4
          %s310 = scalar_lea.vmem %s1, %s309
          %s311 = smul.u32 64, %s17
          %s312 = ssub.s32 75, %s311
          %p313 = scmp.lt.s32.totalorder %s312, 64
          %s314 = scalar_select %p313, %s312, 64
          %s315 = smul.u32 4, %s314
        $region52: #{tpu_custom_call.1} parent=43 // pred_fallthru
          _
      $region44: #{tpu_custom_call.1} parent=5 // pred_fallthru
        _
      %p316 = scmp.le.s32.totalorder 1, %s17
      %p317 = scmp.lt.s32.totalorder %s17, 3
      %p318 = pnand %p316, %p317
      %p319 = pneg %p318
      // Predicated region
      $region53: #{tpu_custom_call.1} parent=5 // pred_check
        _
      $region54: #{tpu_custom_call.1} parent=5 // pred_check_branch
        %321 = sbr.rel (%p318) target = $region56
      $region55: #{tpu_custom_call.1} parent=5 // pred_region
        %s322 = ssub.s32 %s17, 1
        %s323 = smul.u32 64, %s22
        %s324 = ssub.s32 75, %s323
        %p325 = scmp.lt.s32.totalorder %s324, 64
        %s326 = scalar_select %p325, %s324, 64
        %s327 = smul.u32 4, %s326
        %p328 = scmp.lt.s32.totalorder %s323, 74
        %s329 = scalar_select %p328, %s323, 74
        %s330 = smul.addr %s329, 4
        %s331 = scalar_lea.vmem %s0, %s330
        %p332 = pneg %p43
        %p333 = pneg %p40
        %s334 = smul.u32 64, %s22
        %s335 = ssub.s32 75, %s334
        %p336 = scmp.lt.s32.totalorder %s335, 64
        %s337 = scalar_select %p336, %s335, 64
        %s338 = smul.u32 4, %s337
        %p339 = scmp.lt.s32.totalorder %s334, 74
        %s340 = scalar_select %p339, %s334, 74
        %s341 = smul.addr %s340, 4
        %s342 = scalar_lea.vmem %s1, %s341
        %p343 = pneg %p69
        %p344 = pneg %p66
        %p345 = pneg %p90
        %p346 = pneg %p87
        %p347 = pneg %p111
        %p348 = pneg %p108
        %p349 = pneg %p132
        %p350 = pneg %p129
        %p351 = pneg %p153
        %p352 = pneg %p150
        %p353 = pneg %p174
        %p354 = pneg %p171
        %p355 = pneg %p195
        %p356 = pneg %p192
        %p357 = pneg %p216
        %p358 = pneg %p213
        %p359 = pneg %p242
        %p360 = pneg %p239
        %s361 = sand.u32 %s229, 1
        %s362 = sand.u32 %s229, 1
        %s363 = smul.addr %s362, 512
        %s364 = scalar_lea.vmem [#allocation3], %s363
        %s365 = smul.u32 64, %s22
        %s366 = ssub.s32 75, %s365
        %p367 = scmp.lt.s32.totalorder %s366, 64
        %s368 = scalar_select %p367, %s366, 64
        %s369 = smul.u32 4, %s368
        %p370 = scmp.lt.s32.totalorder %s365, 74
        %s371 = scalar_select %p370, %s365, 74
        %s372 = smul.addr %s371, 4
        %s373 = scalar_lea.vmem %s0, %s372
        %s374 = smul.u32 64, %s22
        %s375 = ssub.s32 75, %s374
        %p376 = scmp.lt.s32.totalorder %s375, 64
        %s377 = scalar_select %p376, %s375, 64
        %s378 = smul.u32 4, %s377
        %s379 = smul.u32 64, %s22
        %s380 = ssub.s32 75, %s379
        %p381 = scmp.lt.s32.totalorder %s380, 64
        %s382 = scalar_select %p381, %s380, 64
        %s383 = smul.u32 4, %s382
        %p384 = scmp.lt.s32.totalorder %s379, 74
        %s385 = scalar_select %p384, %s379, 74
        %s386 = smul.addr %s385, 4
        %s387 = scalar_lea.vmem %s1, %s386
        %s388 = smul.u32 64, %s22
        %s389 = ssub.s32 75, %s388
        %p390 = scmp.lt.s32.totalorder %s389, 64
        %s391 = scalar_select %p390, %s389, 64
        %s392 = smul.u32 4, %s391
        %s393 = smul.u32 64, %s22
        %s394 = ssub.s32 75, %s393
        %p395 = scmp.lt.s32.totalorder %s394, 64
        %s396 = scalar_select %p395, %s394, 64
        %s397 = smul.u32 8, %s396
        %v399 = vld [vmem:[%s373] sm:$0xf]
        %v400 = vld [vmem:[%s373 + $0x4] sm:$0xf]
        %v401 = vld [vmem:[%s373 + $0x8] sm:$0xf]
        %v402 = vld [vmem:[%s373 + $0xc] sm:$0xf]
        %v403 = vld [vmem:[%s373 + $0x10] sm:$0xf]
        %v404 = vld [vmem:[%s373 + $0x14] sm:$0xf]
        %v405 = vld [vmem:[%s373 + $0x18] sm:$0xf]
        %v406 = vld [vmem:[%s373 + $0x1c] sm:$0xf]
        %v407 = vld [vmem:[%s373 + $0x20] sm:$0xf]
        %v408 = vld [vmem:[%s373 + $0x24] sm:$0xf]
        %v409 = vld [vmem:[%s373 + $0x28] sm:$0xf]
        %v410 = vld [vmem:[%s373 + $0x2c] sm:$0xf]
        %v411 = vld [vmem:[%s373 + $0x30] sm:$0xf]
        %v412 = vld [vmem:[%s373 + $0x34] sm:$0xf]
        %v413 = vld [vmem:[%s373 + $0x38] sm:$0xf]
        %v414 = vld [vmem:[%s373 + $0x3c] sm:$0xf]
        %v415 = vld [vmem:[%s373 + $0x40] sm:$0xf]
        %v416 = vld [vmem:[%s373 + $0x44] sm:$0xf]
        %v417 = vld [vmem:[%s373 + $0x48] sm:$0xf]
        %v418 = vld [vmem:[%s373 + $0x4c] sm:$0xf]
        %v419 = vld [vmem:[%s373 + $0x50] sm:$0xf]
        %v420 = vld [vmem:[%s373 + $0x54] sm:$0xf]
        %v421 = vld [vmem:[%s373 + $0x58] sm:$0xf]
        %v422 = vld [vmem:[%s373 + $0x5c] sm:$0xf]
        %v423 = vld [vmem:[%s373 + $0x60] sm:$0xf]
        %v424 = vld [vmem:[%s373 + $0x64] sm:$0xf]
        %v425 = vld [vmem:[%s373 + $0x68] sm:$0xf]
        %v426 = vld [vmem:[%s373 + $0x6c] sm:$0xf]
        %v427 = vld [vmem:[%s373 + $0x70] sm:$0xf]
        %v428 = vld [vmem:[%s373 + $0x74] sm:$0xf]
        %v429 = vld [vmem:[%s373 + $0x78] sm:$0xf]
        %v430 = vld [vmem:[%s373 + $0x7c] sm:$0xf]
        %v431 = vld [vmem:[%s373 + $0x80] sm:$0xf]
        %v432 = vld [vmem:[%s373 + $0x84] sm:$0xf]
        %v433 = vld [vmem:[%s373 + $0x88] sm:$0xf]
        %v434 = vld [vmem:[%s373 + $0x8c] sm:$0xf]
        %v435 = vld [vmem:[%s373 + $0x90] sm:$0xf]
        %v436 = vld [vmem:[%s373 + $0x94] sm:$0xf]
        %v437 = vld [vmem:[%s373 + $0x98] sm:$0xf]
        %v438 = vld [vmem:[%s373 + $0x9c] sm:$0xf]
        %v439 = vld [vmem:[%s373 + $0xa0] sm:$0xf]
        %v440 = vld [vmem:[%s373 + $0xa4] sm:$0xf]
        %v441 = vld [vmem:[%s373 + $0xa8] sm:$0xf]
        %v442 = vld [vmem:[%s373 + $0xac] sm:$0xf]
        %v443 = vld [vmem:[%s373 + $0xb0] sm:$0xf]
        %v444 = vld [vmem:[%s373 + $0xb4] sm:$0xf]
        %v445 = vld [vmem:[%s373 + $0xb8] sm:$0xf]
        %v446 = vld [vmem:[%s373 + $0xbc] sm:$0xf]
        %v447 = vld [vmem:[%s373 + $0xc0] sm:$0xf]
        %v448 = vld [vmem:[%s373 + $0xc4] sm:$0xf]
        %v449 = vld [vmem:[%s373 + $0xc8] sm:$0xf]
        %v450 = vld [vmem:[%s373 + $0xcc] sm:$0xf]
        %v451 = vld [vmem:[%s373 + $0xd0] sm:$0xf]
        %v452 = vld [vmem:[%s373 + $0xd4] sm:$0xf]
        %v453 = vld [vmem:[%s373 + $0xd8] sm:$0xf]
        %v454 = vld [vmem:[%s373 + $0xdc] sm:$0xf]
        %v455 = vld [vmem:[%s373 + $0xe0] sm:$0xf]
        %v456 = vld [vmem:[%s373 + $0xe4] sm:$0xf]
        %v457 = vld [vmem:[%s373 + $0xe8] sm:$0xf]
        %v458 = vld [vmem:[%s373 + $0xec] sm:$0xf]
        %v459 = vld [vmem:[%s373 + $0xf0] sm:$0xf]
        %v460 = vld [vmem:[%s373 + $0xf4] sm:$0xf]
        %v461 = vld [vmem:[%s373 + $0xf8] sm:$0xf]
        %v462 = vld [vmem:[%s373 + $0xfc] sm:$0xf]
        %v463 = vld [vmem:[%s2] sm:$0xf]
        %v464 = vld [vmem:[%s2 + $0x4] sm:$0xf]
        %v465 = vld [vmem:[%s387] sm:$0xf]
        %v466 = vld [vmem:[%s387 + $0x4] sm:$0xf]
        %v467 = vld [vmem:[%s387 + $0x8] sm:$0xf]
        %v468 = vld [vmem:[%s387 + $0xc] sm:$0xf]
        %v469 = vld [vmem:[%s387 + $0x10] sm:$0xf]
        %v470 = vld [vmem:[%s387 + $0x14] sm:$0xf]
        %v471 = vld [vmem:[%s387 + $0x18] sm:$0xf]
        %v472 = vld [vmem:[%s387 + $0x1c] sm:$0xf]
        %v473 = vld [vmem:[%s387 + $0x20] sm:$0xf]
        %v474 = vld [vmem:[%s387 + $0x24] sm:$0xf]
        %v475 = vld [vmem:[%s387 + $0x28] sm:$0xf]
        %v476 = vld [vmem:[%s387 + $0x2c] sm:$0xf]
        %v477 = vld [vmem:[%s387 + $0x30] sm:$0xf]
        %v478 = vld [vmem:[%s387 + $0x34] sm:$0xf]
        %v479 = vld [vmem:[%s387 + $0x38] sm:$0xf]
        %v480 = vld [vmem:[%s387 + $0x3c] sm:$0xf]
        %v481 = vld [vmem:[%s387 + $0x40] sm:$0xf]
        %v482 = vld [vmem:[%s387 + $0x44] sm:$0xf]
        %v483 = vld [vmem:[%s387 + $0x48] sm:$0xf]
        %v484 = vld [vmem:[%s387 + $0x4c] sm:$0xf]
        %v485 = vld [vmem:[%s387 + $0x50] sm:$0xf]
        %v486 = vld [vmem:[%s387 + $0x54] sm:$0xf]
        %v487 = vld [vmem:[%s387 + $0x58] sm:$0xf]
        %v488 = vld [vmem:[%s387 + $0x5c] sm:$0xf]
        %v489 = vld [vmem:[%s387 + $0x60] sm:$0xf]
        %v490 = vld [vmem:[%s387 + $0x64] sm:$0xf]
        %v491 = vld [vmem:[%s387 + $0x68] sm:$0xf]
        %v492 = vld [vmem:[%s387 + $0x6c] sm:$0xf]
        %v493 = vld [vmem:[%s387 + $0x70] sm:$0xf]
        %v494 = vld [vmem:[%s387 + $0x74] sm:$0xf]
        %v495 = vld [vmem:[%s387 + $0x78] sm:$0xf]
        %v496 = vld [vmem:[%s387 + $0x7c] sm:$0xf]
        %v497 = vld [vmem:[%s387 + $0x80] sm:$0xf]
        %v498 = vld [vmem:[%s387 + $0x84] sm:$0xf]
        %v499 = vld [vmem:[%s387 + $0x88] sm:$0xf]
        %v500 = vld [vmem:[%s387 + $0x8c] sm:$0xf]
        %v501 = vld [vmem:[%s387 + $0x90] sm:$0xf]
        %v502 = vld [vmem:[%s387 + $0x94] sm:$0xf]
        %v503 = vld [vmem:[%s387 + $0x98] sm:$0xf]
        %v504 = vld [vmem:[%s387 + $0x9c] sm:$0xf]
        %v505 = vld [vmem:[%s387 + $0xa0] sm:$0xf]
        %v506 = vld [vmem:[%s387 + $0xa4] sm:$0xf]
        %v507 = vld [vmem:[%s387 + $0xa8] sm:$0xf]
        %v508 = vld [vmem:[%s387 + $0xac] sm:$0xf]
        %v509 = vld [vmem:[%s387 + $0xb0] sm:$0xf]
        %v510 = vld [vmem:[%s387 + $0xb4] sm:$0xf]
        %v511 = vld [vmem:[%s387 + $0xb8] sm:$0xf]
        %v512 = vld [vmem:[%s387 + $0xbc] sm:$0xf]
        %v513 = vld [vmem:[%s387 + $0xc0] sm:$0xf]
        %v514 = vld [vmem:[%s387 + $0xc4] sm:$0xf]
        %v515 = vld [vmem:[%s387 + $0xc8] sm:$0xf]
        %v516 = vld [vmem:[%s387 + $0xcc] sm:$0xf]
        %v517 = vld [vmem:[%s387 + $0xd0] sm:$0xf]
        %v518 = vld [vmem:[%s387 + $0xd4] sm:$0xf]
        %v519 = vld [vmem:[%s387 + $0xd8] sm:$0xf]
        %v520 = vld [vmem:[%s387 + $0xdc] sm:$0xf]
        %v521 = vld [vmem:[%s387 + $0xe0] sm:$0xf]
        %v522 = vld [vmem:[%s387 + $0xe4] sm:$0xf]
        %v523 = vld [vmem:[%s387 + $0xe8] sm:$0xf]
        %v524 = vld [vmem:[%s387 + $0xec] sm:$0xf]
        %v525 = vld [vmem:[%s387 + $0xf0] sm:$0xf]
        %v526 = vld [vmem:[%s387 + $0xf4] sm:$0xf]
        %v527 = vld [vmem:[%s387 + $0xf8] sm:$0xf]
        %v528 = vld [vmem:[%s387 + $0xfc] sm:$0xf]
        %v529 = vld [vmem:[%s3] sm:$0xf]
        %v530 = vld [vmem:[%s3 + $0x4] sm:$0xf]
        %v595 = vunpack.c.l.b16 %v465
        %v596 = vunpack.c.l.b16 %v466
        %v597 = vunpack.c.l.b16 %v467
        %v598 = vunpack.c.l.b16 %v468
        %v599 = vunpack.c.l.b16 %v469
        %v600 = vunpack.c.l.b16 %v470
        %v601 = vunpack.c.l.b16 %v471
        %v602 = vunpack.c.l.b16 %v472
        %v603 = vunpack.c.l.b16 %v473
        %v604 = vunpack.c.l.b16 %v474
        %v605 = vunpack.c.l.b16 %v475
        %v606 = vunpack.c.l.b16 %v476
        %v607 = vunpack.c.l.b16 %v477
        %v608 = vunpack.c.l.b16 %v478
        %v609 = vunpack.c.l.b16 %v479
        %v610 = vunpack.c.l.b16 %v480
        %v611 = vunpack.c.l.b16 %v481
        %v612 = vunpack.c.l.b16 %v482
        %v613 = vunpack.c.l.b16 %v483
        %v614 = vunpack.c.l.b16 %v484
        %v615 = vunpack.c.l.b16 %v485
        %v616 = vunpack.c.l.b16 %v486
        %v617 = vunpack.c.l.b16 %v487
        %v618 = vunpack.c.l.b16 %v488
        %v619 = vunpack.c.l.b16 %v489
        %v620 = vunpack.c.l.b16 %v490
        %v621 = vunpack.c.l.b16 %v491
        %v622 = vunpack.c.l.b16 %v492
        %v623 = vunpack.c.l.b16 %v493
        %v624 = vunpack.c.l.b16 %v494
        %v625 = vunpack.c.l.b16 %v495
        %v626 = vunpack.c.l.b16 %v496
        %v627 = vunpack.c.l.b16 %v497
        %v628 = vunpack.c.l.b16 %v498
        %v629 = vunpack.c.l.b16 %v499
        %v630 = vunpack.c.l.b16 %v500
        %v631 = vunpack.c.l.b16 %v501
        %v632 = vunpack.c.l.b16 %v502
        %v633 = vunpack.c.l.b16 %v503
        %v634 = vunpack.c.l.b16 %v504
        %v635 = vunpack.c.l.b16 %v505
        %v636 = vunpack.c.l.b16 %v506
        %v637 = vunpack.c.l.b16 %v507
        %v638 = vunpack.c.l.b16 %v508
        %v639 = vunpack.c.l.b16 %v509
        %v640 = vunpack.c.l.b16 %v510
        %v641 = vunpack.c.l.b16 %v511
        %v642 = vunpack.c.l.b16 %v512
        %v643 = vunpack.c.l.b16 %v513
        %v644 = vunpack.c.l.b16 %v514
        %v645 = vunpack.c.l.b16 %v515
        %v646 = vunpack.c.l.b16 %v516
        %v647 = vunpack.c.l.b16 %v517
        %v648 = vunpack.c.l.b16 %v518
        %v649 = vunpack.c.l.b16 %v519
        %v650 = vunpack.c.l.b16 %v520
        %v651 = vunpack.c.l.b16 %v521
        %v652 = vunpack.c.l.b16 %v522
        %v653 = vunpack.c.l.b16 %v523
        %v654 = vunpack.c.l.b16 %v524
        %v655 = vunpack.c.l.b16 %v525
        %v656 = vunpack.c.l.b16 %v526
        %v657 = vunpack.c.l.b16 %v527
        %v658 = vunpack.c.l.b16 %v528
        %v659 = vpack.c.b16 %v596, %v595
        %v660 = vpack.c.b16 %v598, %v597
        %v661 = vpack.c.b16 %v600, %v599
        %v662 = vpack.c.b16 %v602, %v601
        %v663 = vpack.c.b16 %v604, %v603
        %v664 = vpack.c.b16 %v606, %v605
        %v665 = vpack.c.b16 %v608, %v607
        %v666 = vpack.c.b16 %v610, %v609
        %v667 = vpack.c.b16 %v612, %v611
        %v668 = vpack.c.b16 %v614, %v613
        %v669 = vpack.c.b16 %v616, %v615
        %v670 = vpack.c.b16 %v618, %v617
        %v671 = vpack.c.b16 %v620, %v619
        %v672 = vpack.c.b16 %v622, %v621
        %v673 = vpack.c.b16 %v624, %v623
        %v674 = vpack.c.b16 %v626, %v625
        %v675 = vpack.c.b16 %v628, %v627
        %v676 = vpack.c.b16 %v630, %v629
        %v677 = vpack.c.b16 %v632, %v631
        %v678 = vpack.c.b16 %v634, %v633
        %v679 = vpack.c.b16 %v636, %v635
        %v680 = vpack.c.b16 %v638, %v637
        %v681 = vpack.c.b16 %v640, %v639
        %v682 = vpack.c.b16 %v642, %v641
        %v683 = vpack.c.b16 %v644, %v643
        %v684 = vpack.c.b16 %v646, %v645
        %v685 = vpack.c.b16 %v648, %v647
        %v686 = vpack.c.b16 %v650, %v649
        %v687 = vpack.c.b16 %v652, %v651
        %v688 = vpack.c.b16 %v654, %v653
        %v689 = vpack.c.b16 %v656, %v655
        %v690 = vpack.c.b16 %v658, %v657
        %v693 = vunpack.c.l.b16 %v529
        %v694 = vunpack.c.l.b16 %v530
        %v695 = vpack.c.b16 %v694, %v693
        %vm697 = vcmask 130048
        %v699 = vsel %vm697, %v659, 0
        %v702 = vsel %vm697, %v660, 0
        %v705 = vsel %vm697, %v661, 0
        %v708 = vsel %vm697, %v662, 0
        %v711 = vsel %vm697, %v663, 0
        %v714 = vsel %vm697, %v664, 0
        %v717 = vsel %vm697, %v665, 0
        %v720 = vsel %vm697, %v666, 0
        %v723 = vsel %vm697, %v667, 0
        %v726 = vsel %vm697, %v668, 0
        %v729 = vsel %vm697, %v669, 0
        %v732 = vsel %vm697, %v670, 0
        %v735 = vsel %vm697, %v671, 0
        %v738 = vsel %vm697, %v672, 0
        %v741 = vsel %vm697, %v673, 0
        %v744 = vsel %vm697, %v674, 0
        %v747 = vsel %vm697, %v675, 0
        %v750 = vsel %vm697, %v676, 0
        %v753 = vsel %vm697, %v677, 0
        %v756 = vsel %vm697, %v678, 0
        %v759 = vsel %vm697, %v679, 0
        %v762 = vsel %vm697, %v680, 0
        %v765 = vsel %vm697, %v681, 0
        %v768 = vsel %vm697, %v682, 0
        %v771 = vsel %vm697, %v683, 0
        %v774 = vsel %vm697, %v684, 0
        %v777 = vsel %vm697, %v685, 0
        %v780 = vsel %vm697, %v686, 0
        %v783 = vsel %vm697, %v687, 0
        %v786 = vsel %vm697, %v688, 0
        %v789 = vsel %vm697, %v689, 0
        %v792 = vsel %vm697, %v690, 0
        %794 = vmatpush.bf16.msra.mxu0 0
        %795 = vmatpush.bf16.msra.mxu0 0
        %796 = vmatpush.bf16.msra.mxu0 0
        %797 = vmatpush.bf16.msra.mxu0 0
        %798 = vmatpush.bf16.msra.mxu0 0
        %799 = vmatpush.bf16.msra.mxu0 0
        %800 = vmatpush.bf16.msra.mxu0 0
        %801 = vmatpush.bf16.msra.mxu0 %v695
        %802 = vmatmul.bf16.gmra.mxu0 %v699
        %v803 = vpop.f32.mrf.mxu0
        %v804 = vadd.f32 0.0, %v803
        %v805 = vpop.f32.mrf.mxu0
        %v806 = vadd.f32 0.0, %v805
        %807 = vmatmul.bf16.gmra.mxu0 %v702
        %v808 = vpop.f32.mrf.mxu0
        %v809 = vadd.f32 0.0, %v808
        %v810 = vpop.f32.mrf.mxu0
        %v811 = vadd.f32 0.0, %v810
        %812 = vmatmul.bf16.gmra.mxu0 %v705
        %v813 = vpop.f32.mrf.mxu0
        %v814 = vadd.f32 0.0, %v813
        %v815 = vpop.f32.mrf.mxu0
        %v816 = vadd.f32 0.0, %v815
        %817 = vmatmul.bf16.gmra.mxu0 %v708
        %v818 = vpop.f32.mrf.mxu0
        %v819 = vadd.f32 0.0, %v818
        %v820 = vpop.f32.mrf.mxu0
        %v821 = vadd.f32 0.0, %v820
        %822 = vmatmul.bf16.gmra.mxu0 %v711
        %v823 = vpop.f32.mrf.mxu0
        %v824 = vadd.f32 0.0, %v823
        %v825 = vpop.f32.mrf.mxu0
        %v826 = vadd.f32 0.0, %v825
        %827 = vmatmul.bf16.gmra.mxu0 %v714
        %v828 = vpop.f32.mrf.mxu0
        %v829 = vadd.f32 0.0, %v828
        %v830 = vpop.f32.mrf.mxu0
        %v831 = vadd.f32 0.0, %v830
        %832 = vmatmul.bf16.gmra.mxu0 %v717
        %v833 = vpop.f32.mrf.mxu0
        %v834 = vadd.f32 0.0, %v833
        %v835 = vpop.f32.mrf.mxu0
        %v836 = vadd.f32 0.0, %v835
        %837 = vmatmul.bf16.gmra.mxu0 %v720
        %v838 = vpop.f32.mrf.mxu0
        %v839 = vadd.f32 0.0, %v838
        %v840 = vpop.f32.mrf.mxu0
        %v841 = vadd.f32 0.0, %v840
        %842 = vmatmul.bf16.gmra.mxu0 %v723
        %v843 = vpop.f32.mrf.mxu0
        %v844 = vadd.f32 0.0, %v843
        %v845 = vpop.f32.mrf.mxu0
        %v846 = vadd.f32 0.0, %v845
        %847 = vmatmul.bf16.gmra.mxu0 %v726
        %v848 = vpop.f32.mrf.mxu0
        %v849 = vadd.f32 0.0, %v848
        %v850 = vpop.f32.mrf.mxu0
        %v851 = vadd.f32 0.0, %v850
        %852 = vmatmul.bf16.gmra.mxu0 %v729
        %v853 = vpop.f32.mrf.mxu0
        %v854 = vadd.f32 0.0, %v853
        %v855 = vpop.f32.mrf.mxu0
        %v856 = vadd.f32 0.0, %v855
        %857 = vmatmul.bf16.gmra.mxu0 %v732
        %v858 = vpop.f32.mrf.mxu0
        %v859 = vadd.f32 0.0, %v858
        %v860 = vpop.f32.mrf.mxu0
        %v861 = vadd.f32 0.0, %v860
        %862 = vmatmul.bf16.gmra.mxu0 %v735
        %v863 = vpop.f32.mrf.mxu0
        %v864 = vadd.f32 0.0, %v863
        %v865 = vpop.f32.mrf.mxu0
        %v866 = vadd.f32 0.0, %v865
        %867 = vmatmul.bf16.gmra.mxu0 %v738
        %v868 = vpop.f32.mrf.mxu0
        %v869 = vadd.f32 0.0, %v868
        %v870 = vpop.f32.mrf.mxu0
        %v871 = vadd.f32 0.0, %v870
        %872 = vmatmul.bf16.gmra.mxu0 %v741
        %v873 = vpop.f32.mrf.mxu0
        %v874 = vadd.f32 0.0, %v873
        %v875 = vpop.f32.mrf.mxu0
        %v876 = vadd.f32 0.0, %v875
        %877 = vmatmul.bf16.gmra.mxu0 %v744
        %v878 = vpop.f32.mrf.mxu0
        %v879 = vadd.f32 0.0, %v878
        %v880 = vpop.f32.mrf.mxu0
        %v881 = vadd.f32 0.0, %v880
        %882 = vmatmul.bf16.gmra.mxu0 %v747
        %v883 = vpop.f32.mrf.mxu0
        %v884 = vadd.f32 0.0, %v883
        %v885 = vpop.f32.mrf.mxu0
        %v886 = vadd.f32 0.0, %v885
        %887 = vmatmul.bf16.gmra.mxu0 %v750
        %v888 = vpop.f32.mrf.mxu0
        %v889 = vadd.f32 0.0, %v888
        %v890 = vpop.f32.mrf.mxu0
        %v891 = vadd.f32 0.0, %v890
        %892 = vmatmul.bf16.gmra.mxu0 %v753
        %v893 = vpop.f32.mrf.mxu0
        %v894 = vadd.f32 0.0, %v893
        %v895 = vpop.f32.mrf.mxu0
        %v896 = vadd.f32 0.0, %v895
        %897 = vmatmul.bf16.gmra.mxu0 %v756
        %v898 = vpop.f32.mrf.mxu0
        %v899 = vadd.f32 0.0, %v898
        %v900 = vpop.f32.mrf.mxu0
        %v901 = vadd.f32 0.0, %v900
        %902 = vmatmul.bf16.gmra.mxu0 %v759
        %v903 = vpop.f32.mrf.mxu0
        %v904 = vadd.f32 0.0, %v903
        %v905 = vpop.f32.mrf.mxu0
        %v906 = vadd.f32 0.0, %v905
        %907 = vmatmul.bf16.gmra.mxu0 %v762
        %v908 = vpop.f32.mrf.mxu0
        %v909 = vadd.f32 0.0, %v908
        %v910 = vpop.f32.mrf.mxu0
        %v911 = vadd.f32 0.0, %v910
        %912 = vmatmul.bf16.gmra.mxu0 %v765
        %v913 = vpop.f32.mrf.mxu0
        %v914 = vadd.f32 0.0, %v913
        %v915 = vpop.f32.mrf.mxu0
        %v916 = vadd.f32 0.0, %v915
        %917 = vmatmul.bf16.gmra.mxu0 %v768
        %v918 = vpop.f32.mrf.mxu0
        %v919 = vadd.f32 0.0, %v918
        %v920 = vpop.f32.mrf.mxu0
        %v921 = vadd.f32 0.0, %v920
        %922 = vmatmul.bf16.gmra.mxu0 %v771
        %v923 = vpop.f32.mrf.mxu0
        %v924 = vadd.f32 0.0, %v923
        %v925 = vpop.f32.mrf.mxu0
        %v926 = vadd.f32 0.0, %v925
        %927 = vmatmul.bf16.gmra.mxu0 %v774
        %v928 = vpop.f32.mrf.mxu0
        %v929 = vadd.f32 0.0, %v928
        %v930 = vpop.f32.mrf.mxu0
        %v931 = vadd.f32 0.0, %v930
        %932 = vmatmul.bf16.gmra.mxu0 %v777
        %v933 = vpop.f32.mrf.mxu0
        %v934 = vadd.f32 0.0, %v933
        %v935 = vpop.f32.mrf.mxu0
        %v936 = vadd.f32 0.0, %v935
        %937 = vmatmul.bf16.gmra.mxu0 %v780
        %v938 = vpop.f32.mrf.mxu0
        %v939 = vadd.f32 0.0, %v938
        %v940 = vpop.f32.mrf.mxu0
        %v941 = vadd.f32 0.0, %v940
        %942 = vmatmul.bf16.gmra.mxu0 %v783
        %v943 = vpop.f32.mrf.mxu0
        %v944 = vadd.f32 0.0, %v943
        %v945 = vpop.f32.mrf.mxu0
        %v946 = vadd.f32 0.0, %v945
        %947 = vmatmul.bf16.gmra.mxu0 %v786
        %v948 = vpop.f32.mrf.mxu0
        %v949 = vadd.f32 0.0, %v948
        %v950 = vpop.f32.mrf.mxu0
        %v951 = vadd.f32 0.0, %v950
        %952 = vmatmul.bf16.gmra.mxu0 %v789
        %v953 = vpop.f32.mrf.mxu0
        %v954 = vadd.f32 0.0, %v953
        %v955 = vpop.f32.mrf.mxu0
        %v956 = vadd.f32 0.0, %v955
        %957 = vmatmul.bf16.gmra.mxu0 %v792
        %v958 = vpop.f32.mrf.mxu0
        %v959 = vadd.f32 0.0, %v958
        %v960 = vpop.f32.mrf.mxu0
        %v961 = vadd.f32 0.0, %v960
        %962 = vdwg.mxu0
        %v1027 = vunpack.c.l.b16 %v399
        %v1028 = vunpack.c.l.b16 %v400
        %v1029 = vunpack.c.l.b16 %v401
        %v1030 = vunpack.c.l.b16 %v402
        %v1031 = vunpack.c.l.b16 %v403
        %v1032 = vunpack.c.l.b16 %v404
        %v1033 = vunpack.c.l.b16 %v405
        %v1034 = vunpack.c.l.b16 %v406
        %v1035 = vunpack.c.l.b16 %v407
        %v1036 = vunpack.c.l.b16 %v408
        %v1037 = vunpack.c.l.b16 %v409
        %v1038 = vunpack.c.l.b16 %v410
        %v1039 = vunpack.c.l.b16 %v411
        %v1040 = vunpack.c.l.b16 %v412
        %v1041 = vunpack.c.l.b16 %v413
        %v1042 = vunpack.c.l.b16 %v414
        %v1043 = vunpack.c.l.b16 %v415
        %v1044 = vunpack.c.l.b16 %v416
        %v1045 = vunpack.c.l.b16 %v417
        %v1046 = vunpack.c.l.b16 %v418
        %v1047 = vunpack.c.l.b16 %v419
        %v1048 = vunpack.c.l.b16 %v420
        %v1049 = vunpack.c.l.b16 %v421
        %v1050 = vunpack.c.l.b16 %v422
        %v1051 = vunpack.c.l.b16 %v423
        %v1052 = vunpack.c.l.b16 %v424
        %v1053 = vunpack.c.l.b16 %v425
        %v1054 = vunpack.c.l.b16 %v426
        %v1055 = vunpack.c.l.b16 %v427
        %v1056 = vunpack.c.l.b16 %v428
        %v1057 = vunpack.c.l.b16 %v429
        %v1058 = vunpack.c.l.b16 %v430
        %v1059 = vunpack.c.l.b16 %v431
        %v1060 = vunpack.c.l.b16 %v432
        %v1061 = vunpack.c.l.b16 %v433
        %v1062 = vunpack.c.l.b16 %v434
        %v1063 = vunpack.c.l.b16 %v435
        %v1064 = vunpack.c.l.b16 %v436
        %v1065 = vunpack.c.l.b16 %v437
        %v1066 = vunpack.c.l.b16 %v438
        %v1067 = vunpack.c.l.b16 %v439
        %v1068 = vunpack.c.l.b16 %v440
        %v1069 = vunpack.c.l.b16 %v441
        %v1070 = vunpack.c.l.b16 %v442
        %v1071 = vunpack.c.l.b16 %v443
        %v1072 = vunpack.c.l.b16 %v444
        %v1073 = vunpack.c.l.b16 %v445
        %v1074 = vunpack.c.l.b16 %v446
        %v1075 = vunpack.c.l.b16 %v447
        %v1076 = vunpack.c.l.b16 %v448
        %v1077 = vunpack.c.l.b16 %v449
        %v1078 = vunpack.c.l.b16 %v450
        %v1079 = vunpack.c.l.b16 %v451
        %v1080 = vunpack.c.l.b16 %v452
        %v1081 = vunpack.c.l.b16 %v453
        %v1082 = vunpack.c.l.b16 %v454
        %v1083 = vunpack.c.l.b16 %v455
        %v1084 = vunpack.c.l.b16 %v456
        %v1085 = vunpack.c.l.b16 %v457
        %v1086 = vunpack.c.l.b16 %v458
        %v1087 = vunpack.c.l.b16 %v459
        %v1088 = vunpack.c.l.b16 %v460
        %v1089 = vunpack.c.l.b16 %v461
        %v1090 = vunpack.c.l.b16 %v462
        %v1091 = vpack.c.b16 %v1028, %v1027
        %v1092 = vpack.c.b16 %v1030, %v1029
        %v1093 = vpack.c.b16 %v1032, %v1031
        %v1094 = vpack.c.b16 %v1034, %v1033
        %v1095 = vpack.c.b16 %v1036, %v1035
        %v1096 = vpack.c.b16 %v1038, %v1037
        %v1097 = vpack.c.b16 %v1040, %v1039
        %v1098 = vpack.c.b16 %v1042, %v1041
        %v1099 = vpack.c.b16 %v1044, %v1043
        %v1100 = vpack.c.b16 %v1046, %v1045
        %v1101 = vpack.c.b16 %v1048, %v1047
        %v1102 = vpack.c.b16 %v1050, %v1049
        %v1103 = vpack.c.b16 %v1052, %v1051
        %v1104 = vpack.c.b16 %v1054, %v1053
        %v1105 = vpack.c.b16 %v1056, %v1055
        %v1106 = vpack.c.b16 %v1058, %v1057
        %v1107 = vpack.c.b16 %v1060, %v1059
        %v1108 = vpack.c.b16 %v1062, %v1061
        %v1109 = vpack.c.b16 %v1064, %v1063
        %v1110 = vpack.c.b16 %v1066, %v1065
        %v1111 = vpack.c.b16 %v1068, %v1067
        %v1112 = vpack.c.b16 %v1070, %v1069
        %v1113 = vpack.c.b16 %v1072, %v1071
        %v1114 = vpack.c.b16 %v1074, %v1073
        %v1115 = vpack.c.b16 %v1076, %v1075
        %v1116 = vpack.c.b16 %v1078, %v1077
        %v1117 = vpack.c.b16 %v1080, %v1079
        %v1118 = vpack.c.b16 %v1082, %v1081
        %v1119 = vpack.c.b16 %v1084, %v1083
        %v1120 = vpack.c.b16 %v1086, %v1085
        %v1121 = vpack.c.b16 %v1088, %v1087
        %v1122 = vpack.c.b16 %v1090, %v1089
        %v1125 = vunpack.c.l.b16 %v463
        %v1126 = vunpack.c.l.b16 %v464
        %v1127 = vpack.c.b16 %v1126, %v1125
        %v1130 = vsel %vm697, %v1091, 0
        %v1133 = vsel %vm697, %v1092, 0
        %v1136 = vsel %vm697, %v1093, 0
        %v1139 = vsel %vm697, %v1094, 0
        %v1142 = vsel %vm697, %v1095, 0
        %v1145 = vsel %vm697, %v1096, 0
        %v1148 = vsel %vm697, %v1097, 0
        %v1151 = vsel %vm697, %v1098, 0
        %v1154 = vsel %vm697, %v1099, 0
        %v1157 = vsel %vm697, %v1100, 0
        %v1160 = vsel %vm697, %v1101, 0
        %v1163 = vsel %vm697, %v1102, 0
        %v1166 = vsel %vm697, %v1103, 0
        %v1169 = vsel %vm697, %v1104, 0
        %v1172 = vsel %vm697, %v1105, 0
        %v1175 = vsel %vm697, %v1106, 0
        %v1178 = vsel %vm697, %v1107, 0
        %v1181 = vsel %vm697, %v1108, 0
        %v1184 = vsel %vm697, %v1109, 0
        %v1187 = vsel %vm697, %v1110, 0
        %v1190 = vsel %vm697, %v1111, 0
        %v1193 = vsel %vm697, %v1112, 0
        %v1196 = vsel %vm697, %v1113, 0
        %v1199 = vsel %vm697, %v1114, 0
        %v1202 = vsel %vm697, %v1115, 0
        %v1205 = vsel %vm697, %v1116, 0
        %v1208 = vsel %vm697, %v1117, 0
        %v1211 = vsel %vm697, %v1118, 0
        %v1214 = vsel %vm697, %v1119, 0
        %v1217 = vsel %vm697, %v1120, 0
        %v1220 = vsel %vm697, %v1121, 0
        %v1223 = vsel %vm697, %v1122, 0
        %1225 = vmatpush.bf16.msra.mxu0 0
        %1226 = vmatpush.bf16.msra.mxu0 0
        %1227 = vmatpush.bf16.msra.mxu0 0
        %1228 = vmatpush.bf16.msra.mxu0 0
        %1229 = vmatpush.bf16.msra.mxu0 0
        %1230 = vmatpush.bf16.msra.mxu0 0
        %1231 = vmatpush.bf16.msra.mxu0 0
        %1232 = vmatpush.bf16.msra.mxu0 %v1127
        %1233 = vmatmul.bf16.gmra.mxu0 %v1130
        %v1234 = vpop.f32.mrf.mxu0
        %v1235 = vadd.f32 %v804, %v1234
        %v1236 = vpop.f32.mrf.mxu0
        %v1237 = vadd.f32 %v806, %v1236
        %1238 = vmatmul.bf16.gmra.mxu0 %v1133
        %v1239 = vpop.f32.mrf.mxu0
        %v1240 = vadd.f32 %v809, %v1239
        %v1241 = vpop.f32.mrf.mxu0
        %v1242 = vadd.f32 %v811, %v1241
        %1243 = vmatmul.bf16.gmra.mxu0 %v1136
        %v1244 = vpop.f32.mrf.mxu0
        %v1245 = vadd.f32 %v814, %v1244
        %v1246 = vpop.f32.mrf.mxu0
        %v1247 = vadd.f32 %v816, %v1246
        %1248 = vmatmul.bf16.gmra.mxu0 %v1139
        %v1249 = vpop.f32.mrf.mxu0
        %v1250 = vadd.f32 %v819, %v1249
        %v1251 = vpop.f32.mrf.mxu0
        %v1252 = vadd.f32 %v821, %v1251
        %1253 = vmatmul.bf16.gmra.mxu0 %v1142
        %v1254 = vpop.f32.mrf.mxu0
        %v1255 = vadd.f32 %v824, %v1254
        %v1256 = vpop.f32.mrf.mxu0
        %v1257 = vadd.f32 %v826, %v1256
        %1258 = vmatmul.bf16.gmra.mxu0 %v1145
        %v1259 = vpop.f32.mrf.mxu0
        %v1260 = vadd.f32 %v829, %v1259
        %v1261 = vpop.f32.mrf.mxu0
        %v1262 = vadd.f32 %v831, %v1261
        %1263 = vmatmul.bf16.gmra.mxu0 %v1148
        %v1264 = vpop.f32.mrf.mxu0
        %v1265 = vadd.f32 %v834, %v1264
        %v1266 = vpop.f32.mrf.mxu0
        %v1267 = vadd.f32 %v836, %v1266
        %1268 = vmatmul.bf16.gmra.mxu0 %v1151
        %v1269 = vpop.f32.mrf.mxu0
        %v1270 = vadd.f32 %v839, %v1269
        %v1271 = vpop.f32.mrf.mxu0
        %v1272 = vadd.f32 %v841, %v1271
        %1273 = vmatmul.bf16.gmra.mxu0 %v1154
        %v1274 = vpop.f32.mrf.mxu0
        %v1275 = vadd.f32 %v844, %v1274
        %v1276 = vpop.f32.mrf.mxu0
        %v1277 = vadd.f32 %v846, %v1276
        %1278 = vmatmul.bf16.gmra.mxu0 %v1157
        %v1279 = vpop.f32.mrf.mxu0
        %v1280 = vadd.f32 %v849, %v1279
        %v1281 = vpop.f32.mrf.mxu0
        %v1282 = vadd.f32 %v851, %v1281
        %1283 = vmatmul.bf16.gmra.mxu0 %v1160
        %v1284 = vpop.f32.mrf.mxu0
        %v1285 = vadd.f32 %v854, %v1284
        %v1286 = vpop.f32.mrf.mxu0
        %v1287 = vadd.f32 %v856, %v1286
        %1288 = vmatmul.bf16.gmra.mxu0 %v1163
        %v1289 = vpop.f32.mrf.mxu0
        %v1290 = vadd.f32 %v859, %v1289
        %v1291 = vpop.f32.mrf.mxu0
        %v1292 = vadd.f32 %v861, %v1291
        %1293 = vmatmul.bf16.gmra.mxu0 %v1166
        %v1294 = vpop.f32.mrf.mxu0
        %v1295 = vadd.f32 %v864, %v1294
        %v1296 = vpop.f32.mrf.mxu0
        %v1297 = vadd.f32 %v866, %v1296
        %1298 = vmatmul.bf16.gmra.mxu0 %v1169
        %v1299 = vpop.f32.mrf.mxu0
        %v1300 = vadd.f32 %v869, %v1299
        %v1301 = vpop.f32.mrf.mxu0
        %v1302 = vadd.f32 %v871, %v1301
        %1303 = vmatmul.bf16.gmra.mxu0 %v1172
        %v1304 = vpop.f32.mrf.mxu0
        %v1305 = vadd.f32 %v874, %v1304
        %v1306 = vpop.f32.mrf.mxu0
        %v1307 = vadd.f32 %v876, %v1306
        %1308 = vmatmul.bf16.gmra.mxu0 %v1175
        %v1309 = vpop.f32.mrf.mxu0
        %v1310 = vadd.f32 %v879, %v1309
        %v1311 = vpop.f32.mrf.mxu0
        %v1312 = vadd.f32 %v881, %v1311
        %1313 = vmatmul.bf16.gmra.mxu0 %v1178
        %v1314 = vpop.f32.mrf.mxu0
        %v1315 = vadd.f32 %v884, %v1314
        %v1316 = vpop.f32.mrf.mxu0
        %v1317 = vadd.f32 %v886, %v1316
        %1318 = vmatmul.bf16.gmra.mxu0 %v1181
        %v1319 = vpop.f32.mrf.mxu0
        %v1320 = vadd.f32 %v889, %v1319
        %v1321 = vpop.f32.mrf.mxu0
        %v1322 = vadd.f32 %v891, %v1321
        %1323 = vmatmul.bf16.gmra.mxu0 %v1184
        %v1324 = vpop.f32.mrf.mxu0
        %v1325 = vadd.f32 %v894, %v1324
        %v1326 = vpop.f32.mrf.mxu0
        %v1327 = vadd.f32 %v896, %v1326
        %1328 = vmatmul.bf16.gmra.mxu0 %v1187
        %v1329 = vpop.f32.mrf.mxu0
        %v1330 = vadd.f32 %v899, %v1329
        %v1331 = vpop.f32.mrf.mxu0
        %v1332 = vadd.f32 %v901, %v1331
        %1333 = vmatmul.bf16.gmra.mxu0 %v1190
        %v1334 = vpop.f32.mrf.mxu0
        %v1335 = vadd.f32 %v904, %v1334
        %v1336 = vpop.f32.mrf.mxu0
        %v1337 = vadd.f32 %v906, %v1336
        %1338 = vmatmul.bf16.gmra.mxu0 %v1193
        %v1339 = vpop.f32.mrf.mxu0
        %v1340 = vadd.f32 %v909, %v1339
        %v1341 = vpop.f32.mrf.mxu0
        %v1342 = vadd.f32 %v911, %v1341
        %1343 = vmatmul.bf16.gmra.mxu0 %v1196
        %v1344 = vpop.f32.mrf.mxu0
        %v1345 = vadd.f32 %v914, %v1344
        %v1346 = vpop.f32.mrf.mxu0
        %v1347 = vadd.f32 %v916, %v1346
        %1348 = vmatmul.bf16.gmra.mxu0 %v1199
        %v1349 = vpop.f32.mrf.mxu0
        %v1350 = vadd.f32 %v919, %v1349
        %v1351 = vpop.f32.mrf.mxu0
        %v1352 = vadd.f32 %v921, %v1351
        %1353 = vmatmul.bf16.gmra.mxu0 %v1202
        %v1354 = vpop.f32.mrf.mxu0
        %v1355 = vadd.f32 %v924, %v1354
        %v1356 = vpop.f32.mrf.mxu0
        %v1357 = vadd.f32 %v926, %v1356
        %1358 = vmatmul.bf16.gmra.mxu0 %v1205
        %v1359 = vpop.f32.mrf.mxu0
        %v1360 = vadd.f32 %v929, %v1359
        %v1361 = vpop.f32.mrf.mxu0
        %v1362 = vadd.f32 %v931, %v1361
        %1363 = vmatmul.bf16.gmra.mxu0 %v1208
        %v1364 = vpop.f32.mrf.mxu0
        %v1365 = vadd.f32 %v934, %v1364
        %v1366 = vpop.f32.mrf.mxu0
        %v1367 = vadd.f32 %v936, %v1366
        %1368 = vmatmul.bf16.gmra.mxu0 %v1211
        %v1369 = vpop.f32.mrf.mxu0
        %v1370 = vadd.f32 %v939, %v1369
        %v1371 = vpop.f32.mrf.mxu0
        %v1372 = vadd.f32 %v941, %v1371
        %1373 = vmatmul.bf16.gmra.mxu0 %v1214
        %v1374 = vpop.f32.mrf.mxu0
        %v1375 = vadd.f32 %v944, %v1374
        %v1376 = vpop.f32.mrf.mxu0
        %v1377 = vadd.f32 %v946, %v1376
        %1378 = vmatmul.bf16.gmra.mxu0 %v1217
        %v1379 = vpop.f32.mrf.mxu0
        %v1380 = vadd.f32 %v949, %v1379
        %v1381 = vpop.f32.mrf.mxu0
        %v1382 = vadd.f32 %v951, %v1381
        %1383 = vmatmul.bf16.gmra.mxu0 %v1220
        %v1384 = vpop.f32.mrf.mxu0
        %v1385 = vadd.f32 %v954, %v1384
        %v1386 = vpop.f32.mrf.mxu0
        %v1387 = vadd.f32 %v956, %v1386
        %1388 = vmatmul.bf16.gmra.mxu0 %v1223
        %v1389 = vpop.f32.mrf.mxu0
        %v1390 = vadd.f32 %v959, %v1389
        %v1391 = vpop.f32.mrf.mxu0
        %v1392 = vadd.f32 %v961, %v1391
        %1393 = vdwg.mxu0
        %v1394 = vld [vmem:[%s4] sm:$0x1]
        %v1396 = vperm.slane %v1394, 0
        %v1398 = vadd.f32 %v1235, %v1396
        %v1399 = vadd.f32 %v1237, %v1396
        %v1400 = vadd.f32 %v1240, %v1396
        %v1401 = vadd.f32 %v1242, %v1396
        %v1402 = vadd.f32 %v1245, %v1396
        %v1403 = vadd.f32 %v1247, %v1396
        %v1404 = vadd.f32 %v1250, %v1396
        %v1405 = vadd.f32 %v1252, %v1396
        %v1406 = vadd.f32 %v1255, %v1396
        %v1407 = vadd.f32 %v1257, %v1396
        %v1408 = vadd.f32 %v1260, %v1396
        %v1409 = vadd.f32 %v1262, %v1396
        %v1410 = vadd.f32 %v1265, %v1396
        %v1411 = vadd.f32 %v1267, %v1396
        %v1412 = vadd.f32 %v1270, %v1396
        %v1413 = vadd.f32 %v1272, %v1396
        %v1414 = vadd.f32 %v1275, %v1396
        %v1415 = vadd.f32 %v1277, %v1396
        %v1416 = vadd.f32 %v1280, %v1396
        %v1417 = vadd.f32 %v1282, %v1396
        %v1418 = vadd.f32 %v1285, %v1396
        %v1419 = vadd.f32 %v1287, %v1396
        %v1420 = vadd.f32 %v1290, %v1396
        %v1421 = vadd.f32 %v1292, %v1396
        %v1422 = vadd.f32 %v1295, %v1396
        %v1423 = vadd.f32 %v1297, %v1396
        %v1424 = vadd.f32 %v1300, %v1396
        %v1425 = vadd.f32 %v1302, %v1396
        %v1426 = vadd.f32 %v1305, %v1396
        %v1427 = vadd.f32 %v1307, %v1396
        %v1428 = vadd.f32 %v1310, %v1396
        %v1429 = vadd.f32 %v1312, %v1396
        %v1430 = vadd.f32 %v1315, %v1396
        %v1431 = vadd.f32 %v1317, %v1396
        %v1432 = vadd.f32 %v1320, %v1396
        %v1433 = vadd.f32 %v1322, %v1396
        %v1434 = vadd.f32 %v1325, %v1396
        %v1435 = vadd.f32 %v1327, %v1396
        %v1436 = vadd.f32 %v1330, %v1396
        %v1437 = vadd.f32 %v1332, %v1396
        %v1438 = vadd.f32 %v1335, %v1396
        %v1439 = vadd.f32 %v1337, %v1396
        %v1440 = vadd.f32 %v1340, %v1396
        %v1441 = vadd.f32 %v1342, %v1396
        %v1442 = vadd.f32 %v1345, %v1396
        %v1443 = vadd.f32 %v1347, %v1396
        %v1444 = vadd.f32 %v1350, %v1396
        %v1445 = vadd.f32 %v1352, %v1396
        %v1446 = vadd.f32 %v1355, %v1396
        %v1447 = vadd.f32 %v1357, %v1396
        %v1448 = vadd.f32 %v1360, %v1396
        %v1449 = vadd.f32 %v1362, %v1396
        %v1450 = vadd.f32 %v1365, %v1396
        %v1451 = vadd.f32 %v1367, %v1396
        %v1452 = vadd.f32 %v1370, %v1396
        %v1453 = vadd.f32 %v1372, %v1396
        %v1454 = vadd.f32 %v1375, %v1396
        %v1455 = vadd.f32 %v1377, %v1396
        %v1456 = vadd.f32 %v1380, %v1396
        %v1457 = vadd.f32 %v1382, %v1396
        %v1458 = vadd.f32 %v1385, %v1396
        %v1459 = vadd.f32 %v1387, %v1396
        %v1460 = vadd.f32 %v1390, %v1396
        %v1461 = vadd.f32 %v1392, %v1396
        %v1462 = vmax.f32 %v1398, 0.0
        %v1463 = vmax.f32 %v1399, 0.0
        %v1464 = vmax.f32 %v1400, 0.0
        %v1465 = vmax.f32 %v1401, 0.0
        %v1466 = vmax.f32 %v1402, 0.0
        %v1467 = vmax.f32 %v1403, 0.0
        %v1468 = vmax.f32 %v1404, 0.0
        %v1469 = vmax.f32 %v1405, 0.0
        %v1470 = vmax.f32 %v1406, 0.0
        %v1471 = vmax.f32 %v1407, 0.0
        %v1472 = vmax.f32 %v1408, 0.0
        %v1473 = vmax.f32 %v1409, 0.0
        %v1474 = vmax.f32 %v1410, 0.0
        %v1475 = vmax.f32 %v1411, 0.0
        %v1476 = vmax.f32 %v1412, 0.0
        %v1477 = vmax.f32 %v1413, 0.0
        %v1478 = vmax.f32 %v1414, 0.0
        %v1479 = vmax.f32 %v1415, 0.0
        %v1480 = vmax.f32 %v1416, 0.0
        %v1481 = vmax.f32 %v1417, 0.0
        %v1482 = vmax.f32 %v1418, 0.0
        %v1483 = vmax.f32 %v1419, 0.0
        %v1484 = vmax.f32 %v1420, 0.0
        %v1485 = vmax.f32 %v1421, 0.0
        %v1486 = vmax.f32 %v1422, 0.0
        %v1487 = vmax.f32 %v1423, 0.0
        %v1488 = vmax.f32 %v1424, 0.0
        %v1489 = vmax.f32 %v1425, 0.0
        %v1490 = vmax.f32 %v1426, 0.0
        %v1491 = vmax.f32 %v1427, 0.0
        %v1492 = vmax.f32 %v1428, 0.0
        %v1493 = vmax.f32 %v1429, 0.0
        %v1494 = vmax.f32 %v1430, 0.0
        %v1495 = vmax.f32 %v1431, 0.0
        %v1496 = vmax.f32 %v1432, 0.0
        %v1497 = vmax.f32 %v1433, 0.0
        %v1498 = vmax.f32 %v1434, 0.0
        %v1499 = vmax.f32 %v1435, 0.0
        %v1500 = vmax.f32 %v1436, 0.0
        %v1501 = vmax.f32 %v1437, 0.0
        %v1502 = vmax.f32 %v1438, 0.0
        %v1503 = vmax.f32 %v1439, 0.0
        %v1504 = vmax.f32 %v1440, 0.0
        %v1505 = vmax.f32 %v1441, 0.0
        %v1506 = vmax.f32 %v1442, 0.0
        %v1507 = vmax.f32 %v1443, 0.0
        %v1508 = vmax.f32 %v1444, 0.0
        %v1509 = vmax.f32 %v1445, 0.0
        %v1510 = vmax.f32 %v1446, 0.0
        %v1511 = vmax.f32 %v1447, 0.0
        %v1512 = vmax.f32 %v1448, 0.0
        %v1513 = vmax.f32 %v1449, 0.0
        %v1514 = vmax.f32 %v1450, 0.0
        %v1515 = vmax.f32 %v1451, 0.0
        %v1516 = vmax.f32 %v1452, 0.0
        %v1517 = vmax.f32 %v1453, 0.0
        %v1518 = vmax.f32 %v1454, 0.0
        %v1519 = vmax.f32 %v1455, 0.0
        %v1520 = vmax.f32 %v1456, 0.0
        %v1521 = vmax.f32 %v1457, 0.0
        %v1522 = vmax.f32 %v1458, 0.0
        %v1523 = vmax.f32 %v1459, 0.0
        %v1524 = vmax.f32 %v1460, 0.0
        %v1525 = vmax.f32 %v1461, 0.0
        %v1526 = vpack.c.bf16 %v1463, %v1462
        %v1527 = vpack.c.bf16 %v1465, %v1464
        %v1528 = vpack.c.bf16 %v1467, %v1466
        %v1529 = vpack.c.bf16 %v1469, %v1468
        %v1530 = vpack.c.bf16 %v1471, %v1470
        %v1531 = vpack.c.bf16 %v1473, %v1472
        %v1532 = vpack.c.bf16 %v1475, %v1474
        %v1533 = vpack.c.bf16 %v1477, %v1476
        %v1534 = vpack.c.bf16 %v1479, %v1478
        %v1535 = vpack.c.bf16 %v1481, %v1480
        %v1536 = vpack.c.bf16 %v1483, %v1482
        %v1537 = vpack.c.bf16 %v1485, %v1484
        %v1538 = vpack.c.bf16 %v1487, %v1486
        %v1539 = vpack.c.bf16 %v1489, %v1488
        %v1540 = vpack.c.bf16 %v1491, %v1490
        %v1541 = vpack.c.bf16 %v1493, %v1492
        %v1542 = vpack.c.bf16 %v1495, %v1494
        %v1543 = vpack.c.bf16 %v1497, %v1496
        %v1544 = vpack.c.bf16 %v1499, %v1498
        %v1545 = vpack.c.bf16 %v1501, %v1500
        %v1546 = vpack.c.bf16 %v1503, %v1502
        %v1547 = vpack.c.bf16 %v1505, %v1504
        %v1548 = vpack.c.bf16 %v1507, %v1506
        %v1549 = vpack.c.bf16 %v1509, %v1508
        %v1550 = vpack.c.bf16 %v1511, %v1510
        %v1551 = vpack.c.bf16 %v1513, %v1512
        %v1552 = vpack.c.bf16 %v1515, %v1514
        %v1553 = vpack.c.bf16 %v1517, %v1516
        %v1554 = vpack.c.bf16 %v1519, %v1518
        %v1555 = vpack.c.bf16 %v1521, %v1520
        %v1556 = vpack.c.bf16 %v1523, %v1522
        %v1557 = vpack.c.bf16 %v1525, %v1524
        %v1558 = vld [vmem:[%s5] sm:$0xf]
        %v1559 = vld [vmem:[%s5 + $0x4] sm:$0xf]
        %v1560 = vld [vmem:[%s5 + $0x8] sm:$0xf]
        %v1561 = vld [vmem:[%s5 + $0xc] sm:$0xf]
        %v1562 = vld [vmem:[%s6] sm:$0x1]
        %v1564 = vperm.slane %v1562, 0
        %v1570 = vunpack.c.l.b16 %v1558
        %v1571 = vunpack.c.l.b16 %v1559
        %v1572 = vunpack.c.l.b16 %v1560
        %v1573 = vunpack.c.l.b16 %v1561
        %v1574 = vpack.c.b16 %v1571, %v1570
        %v1575 = vpack.c.b16 %v1573, %v1572
        %vm1578 = vcmask 261120
        %v1580 = vsel %vm1578, %v1526, 0
        %v1583 = vsel %vm1578, %v1527, 0
        %v1586 = vsel %vm1578, %v1528, 0
        %v1589 = vsel %vm1578, %v1529, 0
        %v1592 = vsel %vm1578, %v1530, 0
        %v1595 = vsel %vm1578, %v1531, 0
        %v1598 = vsel %vm1578, %v1532, 0
        %v1601 = vsel %vm1578, %v1533, 0
        %v1604 = vsel %vm1578, %v1534, 0
        %v1607 = vsel %vm1578, %v1535, 0
        %v1610 = vsel %vm1578, %v1536, 0
        %v1613 = vsel %vm1578, %v1537, 0
        %v1616 = vsel %vm1578, %v1538, 0
        %v1619 = vsel %vm1578, %v1539, 0
        %v1622 = vsel %vm1578, %v1540, 0
        %v1625 = vsel %vm1578, %v1541, 0
        %v1628 = vsel %vm1578, %v1542, 0
        %v1631 = vsel %vm1578, %v1543, 0
        %v1634 = vsel %vm1578, %v1544, 0
        %v1637 = vsel %vm1578, %v1545, 0
        %v1640 = vsel %vm1578, %v1546, 0
        %v1643 = vsel %vm1578, %v1547, 0
        %v1646 = vsel %vm1578, %v1548, 0
        %v1649 = vsel %vm1578, %v1549, 0
        %v1652 = vsel %vm1578, %v1550, 0
        %v1655 = vsel %vm1578, %v1551, 0
        %v1658 = vsel %vm1578, %v1552, 0
        %v1661 = vsel %vm1578, %v1553, 0
        %v1664 = vsel %vm1578, %v1554, 0
        %v1667 = vsel %vm1578, %v1555, 0
        %v1670 = vsel %vm1578, %v1556, 0
        %v1673 = vsel %vm1578, %v1557, 0
        %1675 = vmatpush.bf16.msra.mxu0 0
        %1676 = vmatpush.bf16.msra.mxu0 0
        %1677 = vmatpush.bf16.msra.mxu0 0
        %1678 = vmatpush.bf16.msra.mxu0 0
        %1679 = vmatpush.bf16.msra.mxu0 0
        %1680 = vmatpush.bf16.msra.mxu0 0
        %1681 = vmatpush.bf16.msra.mxu0 %v1575
        %1682 = vmatpush.bf16.msra.mxu0 %v1574
        %1683 = vmatmul.bf16.gmra.mxu0 %v1580
        %v1684 = vpop.f32.mrf.mxu0
        %v1685 = vadd.f32 %v1564, %v1684
        %v1686 = vpop.f32.mrf.mxu0
        %v1687 = vadd.f32 %v1564, %v1686
        %1688 = vmatmul.bf16.gmra.mxu0 %v1583
        %v1689 = vpop.f32.mrf.mxu0
        %v1690 = vadd.f32 %v1564, %v1689
        %v1691 = vpop.f32.mrf.mxu0
        %v1692 = vadd.f32 %v1564, %v1691
        %1693 = vmatmul.bf16.gmra.mxu0 %v1586
        %v1694 = vpop.f32.mrf.mxu0
        %v1695 = vadd.f32 %v1564, %v1694
        %v1696 = vpop.f32.mrf.mxu0
        %v1697 = vadd.f32 %v1564, %v1696
        %1698 = vmatmul.bf16.gmra.mxu0 %v1589
        %v1699 = vpop.f32.mrf.mxu0
        %v1700 = vadd.f32 %v1564, %v1699
        %v1701 = vpop.f32.mrf.mxu0
        %v1702 = vadd.f32 %v1564, %v1701
        %1703 = vmatmul.bf16.gmra.mxu0 %v1592
        %v1704 = vpop.f32.mrf.mxu0
        %v1705 = vadd.f32 %v1564, %v1704
        %v1706 = vpop.f32.mrf.mxu0
        %v1707 = vadd.f32 %v1564, %v1706
        %1708 = vmatmul.bf16.gmra.mxu0 %v1595
        %v1709 = vpop.f32.mrf.mxu0
        %v1710 = vadd.f32 %v1564, %v1709
        %v1711 = vpop.f32.mrf.mxu0
        %v1712 = vadd.f32 %v1564, %v1711
        %1713 = vmatmul.bf16.gmra.mxu0 %v1598
        %v1714 = vpop.f32.mrf.mxu0
        %v1715 = vadd.f32 %v1564, %v1714
        %v1716 = vpop.f32.mrf.mxu0
        %v1717 = vadd.f32 %v1564, %v1716
        %1718 = vmatmul.bf16.gmra.mxu0 %v1601
        %v1719 = vpop.f32.mrf.mxu0
        %v1720 = vadd.f32 %v1564, %v1719
        %v1721 = vpop.f32.mrf.mxu0
        %v1722 = vadd.f32 %v1564, %v1721
        %1723 = vmatmul.bf16.gmra.mxu0 %v1604
        %v1724 = vpop.f32.mrf.mxu0
        %v1725 = vadd.f32 %v1564, %v1724
        %v1726 = vpop.f32.mrf.mxu0
        %v1727 = vadd.f32 %v1564, %v1726
        %1728 = vmatmul.bf16.gmra.mxu0 %v1607
        %v1729 = vpop.f32.mrf.mxu0
        %v1730 = vadd.f32 %v1564, %v1729
        %v1731 = vpop.f32.mrf.mxu0
        %v1732 = vadd.f32 %v1564, %v1731
        %1733 = vmatmul.bf16.gmra.mxu0 %v1610
        %v1734 = vpop.f32.mrf.mxu0
        %v1735 = vadd.f32 %v1564, %v1734
        %v1736 = vpop.f32.mrf.mxu0
        %v1737 = vadd.f32 %v1564, %v1736
        %1738 = vmatmul.bf16.gmra.mxu0 %v1613
        %v1739 = vpop.f32.mrf.mxu0
        %v1740 = vadd.f32 %v1564, %v1739
        %v1741 = vpop.f32.mrf.mxu0
        %v1742 = vadd.f32 %v1564, %v1741
        %1743 = vmatmul.bf16.gmra.mxu0 %v1616
        %v1744 = vpop.f32.mrf.mxu0
        %v1745 = vadd.f32 %v1564, %v1744
        %v1746 = vpop.f32.mrf.mxu0
        %v1747 = vadd.f32 %v1564, %v1746
        %1748 = vmatmul.bf16.gmra.mxu0 %v1619
        %v1749 = vpop.f32.mrf.mxu0
        %v1750 = vadd.f32 %v1564, %v1749
        %v1751 = vpop.f32.mrf.mxu0
        %v1752 = vadd.f32 %v1564, %v1751
        %1753 = vmatmul.bf16.gmra.mxu0 %v1622
        %v1754 = vpop.f32.mrf.mxu0
        %v1755 = vadd.f32 %v1564, %v1754
        %v1756 = vpop.f32.mrf.mxu0
        %v1757 = vadd.f32 %v1564, %v1756
        %1758 = vmatmul.bf16.gmra.mxu0 %v1625
        %v1759 = vpop.f32.mrf.mxu0
        %v1760 = vadd.f32 %v1564, %v1759
        %v1761 = vpop.f32.mrf.mxu0
        %v1762 = vadd.f32 %v1564, %v1761
        %1763 = vmatmul.bf16.gmra.mxu0 %v1628
        %v1764 = vpop.f32.mrf.mxu0
        %v1765 = vadd.f32 %v1564, %v1764
        %v1766 = vpop.f32.mrf.mxu0
        %v1767 = vadd.f32 %v1564, %v1766
        %1768 = vmatmul.bf16.gmra.mxu0 %v1631
        %v1769 = vpop.f32.mrf.mxu0
        %v1770 = vadd.f32 %v1564, %v1769
        %v1771 = vpop.f32.mrf.mxu0
        %v1772 = vadd.f32 %v1564, %v1771
        %1773 = vmatmul.bf16.gmra.mxu0 %v1634
        %v1774 = vpop.f32.mrf.mxu0
        %v1775 = vadd.f32 %v1564, %v1774
        %v1776 = vpop.f32.mrf.mxu0
        %v1777 = vadd.f32 %v1564, %v1776
        %1778 = vmatmul.bf16.gmra.mxu0 %v1637
        %v1779 = vpop.f32.mrf.mxu0
        %v1780 = vadd.f32 %v1564, %v1779
        %v1781 = vpop.f32.mrf.mxu0
        %v1782 = vadd.f32 %v1564, %v1781
        %1783 = vmatmul.bf16.gmra.mxu0 %v1640
        %v1784 = vpop.f32.mrf.mxu0
        %v1785 = vadd.f32 %v1564, %v1784
        %v1786 = vpop.f32.mrf.mxu0
        %v1787 = vadd.f32 %v1564, %v1786
        %1788 = vmatmul.bf16.gmra.mxu0 %v1643
        %v1789 = vpop.f32.mrf.mxu0
        %v1790 = vadd.f32 %v1564, %v1789
        %v1791 = vpop.f32.mrf.mxu0
        %v1792 = vadd.f32 %v1564, %v1791
        %1793 = vmatmul.bf16.gmra.mxu0 %v1646
        %v1794 = vpop.f32.mrf.mxu0
        %v1795 = vadd.f32 %v1564, %v1794
        %v1796 = vpop.f32.mrf.mxu0
        %v1797 = vadd.f32 %v1564, %v1796
        %1798 = vmatmul.bf16.gmra.mxu0 %v1649
        %v1799 = vpop.f32.mrf.mxu0
        %v1800 = vadd.f32 %v1564, %v1799
        %v1801 = vpop.f32.mrf.mxu0
        %v1802 = vadd.f32 %v1564, %v1801
        %1803 = vmatmul.bf16.gmra.mxu0 %v1652
        %v1804 = vpop.f32.mrf.mxu0
        %v1805 = vadd.f32 %v1564, %v1804
        %v1806 = vpop.f32.mrf.mxu0
        %v1807 = vadd.f32 %v1564, %v1806
        %1808 = vmatmul.bf16.gmra.mxu0 %v1655
        %v1809 = vpop.f32.mrf.mxu0
        %v1810 = vadd.f32 %v1564, %v1809
        %v1811 = vpop.f32.mrf.mxu0
        %v1812 = vadd.f32 %v1564, %v1811
        %1813 = vmatmul.bf16.gmra.mxu0 %v1658
        %v1814 = vpop.f32.mrf.mxu0
        %v1815 = vadd.f32 %v1564, %v1814
        %v1816 = vpop.f32.mrf.mxu0
        %v1817 = vadd.f32 %v1564, %v1816
        %1818 = vmatmul.bf16.gmra.mxu0 %v1661
        %v1819 = vpop.f32.mrf.mxu0
        %v1820 = vadd.f32 %v1564, %v1819
        %v1821 = vpop.f32.mrf.mxu0
        %v1822 = vadd.f32 %v1564, %v1821
        %1823 = vmatmul.bf16.gmra.mxu0 %v1664
        %v1824 = vpop.f32.mrf.mxu0
        %v1825 = vadd.f32 %v1564, %v1824
        %v1826 = vpop.f32.mrf.mxu0
        %v1827 = vadd.f32 %v1564, %v1826
        %1828 = vmatmul.bf16.gmra.mxu0 %v1667
        %v1829 = vpop.f32.mrf.mxu0
        %v1830 = vadd.f32 %v1564, %v1829
        %v1831 = vpop.f32.mrf.mxu0
        %v1832 = vadd.f32 %v1564, %v1831
        %1833 = vmatmul.bf16.gmra.mxu0 %v1670
        %v1834 = vpop.f32.mrf.mxu0
        %v1835 = vadd.f32 %v1564, %v1834
        %v1836 = vpop.f32.mrf.mxu0
        %v1837 = vadd.f32 %v1564, %v1836
        %1838 = vmatmul.bf16.gmra.mxu0 %v1673
        %v1839 = vpop.f32.mrf.mxu0
        %v1840 = vadd.f32 %v1564, %v1839
        %v1841 = vpop.f32.mrf.mxu0
        %v1842 = vadd.f32 %v1564, %v1841
        %1843 = vdwg.mxu0
        %v1844 = vmax.f32 %v1685, 0.0
        %v1845 = vmax.f32 %v1687, 0.0
        %v1846 = vmax.f32 %v1690, 0.0
        %v1847 = vmax.f32 %v1692, 0.0
        %v1848 = vmax.f32 %v1695, 0.0
        %v1849 = vmax.f32 %v1697, 0.0
        %v1850 = vmax.f32 %v1700, 0.0
        %v1851 = vmax.f32 %v1702, 0.0
        %v1852 = vmax.f32 %v1705, 0.0
        %v1853 = vmax.f32 %v1707, 0.0
        %v1854 = vmax.f32 %v1710, 0.0
        %v1855 = vmax.f32 %v1712, 0.0
        %v1856 = vmax.f32 %v1715, 0.0
        %v1857 = vmax.f32 %v1717, 0.0
        %v1858 = vmax.f32 %v1720, 0.0
        %v1859 = vmax.f32 %v1722, 0.0
        %v1860 = vmax.f32 %v1725, 0.0
        %v1861 = vmax.f32 %v1727, 0.0
        %v1862 = vmax.f32 %v1730, 0.0
        %v1863 = vmax.f32 %v1732, 0.0
        %v1864 = vmax.f32 %v1735, 0.0
        %v1865 = vmax.f32 %v1737, 0.0
        %v1866 = vmax.f32 %v1740, 0.0
        %v1867 = vmax.f32 %v1742, 0.0
        %v1868 = vmax.f32 %v1745, 0.0
        %v1869 = vmax.f32 %v1747, 0.0
        %v1870 = vmax.f32 %v1750, 0.0
        %v1871 = vmax.f32 %v1752, 0.0
        %v1872 = vmax.f32 %v1755, 0.0
        %v1873 = vmax.f32 %v1757, 0.0
        %v1874 = vmax.f32 %v1760, 0.0
        %v1875 = vmax.f32 %v1762, 0.0
        %v1876 = vmax.f32 %v1765, 0.0
        %v1877 = vmax.f32 %v1767, 0.0
        %v1878 = vmax.f32 %v1770, 0.0
        %v1879 = vmax.f32 %v1772, 0.0
        %v1880 = vmax.f32 %v1775, 0.0
        %v1881 = vmax.f32 %v1777, 0.0
        %v1882 = vmax.f32 %v1780, 0.0
        %v1883 = vmax.f32 %v1782, 0.0
        %v1884 = vmax.f32 %v1785, 0.0
        %v1885 = vmax.f32 %v1787, 0.0
        %v1886 = vmax.f32 %v1790, 0.0
        %v1887 = vmax.f32 %v1792, 0.0
        %v1888 = vmax.f32 %v1795, 0.0
        %v1889 = vmax.f32 %v1797, 0.0
        %v1890 = vmax.f32 %v1800, 0.0
        %v1891 = vmax.f32 %v1802, 0.0
        %v1892 = vmax.f32 %v1805, 0.0
        %v1893 = vmax.f32 %v1807, 0.0
        %v1894 = vmax.f32 %v1810, 0.0
        %v1895 = vmax.f32 %v1812, 0.0
        %v1896 = vmax.f32 %v1815, 0.0
        %v1897 = vmax.f32 %v1817, 0.0
        %v1898 = vmax.f32 %v1820, 0.0
        %v1899 = vmax.f32 %v1822, 0.0
        %v1900 = vmax.f32 %v1825, 0.0
        %v1901 = vmax.f32 %v1827, 0.0
        %v1902 = vmax.f32 %v1830, 0.0
        %v1903 = vmax.f32 %v1832, 0.0
        %v1904 = vmax.f32 %v1835, 0.0
        %v1905 = vmax.f32 %v1837, 0.0
        %v1906 = vmax.f32 %v1840, 0.0
        %v1907 = vmax.f32 %v1842, 0.0
        %v1908 = vpack.c.bf16 %v1845, %v1844
        %v1909 = vpack.c.bf16 %v1847, %v1846
        %v1910 = vpack.c.bf16 %v1849, %v1848
        %v1911 = vpack.c.bf16 %v1851, %v1850
        %v1912 = vpack.c.bf16 %v1853, %v1852
        %v1913 = vpack.c.bf16 %v1855, %v1854
        %v1914 = vpack.c.bf16 %v1857, %v1856
        %v1915 = vpack.c.bf16 %v1859, %v1858
        %v1916 = vpack.c.bf16 %v1861, %v1860
        %v1917 = vpack.c.bf16 %v1863, %v1862
        %v1918 = vpack.c.bf16 %v1865, %v1864
        %v1919 = vpack.c.bf16 %v1867, %v1866
        %v1920 = vpack.c.bf16 %v1869, %v1868
        %v1921 = vpack.c.bf16 %v1871, %v1870
        %v1922 = vpack.c.bf16 %v1873, %v1872
        %v1923 = vpack.c.bf16 %v1875, %v1874
        %v1924 = vpack.c.bf16 %v1877, %v1876
        %v1925 = vpack.c.bf16 %v1879, %v1878
        %v1926 = vpack.c.bf16 %v1881, %v1880
        %v1927 = vpack.c.bf16 %v1883, %v1882
        %v1928 = vpack.c.bf16 %v1885, %v1884
        %v1929 = vpack.c.bf16 %v1887, %v1886
        %v1930 = vpack.c.bf16 %v1889, %v1888
        %v1931 = vpack.c.bf16 %v1891, %v1890
        %v1932 = vpack.c.bf16 %v1893, %v1892
        %v1933 = vpack.c.bf16 %v1895, %v1894
        %v1934 = vpack.c.bf16 %v1897, %v1896
        %v1935 = vpack.c.bf16 %v1899, %v1898
        %v1936 = vpack.c.bf16 %v1901, %v1900
        %v1937 = vpack.c.bf16 %v1903, %v1902
        %v1938 = vpack.c.bf16 %v1905, %v1904
        %v1939 = vpack.c.bf16 %v1907, %v1906
        %v1940 = vld [vmem:[%s7] sm:$0xf]
        %v1941 = vld [vmem:[%s7 + $0x4] sm:$0xf]
        %v1942 = vld [vmem:[%s7 + $0x8] sm:$0xf]
        %v1943 = vld [vmem:[%s7 + $0xc] sm:$0xf]
        %v1944 = vld [vmem:[#allocation2] sm:$0x1]
        %v1946 = vperm.slane %v1944, 0
        %v1952 = vunpack.c.l.b16 %v1940
        %v1953 = vunpack.c.l.b16 %v1941
        %v1954 = vunpack.c.l.b16 %v1942
        %v1955 = vunpack.c.l.b16 %v1943
        %v1956 = vpack.c.b16 %v1953, %v1952
        %v1957 = vpack.c.b16 %v1955, %v1954
        %v1961 = vsel %vm1578, %v1908, 0
        %v1964 = vsel %vm1578, %v1909, 0
        %v1967 = vsel %vm1578, %v1910, 0
        %v1970 = vsel %vm1578, %v1911, 0
        %v1973 = vsel %vm1578, %v1912, 0
        %v1976 = vsel %vm1578, %v1913, 0
        %v1979 = vsel %vm1578, %v1914, 0
        %v1982 = vsel %vm1578, %v1915, 0
        %v1985 = vsel %vm1578, %v1916, 0
        %v1988 = vsel %vm1578, %v1917, 0
        %v1991 = vsel %vm1578, %v1918, 0
        %v1994 = vsel %vm1578, %v1919, 0
        %v1997 = vsel %vm1578, %v1920, 0
        %v2000 = vsel %vm1578, %v1921, 0
        %v2003 = vsel %vm1578, %v1922, 0
        %v2006 = vsel %vm1578, %v1923, 0
        %v2009 = vsel %vm1578, %v1924, 0
        %v2012 = vsel %vm1578, %v1925, 0
        %v2015 = vsel %vm1578, %v1926, 0
        %v2018 = vsel %vm1578, %v1927, 0
        %v2021 = vsel %vm1578, %v1928, 0
        %v2024 = vsel %vm1578, %v1929, 0
        %v2027 = vsel %vm1578, %v1930, 0
        %v2030 = vsel %vm1578, %v1931, 0
        %v2033 = vsel %vm1578, %v1932, 0
        %v2036 = vsel %vm1578, %v1933, 0
        %v2039 = vsel %vm1578, %v1934, 0
        %v2042 = vsel %vm1578, %v1935, 0
        %v2045 = vsel %vm1578, %v1936, 0
        %v2048 = vsel %vm1578, %v1937, 0
        %v2051 = vsel %vm1578, %v1938, 0
        %v2054 = vsel %vm1578, %v1939, 0
        %2056 = vmatpush.bf16.msra.mxu0 0
        %2057 = vmatpush.bf16.msra.mxu0 0
        %2058 = vmatpush.bf16.msra.mxu0 0
        %2059 = vmatpush.bf16.msra.mxu0 0
        %2060 = vmatpush.bf16.msra.mxu0 0
        %2061 = vmatpush.bf16.msra.mxu0 0
        %2062 = vmatpush.bf16.msra.mxu0 %v1957
        %2063 = vmatpush.bf16.msra.mxu0 %v1956
        %2064 = vmatmul.bf16.gmra.mxu0 %v1961
        %v2065 = vpop.f32.mrf.mxu0
        %v2066 = vadd.f32 %v1946, %v2065
        %v2067 = vpop.f32.mrf.mxu0
        %v2068 = vadd.f32 %v1946, %v2067
        %2069 = vmatmul.bf16.gmra.mxu0 %v1964
        %v2070 = vpop.f32.mrf.mxu0
        %v2071 = vadd.f32 %v1946, %v2070
        %v2072 = vpop.f32.mrf.mxu0
        %v2073 = vadd.f32 %v1946, %v2072
        %2074 = vmatmul.bf16.gmra.mxu0 %v1967
        %v2075 = vpop.f32.mrf.mxu0
        %v2076 = vadd.f32 %v1946, %v2075
        %v2077 = vpop.f32.mrf.mxu0
        %v2078 = vadd.f32 %v1946, %v2077
        %2079 = vmatmul.bf16.gmra.mxu0 %v1970
        %v2080 = vpop.f32.mrf.mxu0
        %v2081 = vadd.f32 %v1946, %v2080
        %v2082 = vpop.f32.mrf.mxu0
        %v2083 = vadd.f32 %v1946, %v2082
        %2084 = vmatmul.bf16.gmra.mxu0 %v1973
        %v2085 = vpop.f32.mrf.mxu0
        %v2086 = vadd.f32 %v1946, %v2085
        %v2087 = vpop.f32.mrf.mxu0
        %v2088 = vadd.f32 %v1946, %v2087
        %2089 = vmatmul.bf16.gmra.mxu0 %v1976
        %v2090 = vpop.f32.mrf.mxu0
        %v2091 = vadd.f32 %v1946, %v2090
        %v2092 = vpop.f32.mrf.mxu0
        %v2093 = vadd.f32 %v1946, %v2092
        %2094 = vmatmul.bf16.gmra.mxu0 %v1979
        %v2095 = vpop.f32.mrf.mxu0
        %v2096 = vadd.f32 %v1946, %v2095
        %v2097 = vpop.f32.mrf.mxu0
        %v2098 = vadd.f32 %v1946, %v2097
        %2099 = vmatmul.bf16.gmra.mxu0 %v1982
        %v2100 = vpop.f32.mrf.mxu0
        %v2101 = vadd.f32 %v1946, %v2100
        %v2102 = vpop.f32.mrf.mxu0
        %v2103 = vadd.f32 %v1946, %v2102
        %2104 = vmatmul.bf16.gmra.mxu0 %v1985
        %v2105 = vpop.f32.mrf.mxu0
        %v2106 = vadd.f32 %v1946, %v2105
        %v2107 = vpop.f32.mrf.mxu0
        %v2108 = vadd.f32 %v1946, %v2107
        %2109 = vmatmul.bf16.gmra.mxu0 %v1988
        %v2110 = vpop.f32.mrf.mxu0
        %v2111 = vadd.f32 %v1946, %v2110
        %v2112 = vpop.f32.mrf.mxu0
        %v2113 = vadd.f32 %v1946, %v2112
        %2114 = vmatmul.bf16.gmra.mxu0 %v1991
        %v2115 = vpop.f32.mrf.mxu0
        %v2116 = vadd.f32 %v1946, %v2115
        %v2117 = vpop.f32.mrf.mxu0
        %v2118 = vadd.f32 %v1946, %v2117
        %2119 = vmatmul.bf16.gmra.mxu0 %v1994
        %v2120 = vpop.f32.mrf.mxu0
        %v2121 = vadd.f32 %v1946, %v2120
        %v2122 = vpop.f32.mrf.mxu0
        %v2123 = vadd.f32 %v1946, %v2122
        %2124 = vmatmul.bf16.gmra.mxu0 %v1997
        %v2125 = vpop.f32.mrf.mxu0
        %v2126 = vadd.f32 %v1946, %v2125
        %v2127 = vpop.f32.mrf.mxu0
        %v2128 = vadd.f32 %v1946, %v2127
        %2129 = vmatmul.bf16.gmra.mxu0 %v2000
        %v2130 = vpop.f32.mrf.mxu0
        %v2131 = vadd.f32 %v1946, %v2130
        %v2132 = vpop.f32.mrf.mxu0
        %v2133 = vadd.f32 %v1946, %v2132
        %2134 = vmatmul.bf16.gmra.mxu0 %v2003
        %v2135 = vpop.f32.mrf.mxu0
        %v2136 = vadd.f32 %v1946, %v2135
        %v2137 = vpop.f32.mrf.mxu0
        %v2138 = vadd.f32 %v1946, %v2137
        %2139 = vmatmul.bf16.gmra.mxu0 %v2006
        %v2140 = vpop.f32.mrf.mxu0
        %v2141 = vadd.f32 %v1946, %v2140
        %v2142 = vpop.f32.mrf.mxu0
        %v2143 = vadd.f32 %v1946, %v2142
        %2144 = vmatmul.bf16.gmra.mxu0 %v2009
        %v2145 = vpop.f32.mrf.mxu0
        %v2146 = vadd.f32 %v1946, %v2145
        %v2147 = vpop.f32.mrf.mxu0
        %v2148 = vadd.f32 %v1946, %v2147
        %2149 = vmatmul.bf16.gmra.mxu0 %v2012
        %v2150 = vpop.f32.mrf.mxu0
        %v2151 = vadd.f32 %v1946, %v2150
        %v2152 = vpop.f32.mrf.mxu0
        %v2153 = vadd.f32 %v1946, %v2152
        %2154 = vmatmul.bf16.gmra.mxu0 %v2015
        %v2155 = vpop.f32.mrf.mxu0
        %v2156 = vadd.f32 %v1946, %v2155
        %v2157 = vpop.f32.mrf.mxu0
        %v2158 = vadd.f32 %v1946, %v2157
        %2159 = vmatmul.bf16.gmra.mxu0 %v2018
        %v2160 = vpop.f32.mrf.mxu0
        %v2161 = vadd.f32 %v1946, %v2160
        %v2162 = vpop.f32.mrf.mxu0
        %v2163 = vadd.f32 %v1946, %v2162
        %2164 = vmatmul.bf16.gmra.mxu0 %v2021
        %v2165 = vpop.f32.mrf.mxu0
        %v2166 = vadd.f32 %v1946, %v2165
        %v2167 = vpop.f32.mrf.mxu0
        %v2168 = vadd.f32 %v1946, %v2167
        %2169 = vmatmul.bf16.gmra.mxu0 %v2024
        %v2170 = vpop.f32.mrf.mxu0
        %v2171 = vadd.f32 %v1946, %v2170
        %v2172 = vpop.f32.mrf.mxu0
        %v2173 = vadd.f32 %v1946, %v2172
        %2174 = vmatmul.bf16.gmra.mxu0 %v2027
        %v2175 = vpop.f32.mrf.mxu0
        %v2176 = vadd.f32 %v1946, %v2175
        %v2177 = vpop.f32.mrf.mxu0
        %v2178 = vadd.f32 %v1946, %v2177
        %2179 = vmatmul.bf16.gmra.mxu0 %v2030
        %v2180 = vpop.f32.mrf.mxu0
        %v2181 = vadd.f32 %v1946, %v2180
        %v2182 = vpop.f32.mrf.mxu0
        %v2183 = vadd.f32 %v1946, %v2182
        %2184 = vmatmul.bf16.gmra.mxu0 %v2033
        %v2185 = vpop.f32.mrf.mxu0
        %v2186 = vadd.f32 %v1946, %v2185
        %v2187 = vpop.f32.mrf.mxu0
        %v2188 = vadd.f32 %v1946, %v2187
        %2189 = vmatmul.bf16.gmra.mxu0 %v2036
        %v2190 = vpop.f32.mrf.mxu0
        %v2191 = vadd.f32 %v1946, %v2190
        %v2192 = vpop.f32.mrf.mxu0
        %v2193 = vadd.f32 %v1946, %v2192
        %2194 = vmatmul.bf16.gmra.mxu0 %v2039
        %v2195 = vpop.f32.mrf.mxu0
        %v2196 = vadd.f32 %v1946, %v2195
        %v2197 = vpop.f32.mrf.mxu0
        %v2198 = vadd.f32 %v1946, %v2197
        %2199 = vmatmul.bf16.gmra.mxu0 %v2042
        %v2200 = vpop.f32.mrf.mxu0
        %v2201 = vadd.f32 %v1946, %v2200
        %v2202 = vpop.f32.mrf.mxu0
        %v2203 = vadd.f32 %v1946, %v2202
        %2204 = vmatmul.bf16.gmra.mxu0 %v2045
        %v2205 = vpop.f32.mrf.mxu0
        %v2206 = vadd.f32 %v1946, %v2205
        %v2207 = vpop.f32.mrf.mxu0
        %v2208 = vadd.f32 %v1946, %v2207
        %2209 = vmatmul.bf16.gmra.mxu0 %v2048
        %v2210 = vpop.f32.mrf.mxu0
        %v2211 = vadd.f32 %v1946, %v2210
        %v2212 = vpop.f32.mrf.mxu0
        %v2213 = vadd.f32 %v1946, %v2212
        %2214 = vmatmul.bf16.gmra.mxu0 %v2051
        %v2215 = vpop.f32.mrf.mxu0
        %v2216 = vadd.f32 %v1946, %v2215
        %v2217 = vpop.f32.mrf.mxu0
        %v2218 = vadd.f32 %v1946, %v2217
        %2219 = vmatmul.bf16.gmra.mxu0 %v2054
        %v2220 = vpop.f32.mrf.mxu0
        %v2221 = vadd.f32 %v1946, %v2220
        %v2222 = vpop.f32.mrf.mxu0
        %v2223 = vadd.f32 %v1946, %v2222
        %2224 = vdwg.mxu0
        %v2225 = vxor.u32 %v2066, 2147483648
        %v2226 = vxor.u32 %v2068, 2147483648
        %v2227 = vxor.u32 %v2071, 2147483648
        %v2228 = vxor.u32 %v2073, 2147483648
        %v2229 = vxor.u32 %v2076, 2147483648
        %v2230 = vxor.u32 %v2078, 2147483648
        %v2231 = vxor.u32 %v2081, 2147483648
        %v2232 = vxor.u32 %v2083, 2147483648
        %v2233 = vxor.u32 %v2086, 2147483648
        %v2234 = vxor.u32 %v2088, 2147483648
        %v2235 = vxor.u32 %v2091, 2147483648
        %v2236 = vxor.u32 %v2093, 2147483648
        %v2237 = vxor.u32 %v2096, 2147483648
        %v2238 = vxor.u32 %v2098, 2147483648
        %v2239 = vxor.u32 %v2101, 2147483648
        %v2240 = vxor.u32 %v2103, 2147483648
        %v2241 = vxor.u32 %v2106, 2147483648
        %v2242 = vxor.u32 %v2108, 2147483648
        %v2243 = vxor.u32 %v2111, 2147483648
        %v2244 = vxor.u32 %v2113, 2147483648
        %v2245 = vxor.u32 %v2116, 2147483648
        %v2246 = vxor.u32 %v2118, 2147483648
        %v2247 = vxor.u32 %v2121, 2147483648
        %v2248 = vxor.u32 %v2123, 2147483648
        %v2249 = vxor.u32 %v2126, 2147483648
        %v2250 = vxor.u32 %v2128, 2147483648
        %v2251 = vxor.u32 %v2131, 2147483648
        %v2252 = vxor.u32 %v2133, 2147483648
        %v2253 = vxor.u32 %v2136, 2147483648
        %v2254 = vxor.u32 %v2138, 2147483648
        %v2255 = vxor.u32 %v2141, 2147483648
        %v2256 = vxor.u32 %v2143, 2147483648
        %v2257 = vxor.u32 %v2146, 2147483648
        %v2258 = vxor.u32 %v2148, 2147483648
        %v2259 = vxor.u32 %v2151, 2147483648
        %v2260 = vxor.u32 %v2153, 2147483648
        %v2261 = vxor.u32 %v2156, 2147483648
        %v2262 = vxor.u32 %v2158, 2147483648
        %v2263 = vxor.u32 %v2161, 2147483648
        %v2264 = vxor.u32 %v2163, 2147483648
        %v2265 = vxor.u32 %v2166, 2147483648
        %v2266 = vxor.u32 %v2168, 2147483648
        %v2267 = vxor.u32 %v2171, 2147483648
        %v2268 = vxor.u32 %v2173, 2147483648
        %v2269 = vxor.u32 %v2176, 2147483648
        %v2270 = vxor.u32 %v2178, 2147483648
        %v2271 = vxor.u32 %v2181, 2147483648
        %v2272 = vxor.u32 %v2183, 2147483648
        %v2273 = vxor.u32 %v2186, 2147483648
        %v2274 = vxor.u32 %v2188, 2147483648
        %v2275 = vxor.u32 %v2191, 2147483648
        %v2276 = vxor.u32 %v2193, 2147483648
        %v2277 = vxor.u32 %v2196, 2147483648
        %v2278 = vxor.u32 %v2198, 2147483648
        %v2279 = vxor.u32 %v2201, 2147483648
        %v2280 = vxor.u32 %v2203, 2147483648
        %v2281 = vxor.u32 %v2206, 2147483648
        %v2282 = vxor.u32 %v2208, 2147483648
        %v2283 = vxor.u32 %v2211, 2147483648
        %v2284 = vxor.u32 %v2213, 2147483648
        %v2285 = vxor.u32 %v2216, 2147483648
        %v2286 = vxor.u32 %v2218, 2147483648
        %v2287 = vxor.u32 %v2221, 2147483648
        %v2288 = vxor.u32 %v2223, 2147483648
        %v2289 = vmul.f32 %v2225, 1.442695
        %v2290 = vpow.pop %v2289
        %v2291 = vmul.f32 %v2226, 1.442695
        %v2292 = vpow.pop %v2291
        %v2293 = vmul.f32 %v2227, 1.442695
        %v2294 = vpow.pop %v2293
        %v2295 = vmul.f32 %v2228, 1.442695
        %v2296 = vpow.pop %v2295
        %v2297 = vmul.f32 %v2229, 1.442695
        %v2298 = vpow.pop %v2297
        %v2299 = vmul.f32 %v2230, 1.442695
        %v2300 = vpow.pop %v2299
        %v2301 = vmul.f32 %v2231, 1.442695
        %v2302 = vpow.pop %v2301
        %v2303 = vmul.f32 %v2232, 1.442695
        %v2304 = vpow.pop %v2303
        %v2305 = vmul.f32 %v2233, 1.442695
        %v2306 = vpow.pop %v2305
        %v2307 = vmul.f32 %v2234, 1.442695
        %v2308 = vpow.pop %v2307
        %v2309 = vmul.f32 %v2235, 1.442695
        %v2310 = vpow.pop %v2309
        %v2311 = vmul.f32 %v2236, 1.442695
        %v2312 = vpow.pop %v2311
        %v2313 = vmul.f32 %v2237, 1.442695
        %v2314 = vpow.pop %v2313
        %v2315 = vmul.f32 %v2238, 1.442695
        %v2316 = vpow.pop %v2315
        %v2317 = vmul.f32 %v2239, 1.442695
        %v2318 = vpow.pop %v2317
        %v2319 = vmul.f32 %v2240, 1.442695
        %v2320 = vpow.pop %v2319
        %v2321 = vmul.f32 %v2241, 1.442695
        %v2322 = vpow.pop %v2321
        %v2323 = vmul.f32 %v2242, 1.442695
        %v2324 = vpow.pop %v2323
        %v2325 = vmul.f32 %v2243, 1.442695
        %v2326 = vpow.pop %v2325
        %v2327 = vmul.f32 %v2244, 1.442695
        %v2328 = vpow.pop %v2327
        %v2329 = vmul.f32 %v2245, 1.442695
        %v2330 = vpow.pop %v2329
        %v2331 = vmul.f32 %v2246, 1.442695
        %v2332 = vpow.pop %v2331
        %v2333 = vmul.f32 %v2247, 1.442695
        %v2334 = vpow.pop %v2333
        %v2335 = vmul.f32 %v2248, 1.442695
        %v2336 = vpow.pop %v2335
        %v2337 = vmul.f32 %v2249, 1.442695
        %v2338 = vpow.pop %v2337
        %v2339 = vmul.f32 %v2250, 1.442695
        %v2340 = vpow.pop %v2339
        %v2341 = vmul.f32 %v2251, 1.442695
        %v2342 = vpow.pop %v2341
        %v2343 = vmul.f32 %v2252, 1.442695
        %v2344 = vpow.pop %v2343
        %v2345 = vmul.f32 %v2253, 1.442695
        %v2346 = vpow.pop %v2345
        %v2347 = vmul.f32 %v2254, 1.442695
        %v2348 = vpow.pop %v2347
        %v2349 = vmul.f32 %v2255, 1.442695
        %v2350 = vpow.pop %v2349
        %v2351 = vmul.f32 %v2256, 1.442695
        %v2352 = vpow.pop %v2351
        %v2353 = vmul.f32 %v2257, 1.442695
        %v2354 = vpow.pop %v2353
        %v2355 = vmul.f32 %v2258, 1.442695
        %v2356 = vpow.pop %v2355
        %v2357 = vmul.f32 %v2259, 1.442695
        %v2358 = vpow.pop %v2357
        %v2359 = vmul.f32 %v2260, 1.442695
        %v2360 = vpow.pop %v2359
        %v2361 = vmul.f32 %v2261, 1.442695
        %v2362 = vpow.pop %v2361
        %v2363 = vmul.f32 %v2262, 1.442695
        %v2364 = vpow.pop %v2363
        %v2365 = vmul.f32 %v2263, 1.442695
        %v2366 = vpow.pop %v2365
        %v2367 = vmul.f32 %v2264, 1.442695
        %v2368 = vpow.pop %v2367
        %v2369 = vmul.f32 %v2265, 1.442695
        %v2370 = vpow.pop %v2369
        %v2371 = vmul.f32 %v2266, 1.442695
        %v2372 = vpow.pop %v2371
        %v2373 = vmul.f32 %v2267, 1.442695
        %v2374 = vpow.pop %v2373
        %v2375 = vmul.f32 %v2268, 1.442695
        %v2376 = vpow.pop %v2375
        %v2377 = vmul.f32 %v2269, 1.442695
        %v2378 = vpow.pop %v2377
        %v2379 = vmul.f32 %v2270, 1.442695
        %v2380 = vpow.pop %v2379
        %v2381 = vmul.f32 %v2271, 1.442695
        %v2382 = vpow.pop %v2381
        %v2383 = vmul.f32 %v2272, 1.442695
        %v2384 = vpow.pop %v2383
        %v2385 = vmul.f32 %v2273, 1.442695
        %v2386 = vpow.pop %v2385
        %v2387 = vmul.f32 %v2274, 1.442695
        %v2388 = vpow.pop %v2387
        %v2389 = vmul.f32 %v2275, 1.442695
        %v2390 = vpow.pop %v2389
        %v2391 = vmul.f32 %v2276, 1.442695
        %v2392 = vpow.pop %v2391
        %v2393 = vmul.f32 %v2277, 1.442695
        %v2394 = vpow.pop %v2393
        %v2395 = vmul.f32 %v2278, 1.442695
        %v2396 = vpow.pop %v2395
        %v2397 = vmul.f32 %v2279, 1.442695
        %v2398 = vpow.pop %v2397
        %v2399 = vmul.f32 %v2280, 1.442695
        %v2400 = vpow.pop %v2399
        %v2401 = vmul.f32 %v2281, 1.442695
        %v2402 = vpow.pop %v2401
        %v2403 = vmul.f32 %v2282, 1.442695
        %v2404 = vpow.pop %v2403
        %v2405 = vmul.f32 %v2283, 1.442695
        %v2406 = vpow.pop %v2405
        %v2407 = vmul.f32 %v2284, 1.442695
        %v2408 = vpow.pop %v2407
        %v2409 = vmul.f32 %v2285, 1.442695
        %v2410 = vpow.pop %v2409
        %v2411 = vmul.f32 %v2286, 1.442695
        %v2412 = vpow.pop %v2411
        %v2413 = vmul.f32 %v2287, 1.442695
        %v2414 = vpow.pop %v2413
        %v2415 = vmul.f32 %v2288, 1.442695
        %v2416 = vpow.pop %v2415
        %v2417 = vadd.f32 %v2290, 1.0
        %v2418 = vadd.f32 %v2292, 1.0
        %v2419 = vadd.f32 %v2294, 1.0
        %v2420 = vadd.f32 %v2296, 1.0
        %v2421 = vadd.f32 %v2298, 1.0
        %v2422 = vadd.f32 %v2300, 1.0
        %v2423 = vadd.f32 %v2302, 1.0
        %v2424 = vadd.f32 %v2304, 1.0
        %v2425 = vadd.f32 %v2306, 1.0
        %v2426 = vadd.f32 %v2308, 1.0
        %v2427 = vadd.f32 %v2310, 1.0
        %v2428 = vadd.f32 %v2312, 1.0
        %v2429 = vadd.f32 %v2314, 1.0
        %v2430 = vadd.f32 %v2316, 1.0
        %v2431 = vadd.f32 %v2318, 1.0
        %v2432 = vadd.f32 %v2320, 1.0
        %v2433 = vadd.f32 %v2322, 1.0
        %v2434 = vadd.f32 %v2324, 1.0
        %v2435 = vadd.f32 %v2326, 1.0
        %v2436 = vadd.f32 %v2328, 1.0
        %v2437 = vadd.f32 %v2330, 1.0
        %v2438 = vadd.f32 %v2332, 1.0
        %v2439 = vadd.f32 %v2334, 1.0
        %v2440 = vadd.f32 %v2336, 1.0
        %v2441 = vadd.f32 %v2338, 1.0
        %v2442 = vadd.f32 %v2340, 1.0
        %v2443 = vadd.f32 %v2342, 1.0
        %v2444 = vadd.f32 %v2344, 1.0
        %v2445 = vadd.f32 %v2346, 1.0
        %v2446 = vadd.f32 %v2348, 1.0
        %v2447 = vadd.f32 %v2350, 1.0
        %v2448 = vadd.f32 %v2352, 1.0
        %v2449 = vadd.f32 %v2354, 1.0
        %v2450 = vadd.f32 %v2356, 1.0
        %v2451 = vadd.f32 %v2358, 1.0
        %v2452 = vadd.f32 %v2360, 1.0
        %v2453 = vadd.f32 %v2362, 1.0
        %v2454 = vadd.f32 %v2364, 1.0
        %v2455 = vadd.f32 %v2366, 1.0
        %v2456 = vadd.f32 %v2368, 1.0
        %v2457 = vadd.f32 %v2370, 1.0
        %v2458 = vadd.f32 %v2372, 1.0
        %v2459 = vadd.f32 %v2374, 1.0
        %v2460 = vadd.f32 %v2376, 1.0
        %v2461 = vadd.f32 %v2378, 1.0
        %v2462 = vadd.f32 %v2380, 1.0
        %v2463 = vadd.f32 %v2382, 1.0
        %v2464 = vadd.f32 %v2384, 1.0
        %v2465 = vadd.f32 %v2386, 1.0
        %v2466 = vadd.f32 %v2388, 1.0
        %v2467 = vadd.f32 %v2390, 1.0
        %v2468 = vadd.f32 %v2392, 1.0
        %v2469 = vadd.f32 %v2394, 1.0
        %v2470 = vadd.f32 %v2396, 1.0
        %v2471 = vadd.f32 %v2398, 1.0
        %v2472 = vadd.f32 %v2400, 1.0
        %v2473 = vadd.f32 %v2402, 1.0
        %v2474 = vadd.f32 %v2404, 1.0
        %v2475 = vadd.f32 %v2406, 1.0
        %v2476 = vadd.f32 %v2408, 1.0
        %v2477 = vadd.f32 %v2410, 1.0
        %v2478 = vadd.f32 %v2412, 1.0
        %v2479 = vadd.f32 %v2414, 1.0
        %v2480 = vadd.f32 %v2416, 1.0
        %v2481 = vrcp.pop %v2417
        %v2482 = vmul.f32 %v2417, %v2481
        %v2483 = vsub.f32 1.0, %v2482
        %v2484 = vmul.f32 %v2481, %v2483
        %v2485 = vadd.f32 %v2481, %v2484
        %vm2486 = vweird.f32 %v2417
        %vm2487 = vweird.f32 %v2481
        %vm2488 = vmor %vm2486, %vm2487
        %v2489 = vsel %vm2488, %v2481, %v2485
        %v2490 = vand.u32 2147483647, %v2417
        %vm2491 = vcmp.eq.f32.partialorder %v2490, 8.507059e+37
        %v2492 = vand.u32 %v2417, 2147483648
        %v2493 = vor.u32 1.1754944e-38, %v2492
        %v2494 = vsel %vm2491, %v2493, %v2489
        %v2495 = vmul.f32 1.0, %v2494
        %v2496 = vrcp.pop %v2418
        %v2497 = vmul.f32 %v2418, %v2496
        %v2498 = vsub.f32 1.0, %v2497
        %v2499 = vmul.f32 %v2496, %v2498
        %v2500 = vadd.f32 %v2496, %v2499
        %vm2501 = vweird.f32 %v2418
        %vm2502 = vweird.f32 %v2496
        %vm2503 = vmor %vm2501, %vm2502
        %v2504 = vsel %vm2503, %v2496, %v2500
        %v2505 = vand.u32 2147483647, %v2418
        %vm2506 = vcmp.eq.f32.partialorder %v2505, 8.507059e+37
        %v2507 = vand.u32 %v2418, 2147483648
        %v2508 = vor.u32 1.1754944e-38, %v2507
        %v2509 = vsel %vm2506, %v2508, %v2504
        %v2510 = vmul.f32 1.0, %v2509
        %v2511 = vrcp.pop %v2419
        %v2512 = vmul.f32 %v2419, %v2511
        %v2513 = vsub.f32 1.0, %v2512
        %v2514 = vmul.f32 %v2511, %v2513
        %v2515 = vadd.f32 %v2511, %v2514
        %vm2516 = vweird.f32 %v2419
        %vm2517 = vweird.f32 %v2511
        %vm2518 = vmor %vm2516, %vm2517
        %v2519 = vsel %vm2518, %v2511, %v2515
        %v2520 = vand.u32 2147483647, %v2419
        %vm2521 = vcmp.eq.f32.partialorder %v2520, 8.507059e+37
        %v2522 = vand.u32 %v2419, 2147483648
        %v2523 = vor.u32 1.1754944e-38, %v2522
        %v2524 = vsel %vm2521, %v2523, %v2519
        %v2525 = vmul.f32 1.0, %v2524
        %v2526 = vrcp.pop %v2420
        %v2527 = vmul.f32 %v2420, %v2526
        %v2528 = vsub.f32 1.0, %v2527
        %v2529 = vmul.f32 %v2526, %v2528
        %v2530 = vadd.f32 %v2526, %v2529
        %vm2531 = vweird.f32 %v2420
        %vm2532 = vweird.f32 %v2526
        %vm2533 = vmor %vm2531, %vm2532
        %v2534 = vsel %vm2533, %v2526, %v2530
        %v2535 = vand.u32 2147483647, %v2420
        %vm2536 = vcmp.eq.f32.partialorder %v2535, 8.507059e+37
        %v2537 = vand.u32 %v2420, 2147483648
        %v2538 = vor.u32 1.1754944e-38, %v2537
        %v2539 = vsel %vm2536, %v2538, %v2534
        %v2540 = vmul.f32 1.0, %v2539
        %v2541 = vrcp.pop %v2421
        %v2542 = vmul.f32 %v2421, %v2541
        %v2543 = vsub.f32 1.0, %v2542
        %v2544 = vmul.f32 %v2541, %v2543
        %v2545 = vadd.f32 %v2541, %v2544
        %vm2546 = vweird.f32 %v2421
        %vm2547 = vweird.f32 %v2541
        %vm2548 = vmor %vm2546, %vm2547
        %v2549 = vsel %vm2548, %v2541, %v2545
        %v2550 = vand.u32 2147483647, %v2421
        %vm2551 = vcmp.eq.f32.partialorder %v2550, 8.507059e+37
        %v2552 = vand.u32 %v2421, 2147483648
        %v2553 = vor.u32 1.1754944e-38, %v2552
        %v2554 = vsel %vm2551, %v2553, %v2549
        %v2555 = vmul.f32 1.0, %v2554
        %v2556 = vrcp.pop %v2422
        %v2557 = vmul.f32 %v2422, %v2556
        %v2558 = vsub.f32 1.0, %v2557
        %v2559 = vmul.f32 %v2556, %v2558
        %v2560 = vadd.f32 %v2556, %v2559
        %vm2561 = vweird.f32 %v2422
        %vm2562 = vweird.f32 %v2556
        %vm2563 = vmor %vm2561, %vm2562
        %v2564 = vsel %vm2563, %v2556, %v2560
        %v2565 = vand.u32 2147483647, %v2422
        %vm2566 = vcmp.eq.f32.partialorder %v2565, 8.507059e+37
        %v2567 = vand.u32 %v2422, 2147483648
        %v2568 = vor.u32 1.1754944e-38, %v2567
        %v2569 = vsel %vm2566, %v2568, %v2564
        %v2570 = vmul.f32 1.0, %v2569
        %v2571 = vrcp.pop %v2423
        %v2572 = vmul.f32 %v2423, %v2571
        %v2573 = vsub.f32 1.0, %v2572
        %v2574 = vmul.f32 %v2571, %v2573
        %v2575 = vadd.f32 %v2571, %v2574
        %vm2576 = vweird.f32 %v2423
        %vm2577 = vweird.f32 %v2571
        %vm2578 = vmor %vm2576, %vm2577
        %v2579 = vsel %vm2578, %v2571, %v2575
        %v2580 = vand.u32 2147483647, %v2423
        %vm2581 = vcmp.eq.f32.partialorder %v2580, 8.507059e+37
        %v2582 = vand.u32 %v2423, 2147483648
        %v2583 = vor.u32 1.1754944e-38, %v2582
        %v2584 = vsel %vm2581, %v2583, %v2579
        %v2585 = vmul.f32 1.0, %v2584
        %v2586 = vrcp.pop %v2424
        %v2587 = vmul.f32 %v2424, %v2586
        %v2588 = vsub.f32 1.0, %v2587
        %v2589 = vmul.f32 %v2586, %v2588
        %v2590 = vadd.f32 %v2586, %v2589
        %vm2591 = vweird.f32 %v2424
        %vm2592 = vweird.f32 %v2586
        %vm2593 = vmor %vm2591, %vm2592
        %v2594 = vsel %vm2593, %v2586, %v2590
        %v2595 = vand.u32 2147483647, %v2424
        %vm2596 = vcmp.eq.f32.partialorder %v2595, 8.507059e+37
        %v2597 = vand.u32 %v2424, 2147483648
        %v2598 = vor.u32 1.1754944e-38, %v2597
        %v2599 = vsel %vm2596, %v2598, %v2594
        %v2600 = vmul.f32 1.0, %v2599
        %v2601 = vrcp.pop %v2425
        %v2602 = vmul.f32 %v2425, %v2601
        %v2603 = vsub.f32 1.0, %v2602
        %v2604 = vmul.f32 %v2601, %v2603
        %v2605 = vadd.f32 %v2601, %v2604
        %vm2606 = vweird.f32 %v2425
        %vm2607 = vweird.f32 %v2601
        %vm2608 = vmor %vm2606, %vm2607
        %v2609 = vsel %vm2608, %v2601, %v2605
        %v2610 = vand.u32 2147483647, %v2425
        %vm2611 = vcmp.eq.f32.partialorder %v2610, 8.507059e+37
        %v2612 = vand.u32 %v2425, 2147483648
        %v2613 = vor.u32 1.1754944e-38, %v2612
        %v2614 = vsel %vm2611, %v2613, %v2609
        %v2615 = vmul.f32 1.0, %v2614
        %v2616 = vrcp.pop %v2426
        %v2617 = vmul.f32 %v2426, %v2616
        %v2618 = vsub.f32 1.0, %v2617
        %v2619 = vmul.f32 %v2616, %v2618
        %v2620 = vadd.f32 %v2616, %v2619
        %vm2621 = vweird.f32 %v2426
        %vm2622 = vweird.f32 %v2616
        %vm2623 = vmor %vm2621, %vm2622
        %v2624 = vsel %vm2623, %v2616, %v2620
        %v2625 = vand.u32 2147483647, %v2426
        %vm2626 = vcmp.eq.f32.partialorder %v2625, 8.507059e+37
        %v2627 = vand.u32 %v2426, 2147483648
        %v2628 = vor.u32 1.1754944e-38, %v2627
        %v2629 = vsel %vm2626, %v2628, %v2624
        %v2630 = vmul.f32 1.0, %v2629
        %v2631 = vrcp.pop %v2427
        %v2632 = vmul.f32 %v2427, %v2631
        %v2633 = vsub.f32 1.0, %v2632
        %v2634 = vmul.f32 %v2631, %v2633
        %v2635 = vadd.f32 %v2631, %v2634
        %vm2636 = vweird.f32 %v2427
        %vm2637 = vweird.f32 %v2631
        %vm2638 = vmor %vm2636, %vm2637
        %v2639 = vsel %vm2638, %v2631, %v2635
        %v2640 = vand.u32 2147483647, %v2427
        %vm2641 = vcmp.eq.f32.partialorder %v2640, 8.507059e+37
        %v2642 = vand.u32 %v2427, 2147483648
        %v2643 = vor.u32 1.1754944e-38, %v2642
        %v2644 = vsel %vm2641, %v2643, %v2639
        %v2645 = vmul.f32 1.0, %v2644
        %v2646 = vrcp.pop %v2428
        %v2647 = vmul.f32 %v2428, %v2646
        %v2648 = vsub.f32 1.0, %v2647
        %v2649 = vmul.f32 %v2646, %v2648
        %v2650 = vadd.f32 %v2646, %v2649
        %vm2651 = vweird.f32 %v2428
        %vm2652 = vweird.f32 %v2646
        %vm2653 = vmor %vm2651, %vm2652
        %v2654 = vsel %vm2653, %v2646, %v2650
        %v2655 = vand.u32 2147483647, %v2428
        %vm2656 = vcmp.eq.f32.partialorder %v2655, 8.507059e+37
        %v2657 = vand.u32 %v2428, 2147483648
        %v2658 = vor.u32 1.1754944e-38, %v2657
        %v2659 = vsel %vm2656, %v2658, %v2654
        %v2660 = vmul.f32 1.0, %v2659
        %v2661 = vrcp.pop %v2429
        %v2662 = vmul.f32 %v2429, %v2661
        %v2663 = vsub.f32 1.0, %v2662
        %v2664 = vmul.f32 %v2661, %v2663
        %v2665 = vadd.f32 %v2661, %v2664
        %vm2666 = vweird.f32 %v2429
        %vm2667 = vweird.f32 %v2661
        %vm2668 = vmor %vm2666, %vm2667
        %v2669 = vsel %vm2668, %v2661, %v2665
        %v2670 = vand.u32 2147483647, %v2429
        %vm2671 = vcmp.eq.f32.partialorder %v2670, 8.507059e+37
        %v2672 = vand.u32 %v2429, 2147483648
        %v2673 = vor.u32 1.1754944e-38, %v2672
        %v2674 = vsel %vm2671, %v2673, %v2669
        %v2675 = vmul.f32 1.0, %v2674
        %v2676 = vrcp.pop %v2430
        %v2677 = vmul.f32 %v2430, %v2676
        %v2678 = vsub.f32 1.0, %v2677
        %v2679 = vmul.f32 %v2676, %v2678
        %v2680 = vadd.f32 %v2676, %v2679
        %vm2681 = vweird.f32 %v2430
        %vm2682 = vweird.f32 %v2676
        %vm2683 = vmor %vm2681, %vm2682
        %v2684 = vsel %vm2683, %v2676, %v2680
        %v2685 = vand.u32 2147483647, %v2430
        %vm2686 = vcmp.eq.f32.partialorder %v2685, 8.507059e+37
        %v2687 = vand.u32 %v2430, 2147483648
        %v2688 = vor.u32 1.1754944e-38, %v2687
        %v2689 = vsel %vm2686, %v2688, %v2684
        %v2690 = vmul.f32 1.0, %v2689
        %v2691 = vrcp.pop %v2431
        %v2692 = vmul.f32 %v2431, %v2691
        %v2693 = vsub.f32 1.0, %v2692
        %v2694 = vmul.f32 %v2691, %v2693
        %v2695 = vadd.f32 %v2691, %v2694
        %vm2696 = vweird.f32 %v2431
        %vm2697 = vweird.f32 %v2691
        %vm2698 = vmor %vm2696, %vm2697
        %v2699 = vsel %vm2698, %v2691, %v2695
        %v2700 = vand.u32 2147483647, %v2431
        %vm2701 = vcmp.eq.f32.partialorder %v2700, 8.507059e+37
        %v2702 = vand.u32 %v2431, 2147483648
        %v2703 = vor.u32 1.1754944e-38, %v2702
        %v2704 = vsel %vm2701, %v2703, %v2699
        %v2705 = vmul.f32 1.0, %v2704
        %v2706 = vrcp.pop %v2432
        %v2707 = vmul.f32 %v2432, %v2706
        %v2708 = vsub.f32 1.0, %v2707
        %v2709 = vmul.f32 %v2706, %v2708
        %v2710 = vadd.f32 %v2706, %v2709
        %vm2711 = vweird.f32 %v2432
        %vm2712 = vweird.f32 %v2706
        %vm2713 = vmor %vm2711, %vm2712
        %v2714 = vsel %vm2713, %v2706, %v2710
        %v2715 = vand.u32 2147483647, %v2432
        %vm2716 = vcmp.eq.f32.partialorder %v2715, 8.507059e+37
        %v2717 = vand.u32 %v2432, 2147483648
        %v2718 = vor.u32 1.1754944e-38, %v2717
        %v2719 = vsel %vm2716, %v2718, %v2714
        %v2720 = vmul.f32 1.0, %v2719
        %v2721 = vrcp.pop %v2433
        %v2722 = vmul.f32 %v2433, %v2721
        %v2723 = vsub.f32 1.0, %v2722
        %v2724 = vmul.f32 %v2721, %v2723
        %v2725 = vadd.f32 %v2721, %v2724
        %vm2726 = vweird.f32 %v2433
        %vm2727 = vweird.f32 %v2721
        %vm2728 = vmor %vm2726, %vm2727
        %v2729 = vsel %vm2728, %v2721, %v2725
        %v2730 = vand.u32 2147483647, %v2433
        %vm2731 = vcmp.eq.f32.partialorder %v2730, 8.507059e+37
        %v2732 = vand.u32 %v2433, 2147483648
        %v2733 = vor.u32 1.1754944e-38, %v2732
        %v2734 = vsel %vm2731, %v2733, %v2729
        %v2735 = vmul.f32 1.0, %v2734
        %v2736 = vrcp.pop %v2434
        %v2737 = vmul.f32 %v2434, %v2736
        %v2738 = vsub.f32 1.0, %v2737
        %v2739 = vmul.f32 %v2736, %v2738
        %v2740 = vadd.f32 %v2736, %v2739
        %vm2741 = vweird.f32 %v2434
        %vm2742 = vweird.f32 %v2736
        %vm2743 = vmor %vm2741, %vm2742
        %v2744 = vsel %vm2743, %v2736, %v2740
        %v2745 = vand.u32 2147483647, %v2434
        %vm2746 = vcmp.eq.f32.partialorder %v2745, 8.507059e+37
        %v2747 = vand.u32 %v2434, 2147483648
        %v2748 = vor.u32 1.1754944e-38, %v2747
        %v2749 = vsel %vm2746, %v2748, %v2744
        %v2750 = vmul.f32 1.0, %v2749
        %v2751 = vrcp.pop %v2435
        %v2752 = vmul.f32 %v2435, %v2751
        %v2753 = vsub.f32 1.0, %v2752
        %v2754 = vmul.f32 %v2751, %v2753
        %v2755 = vadd.f32 %v2751, %v2754
        %vm2756 = vweird.f32 %v2435
        %vm2757 = vweird.f32 %v2751
        %vm2758 = vmor %vm2756, %vm2757
        %v2759 = vsel %vm2758, %v2751, %v2755
        %v2760 = vand.u32 2147483647, %v2435
        %vm2761 = vcmp.eq.f32.partialorder %v2760, 8.507059e+37
        %v2762 = vand.u32 %v2435, 2147483648
        %v2763 = vor.u32 1.1754944e-38, %v2762
        %v2764 = vsel %vm2761, %v2763, %v2759
        %v2765 = vmul.f32 1.0, %v2764
        %v2766 = vrcp.pop %v2436
        %v2767 = vmul.f32 %v2436, %v2766
        %v2768 = vsub.f32 1.0, %v2767
        %v2769 = vmul.f32 %v2766, %v2768
        %v2770 = vadd.f32 %v2766, %v2769
        %vm2771 = vweird.f32 %v2436
        %vm2772 = vweird.f32 %v2766
        %vm2773 = vmor %vm2771, %vm2772
        %v2774 = vsel %vm2773, %v2766, %v2770
        %v2775 = vand.u32 2147483647, %v2436
        %vm2776 = vcmp.eq.f32.partialorder %v2775, 8.507059e+37
        %v2777 = vand.u32 %v2436, 2147483648
        %v2778 = vor.u32 1.1754944e-38, %v2777
        %v2779 = vsel %vm2776, %v2778, %v2774
        %v2780 = vmul.f32 1.0, %v2779
        %v2781 = vrcp.pop %v2437
        %v2782 = vmul.f32 %v2437, %v2781
        %v2783 = vsub.f32 1.0, %v2782
        %v2784 = vmul.f32 %v2781, %v2783
        %v2785 = vadd.f32 %v2781, %v2784
        %vm2786 = vweird.f32 %v2437
        %vm2787 = vweird.f32 %v2781
        %vm2788 = vmor %vm2786, %vm2787
        %v2789 = vsel %vm2788, %v2781, %v2785
        %v2790 = vand.u32 2147483647, %v2437
        %vm2791 = vcmp.eq.f32.partialorder %v2790, 8.507059e+37
        %v2792 = vand.u32 %v2437, 2147483648
        %v2793 = vor.u32 1.1754944e-38, %v2792
        %v2794 = vsel %vm2791, %v2793, %v2789
        %v2795 = vmul.f32 1.0, %v2794
        %v2796 = vrcp.pop %v2438
        %v2797 = vmul.f32 %v2438, %v2796
        %v2798 = vsub.f32 1.0, %v2797
        %v2799 = vmul.f32 %v2796, %v2798
        %v2800 = vadd.f32 %v2796, %v2799
        %vm2801 = vweird.f32 %v2438
        %vm2802 = vweird.f32 %v2796
        %vm2803 = vmor %vm2801, %vm2802
        %v2804 = vsel %vm2803, %v2796, %v2800
        %v2805 = vand.u32 2147483647, %v2438
        %vm2806 = vcmp.eq.f32.partialorder %v2805, 8.507059e+37
        %v2807 = vand.u32 %v2438, 2147483648
        %v2808 = vor.u32 1.1754944e-38, %v2807
        %v2809 = vsel %vm2806, %v2808, %v2804
        %v2810 = vmul.f32 1.0, %v2809
        %v2811 = vrcp.pop %v2439
        %v2812 = vmul.f32 %v2439, %v2811
        %v2813 = vsub.f32 1.0, %v2812
        %v2814 = vmul.f32 %v2811, %v2813
        %v2815 = vadd.f32 %v2811, %v2814
        %vm2816 = vweird.f32 %v2439
        %vm2817 = vweird.f32 %v2811
        %vm2818 = vmor %vm2816, %vm2817
        %v2819 = vsel %vm2818, %v2811, %v2815
        %v2820 = vand.u32 2147483647, %v2439
        %vm2821 = vcmp.eq.f32.partialorder %v2820, 8.507059e+37
        %v2822 = vand.u32 %v2439, 2147483648
        %v2823 = vor.u32 1.1754944e-38, %v2822
        %v2824 = vsel %vm2821, %v2823, %v2819
        %v2825 = vmul.f32 1.0, %v2824
        %v2826 = vrcp.pop %v2440
        %v2827 = vmul.f32 %v2440, %v2826
        %v2828 = vsub.f32 1.0, %v2827
        %v2829 = vmul.f32 %v2826, %v2828
        %v2830 = vadd.f32 %v2826, %v2829
        %vm2831 = vweird.f32 %v2440
        %vm2832 = vweird.f32 %v2826
        %vm2833 = vmor %vm2831, %vm2832
        %v2834 = vsel %vm2833, %v2826, %v2830
        %v2835 = vand.u32 2147483647, %v2440
        %vm2836 = vcmp.eq.f32.partialorder %v2835, 8.507059e+37
        %v2837 = vand.u32 %v2440, 2147483648
        %v2838 = vor.u32 1.1754944e-38, %v2837
        %v2839 = vsel %vm2836, %v2838, %v2834
        %v2840 = vmul.f32 1.0, %v2839
        %v2841 = vrcp.pop %v2441
        %v2842 = vmul.f32 %v2441, %v2841
        %v2843 = vsub.f32 1.0, %v2842
        %v2844 = vmul.f32 %v2841, %v2843
        %v2845 = vadd.f32 %v2841, %v2844
        %vm2846 = vweird.f32 %v2441
        %vm2847 = vweird.f32 %v2841
        %vm2848 = vmor %vm2846, %vm2847
        %v2849 = vsel %vm2848, %v2841, %v2845
        %v2850 = vand.u32 2147483647, %v2441
        %vm2851 = vcmp.eq.f32.partialorder %v2850, 8.507059e+37
        %v2852 = vand.u32 %v2441, 2147483648
        %v2853 = vor.u32 1.1754944e-38, %v2852
        %v2854 = vsel %vm2851, %v2853, %v2849
        %v2855 = vmul.f32 1.0, %v2854
        %v2856 = vrcp.pop %v2442
        %v2857 = vmul.f32 %v2442, %v2856
        %v2858 = vsub.f32 1.0, %v2857
        %v2859 = vmul.f32 %v2856, %v2858
        %v2860 = vadd.f32 %v2856, %v2859
        %vm2861 = vweird.f32 %v2442
        %vm2862 = vweird.f32 %v2856
        %vm2863 = vmor %vm2861, %vm2862
        %v2864 = vsel %vm2863, %v2856, %v2860
        %v2865 = vand.u32 2147483647, %v2442
        %vm2866 = vcmp.eq.f32.partialorder %v2865, 8.507059e+37
        %v2867 = vand.u32 %v2442, 2147483648
        %v2868 = vor.u32 1.1754944e-38, %v2867
        %v2869 = vsel %vm2866, %v2868, %v2864
        %v2870 = vmul.f32 1.0, %v2869
        %v2871 = vrcp.pop %v2443
        %v2872 = vmul.f32 %v2443, %v2871
        %v2873 = vsub.f32 1.0, %v2872
        %v2874 = vmul.f32 %v2871, %v2873
        %v2875 = vadd.f32 %v2871, %v2874
        %vm2876 = vweird.f32 %v2443
        %vm2877 = vweird.f32 %v2871
        %vm2878 = vmor %vm2876, %vm2877
        %v2879 = vsel %vm2878, %v2871, %v2875
        %v2880 = vand.u32 2147483647, %v2443
        %vm2881 = vcmp.eq.f32.partialorder %v2880, 8.507059e+37
        %v2882 = vand.u32 %v2443, 2147483648
        %v2883 = vor.u32 1.1754944e-38, %v2882
        %v2884 = vsel %vm2881, %v2883, %v2879
        %v2885 = vmul.f32 1.0, %v2884
        %v2886 = vrcp.pop %v2444
        %v2887 = vmul.f32 %v2444, %v2886
        %v2888 = vsub.f32 1.0, %v2887
        %v2889 = vmul.f32 %v2886, %v2888
        %v2890 = vadd.f32 %v2886, %v2889
        %vm2891 = vweird.f32 %v2444
        %vm2892 = vweird.f32 %v2886
        %vm2893 = vmor %vm2891, %vm2892
        %v2894 = vsel %vm2893, %v2886, %v2890
        %v2895 = vand.u32 2147483647, %v2444
        %vm2896 = vcmp.eq.f32.partialorder %v2895, 8.507059e+37
        %v2897 = vand.u32 %v2444, 2147483648
        %v2898 = vor.u32 1.1754944e-38, %v2897
        %v2899 = vsel %vm2896, %v2898, %v2894
        %v2900 = vmul.f32 1.0, %v2899
        %v2901 = vrcp.pop %v2445
        %v2902 = vmul.f32 %v2445, %v2901
        %v2903 = vsub.f32 1.0, %v2902
        %v2904 = vmul.f32 %v2901, %v2903
        %v2905 = vadd.f32 %v2901, %v2904
        %vm2906 = vweird.f32 %v2445
        %vm2907 = vweird.f32 %v2901
        %vm2908 = vmor %vm2906, %vm2907
        %v2909 = vsel %vm2908, %v2901, %v2905
        %v2910 = vand.u32 2147483647, %v2445
        %vm2911 = vcmp.eq.f32.partialorder %v2910, 8.507059e+37
        %v2912 = vand.u32 %v2445, 2147483648
        %v2913 = vor.u32 1.1754944e-38, %v2912
        %v2914 = vsel %vm2911, %v2913, %v2909
        %v2915 = vmul.f32 1.0, %v2914
        %v2916 = vrcp.pop %v2446
        %v2917 = vmul.f32 %v2446, %v2916
        %v2918 = vsub.f32 1.0, %v2917
        %v2919 = vmul.f32 %v2916, %v2918
        %v2920 = vadd.f32 %v2916, %v2919
        %vm2921 = vweird.f32 %v2446
        %vm2922 = vweird.f32 %v2916
        %vm2923 = vmor %vm2921, %vm2922
        %v2924 = vsel %vm2923, %v2916, %v2920
        %v2925 = vand.u32 2147483647, %v2446
        %vm2926 = vcmp.eq.f32.partialorder %v2925, 8.507059e+37
        %v2927 = vand.u32 %v2446, 2147483648
        %v2928 = vor.u32 1.1754944e-38, %v2927
        %v2929 = vsel %vm2926, %v2928, %v2924
        %v2930 = vmul.f32 1.0, %v2929
        %v2931 = vrcp.pop %v2447
        %v2932 = vmul.f32 %v2447, %v2931
        %v2933 = vsub.f32 1.0, %v2932
        %v2934 = vmul.f32 %v2931, %v2933
        %v2935 = vadd.f32 %v2931, %v2934
        %vm2936 = vweird.f32 %v2447
        %vm2937 = vweird.f32 %v2931
        %vm2938 = vmor %vm2936, %vm2937
        %v2939 = vsel %vm2938, %v2931, %v2935
        %v2940 = vand.u32 2147483647, %v2447
        %vm2941 = vcmp.eq.f32.partialorder %v2940, 8.507059e+37
        %v2942 = vand.u32 %v2447, 2147483648
        %v2943 = vor.u32 1.1754944e-38, %v2942
        %v2944 = vsel %vm2941, %v2943, %v2939
        %v2945 = vmul.f32 1.0, %v2944
        %v2946 = vrcp.pop %v2448
        %v2947 = vmul.f32 %v2448, %v2946
        %v2948 = vsub.f32 1.0, %v2947
        %v2949 = vmul.f32 %v2946, %v2948
        %v2950 = vadd.f32 %v2946, %v2949
        %vm2951 = vweird.f32 %v2448
        %vm2952 = vweird.f32 %v2946
        %vm2953 = vmor %vm2951, %vm2952
        %v2954 = vsel %vm2953, %v2946, %v2950
        %v2955 = vand.u32 2147483647, %v2448
        %vm2956 = vcmp.eq.f32.partialorder %v2955, 8.507059e+37
        %v2957 = vand.u32 %v2448, 2147483648
        %v2958 = vor.u32 1.1754944e-38, %v2957
        %v2959 = vsel %vm2956, %v2958, %v2954
        %v2960 = vmul.f32 1.0, %v2959
        %v2961 = vrcp.pop %v2449
        %v2962 = vmul.f32 %v2449, %v2961
        %v2963 = vsub.f32 1.0, %v2962
        %v2964 = vmul.f32 %v2961, %v2963
        %v2965 = vadd.f32 %v2961, %v2964
        %vm2966 = vweird.f32 %v2449
        %vm2967 = vweird.f32 %v2961
        %vm2968 = vmor %vm2966, %vm2967
        %v2969 = vsel %vm2968, %v2961, %v2965
        %v2970 = vand.u32 2147483647, %v2449
        %vm2971 = vcmp.eq.f32.partialorder %v2970, 8.507059e+37
        %v2972 = vand.u32 %v2449, 2147483648
        %v2973 = vor.u32 1.1754944e-38, %v2972
        %v2974 = vsel %vm2971, %v2973, %v2969
        %v2975 = vmul.f32 1.0, %v2974
        %v2976 = vrcp.pop %v2450
        %v2977 = vmul.f32 %v2450, %v2976
        %v2978 = vsub.f32 1.0, %v2977
        %v2979 = vmul.f32 %v2976, %v2978
        %v2980 = vadd.f32 %v2976, %v2979
        %vm2981 = vweird.f32 %v2450
        %vm2982 = vweird.f32 %v2976
        %vm2983 = vmor %vm2981, %vm2982
        %v2984 = vsel %vm2983, %v2976, %v2980
        %v2985 = vand.u32 2147483647, %v2450
        %vm2986 = vcmp.eq.f32.partialorder %v2985, 8.507059e+37
        %v2987 = vand.u32 %v2450, 2147483648
        %v2988 = vor.u32 1.1754944e-38, %v2987
        %v2989 = vsel %vm2986, %v2988, %v2984
        %v2990 = vmul.f32 1.0, %v2989
        %v2991 = vrcp.pop %v2451
        %v2992 = vmul.f32 %v2451, %v2991
        %v2993 = vsub.f32 1.0, %v2992
        %v2994 = vmul.f32 %v2991, %v2993
        %v2995 = vadd.f32 %v2991, %v2994
        %vm2996 = vweird.f32 %v2451
        %vm2997 = vweird.f32 %v2991
        %vm2998 = vmor %vm2996, %vm2997
        %v2999 = vsel %vm2998, %v2991, %v2995
        %v3000 = vand.u32 2147483647, %v2451
        %vm3001 = vcmp.eq.f32.partialorder %v3000, 8.507059e+37
        %v3002 = vand.u32 %v2451, 2147483648
        %v3003 = vor.u32 1.1754944e-38, %v3002
        %v3004 = vsel %vm3001, %v3003, %v2999
        %v3005 = vmul.f32 1.0, %v3004
        %v3006 = vrcp.pop %v2452
        %v3007 = vmul.f32 %v2452, %v3006
        %v3008 = vsub.f32 1.0, %v3007
        %v3009 = vmul.f32 %v3006, %v3008
        %v3010 = vadd.f32 %v3006, %v3009
        %vm3011 = vweird.f32 %v2452
        %vm3012 = vweird.f32 %v3006
        %vm3013 = vmor %vm3011, %vm3012
        %v3014 = vsel %vm3013, %v3006, %v3010
        %v3015 = vand.u32 2147483647, %v2452
        %vm3016 = vcmp.eq.f32.partialorder %v3015, 8.507059e+37
        %v3017 = vand.u32 %v2452, 2147483648
        %v3018 = vor.u32 1.1754944e-38, %v3017
        %v3019 = vsel %vm3016, %v3018, %v3014
        %v3020 = vmul.f32 1.0, %v3019
        %v3021 = vrcp.pop %v2453
        %v3022 = vmul.f32 %v2453, %v3021
        %v3023 = vsub.f32 1.0, %v3022
        %v3024 = vmul.f32 %v3021, %v3023
        %v3025 = vadd.f32 %v3021, %v3024
        %vm3026 = vweird.f32 %v2453
        %vm3027 = vweird.f32 %v3021
        %vm3028 = vmor %vm3026, %vm3027
        %v3029 = vsel %vm3028, %v3021, %v3025
        %v3030 = vand.u32 2147483647, %v2453
        %vm3031 = vcmp.eq.f32.partialorder %v3030, 8.507059e+37
        %v3032 = vand.u32 %v2453, 2147483648
        %v3033 = vor.u32 1.1754944e-38, %v3032
        %v3034 = vsel %vm3031, %v3033, %v3029
        %v3035 = vmul.f32 1.0, %v3034
        %v3036 = vrcp.pop %v2454
        %v3037 = vmul.f32 %v2454, %v3036
        %v3038 = vsub.f32 1.0, %v3037
        %v3039 = vmul.f32 %v3036, %v3038
        %v3040 = vadd.f32 %v3036, %v3039
        %vm3041 = vweird.f32 %v2454
        %vm3042 = vweird.f32 %v3036
        %vm3043 = vmor %vm3041, %vm3042
        %v3044 = vsel %vm3043, %v3036, %v3040
        %v3045 = vand.u32 2147483647, %v2454
        %vm3046 = vcmp.eq.f32.partialorder %v3045, 8.507059e+37
        %v3047 = vand.u32 %v2454, 2147483648
        %v3048 = vor.u32 1.1754944e-38, %v3047
        %v3049 = vsel %vm3046, %v3048, %v3044
        %v3050 = vmul.f32 1.0, %v3049
        %v3051 = vrcp.pop %v2455
        %v3052 = vmul.f32 %v2455, %v3051
        %v3053 = vsub.f32 1.0, %v3052
        %v3054 = vmul.f32 %v3051, %v3053
        %v3055 = vadd.f32 %v3051, %v3054
        %vm3056 = vweird.f32 %v2455
        %vm3057 = vweird.f32 %v3051
        %vm3058 = vmor %vm3056, %vm3057
        %v3059 = vsel %vm3058, %v3051, %v3055
        %v3060 = vand.u32 2147483647, %v2455
        %vm3061 = vcmp.eq.f32.partialorder %v3060, 8.507059e+37
        %v3062 = vand.u32 %v2455, 2147483648
        %v3063 = vor.u32 1.1754944e-38, %v3062
        %v3064 = vsel %vm3061, %v3063, %v3059
        %v3065 = vmul.f32 1.0, %v3064
        %v3066 = vrcp.pop %v2456
        %v3067 = vmul.f32 %v2456, %v3066
        %v3068 = vsub.f32 1.0, %v3067
        %v3069 = vmul.f32 %v3066, %v3068
        %v3070 = vadd.f32 %v3066, %v3069
        %vm3071 = vweird.f32 %v2456
        %vm3072 = vweird.f32 %v3066
        %vm3073 = vmor %vm3071, %vm3072
        %v3074 = vsel %vm3073, %v3066, %v3070
        %v3075 = vand.u32 2147483647, %v2456
        %vm3076 = vcmp.eq.f32.partialorder %v3075, 8.507059e+37
        %v3077 = vand.u32 %v2456, 2147483648
        %v3078 = vor.u32 1.1754944e-38, %v3077
        %v3079 = vsel %vm3076, %v3078, %v3074
        %v3080 = vmul.f32 1.0, %v3079
        %v3081 = vrcp.pop %v2457
        %v3082 = vmul.f32 %v2457, %v3081
        %v3083 = vsub.f32 1.0, %v3082
        %v3084 = vmul.f32 %v3081, %v3083
        %v3085 = vadd.f32 %v3081, %v3084
        %vm3086 = vweird.f32 %v2457
        %vm3087 = vweird.f32 %v3081
        %vm3088 = vmor %vm3086, %vm3087
        %v3089 = vsel %vm3088, %v3081, %v3085
        %v3090 = vand.u32 2147483647, %v2457
        %vm3091 = vcmp.eq.f32.partialorder %v3090, 8.507059e+37
        %v3092 = vand.u32 %v2457, 2147483648
        %v3093 = vor.u32 1.1754944e-38, %v3092
        %v3094 = vsel %vm3091, %v3093, %v3089
        %v3095 = vmul.f32 1.0, %v3094
        %v3096 = vrcp.pop %v2458
        %v3097 = vmul.f32 %v2458, %v3096
        %v3098 = vsub.f32 1.0, %v3097
        %v3099 = vmul.f32 %v3096, %v3098
        %v3100 = vadd.f32 %v3096, %v3099
        %vm3101 = vweird.f32 %v2458
        %vm3102 = vweird.f32 %v3096
        %vm3103 = vmor %vm3101, %vm3102
        %v3104 = vsel %vm3103, %v3096, %v3100
        %v3105 = vand.u32 2147483647, %v2458
        %vm3106 = vcmp.eq.f32.partialorder %v3105, 8.507059e+37
        %v3107 = vand.u32 %v2458, 2147483648
        %v3108 = vor.u32 1.1754944e-38, %v3107
        %v3109 = vsel %vm3106, %v3108, %v3104
        %v3110 = vmul.f32 1.0, %v3109
        %v3111 = vrcp.pop %v2459
        %v3112 = vmul.f32 %v2459, %v3111
        %v3113 = vsub.f32 1.0, %v3112
        %v3114 = vmul.f32 %v3111, %v3113
        %v3115 = vadd.f32 %v3111, %v3114
        %vm3116 = vweird.f32 %v2459
        %vm3117 = vweird.f32 %v3111
        %vm3118 = vmor %vm3116, %vm3117
        %v3119 = vsel %vm3118, %v3111, %v3115
        %v3120 = vand.u32 2147483647, %v2459
        %vm3121 = vcmp.eq.f32.partialorder %v3120, 8.507059e+37
        %v3122 = vand.u32 %v2459, 2147483648
        %v3123 = vor.u32 1.1754944e-38, %v3122
        %v3124 = vsel %vm3121, %v3123, %v3119
        %v3125 = vmul.f32 1.0, %v3124
        %v3126 = vrcp.pop %v2460
        %v3127 = vmul.f32 %v2460, %v3126
        %v3128 = vsub.f32 1.0, %v3127
        %v3129 = vmul.f32 %v3126, %v3128
        %v3130 = vadd.f32 %v3126, %v3129
        %vm3131 = vweird.f32 %v2460
        %vm3132 = vweird.f32 %v3126
        %vm3133 = vmor %vm3131, %vm3132
        %v3134 = vsel %vm3133, %v3126, %v3130
        %v3135 = vand.u32 2147483647, %v2460
        %vm3136 = vcmp.eq.f32.partialorder %v3135, 8.507059e+37
        %v3137 = vand.u32 %v2460, 2147483648
        %v3138 = vor.u32 1.1754944e-38, %v3137
        %v3139 = vsel %vm3136, %v3138, %v3134
        %v3140 = vmul.f32 1.0, %v3139
        %v3141 = vrcp.pop %v2461
        %v3142 = vmul.f32 %v2461, %v3141
        %v3143 = vsub.f32 1.0, %v3142
        %v3144 = vmul.f32 %v3141, %v3143
        %v3145 = vadd.f32 %v3141, %v3144
        %vm3146 = vweird.f32 %v2461
        %vm3147 = vweird.f32 %v3141
        %vm3148 = vmor %vm3146, %vm3147
        %v3149 = vsel %vm3148, %v3141, %v3145
        %v3150 = vand.u32 2147483647, %v2461
        %vm3151 = vcmp.eq.f32.partialorder %v3150, 8.507059e+37
        %v3152 = vand.u32 %v2461, 2147483648
        %v3153 = vor.u32 1.1754944e-38, %v3152
        %v3154 = vsel %vm3151, %v3153, %v3149
        %v3155 = vmul.f32 1.0, %v3154
        %v3156 = vrcp.pop %v2462
        %v3157 = vmul.f32 %v2462, %v3156
        %v3158 = vsub.f32 1.0, %v3157
        %v3159 = vmul.f32 %v3156, %v3158
        %v3160 = vadd.f32 %v3156, %v3159
        %vm3161 = vweird.f32 %v2462
        %vm3162 = vweird.f32 %v3156
        %vm3163 = vmor %vm3161, %vm3162
        %v3164 = vsel %vm3163, %v3156, %v3160
        %v3165 = vand.u32 2147483647, %v2462
        %vm3166 = vcmp.eq.f32.partialorder %v3165, 8.507059e+37
        %v3167 = vand.u32 %v2462, 2147483648
        %v3168 = vor.u32 1.1754944e-38, %v3167
        %v3169 = vsel %vm3166, %v3168, %v3164
        %v3170 = vmul.f32 1.0, %v3169
        %v3171 = vrcp.pop %v2463
        %v3172 = vmul.f32 %v2463, %v3171
        %v3173 = vsub.f32 1.0, %v3172
        %v3174 = vmul.f32 %v3171, %v3173
        %v3175 = vadd.f32 %v3171, %v3174
        %vm3176 = vweird.f32 %v2463
        %vm3177 = vweird.f32 %v3171
        %vm3178 = vmor %vm3176, %vm3177
        %v3179 = vsel %vm3178, %v3171, %v3175
        %v3180 = vand.u32 2147483647, %v2463
        %vm3181 = vcmp.eq.f32.partialorder %v3180, 8.507059e+37
        %v3182 = vand.u32 %v2463, 2147483648
        %v3183 = vor.u32 1.1754944e-38, %v3182
        %v3184 = vsel %vm3181, %v3183, %v3179
        %v3185 = vmul.f32 1.0, %v3184
        %v3186 = vrcp.pop %v2464
        %v3187 = vmul.f32 %v2464, %v3186
        %v3188 = vsub.f32 1.0, %v3187
        %v3189 = vmul.f32 %v3186, %v3188
        %v3190 = vadd.f32 %v3186, %v3189
        %vm3191 = vweird.f32 %v2464
        %vm3192 = vweird.f32 %v3186
        %vm3193 = vmor %vm3191, %vm3192
        %v3194 = vsel %vm3193, %v3186, %v3190
        %v3195 = vand.u32 2147483647, %v2464
        %vm3196 = vcmp.eq.f32.partialorder %v3195, 8.507059e+37
        %v3197 = vand.u32 %v2464, 2147483648
        %v3198 = vor.u32 1.1754944e-38, %v3197
        %v3199 = vsel %vm3196, %v3198, %v3194
        %v3200 = vmul.f32 1.0, %v3199
        %v3201 = vrcp.pop %v2465
        %v3202 = vmul.f32 %v2465, %v3201
        %v3203 = vsub.f32 1.0, %v3202
        %v3204 = vmul.f32 %v3201, %v3203
        %v3205 = vadd.f32 %v3201, %v3204
        %vm3206 = vweird.f32 %v2465
        %vm3207 = vweird.f32 %v3201
        %vm3208 = vmor %vm3206, %vm3207
        %v3209 = vsel %vm3208, %v3201, %v3205
        %v3210 = vand.u32 2147483647, %v2465
        %vm3211 = vcmp.eq.f32.partialorder %v3210, 8.507059e+37
        %v3212 = vand.u32 %v2465, 2147483648
        %v3213 = vor.u32 1.1754944e-38, %v3212
        %v3214 = vsel %vm3211, %v3213, %v3209
        %v3215 = vmul.f32 1.0, %v3214
        %v3216 = vrcp.pop %v2466
        %v3217 = vmul.f32 %v2466, %v3216
        %v3218 = vsub.f32 1.0, %v3217
        %v3219 = vmul.f32 %v3216, %v3218
        %v3220 = vadd.f32 %v3216, %v3219
        %vm3221 = vweird.f32 %v2466
        %vm3222 = vweird.f32 %v3216
        %vm3223 = vmor %vm3221, %vm3222
        %v3224 = vsel %vm3223, %v3216, %v3220
        %v3225 = vand.u32 2147483647, %v2466
        %vm3226 = vcmp.eq.f32.partialorder %v3225, 8.507059e+37
        %v3227 = vand.u32 %v2466, 2147483648
        %v3228 = vor.u32 1.1754944e-38, %v3227
        %v3229 = vsel %vm3226, %v3228, %v3224
        %v3230 = vmul.f32 1.0, %v3229
        %v3231 = vrcp.pop %v2467
        %v3232 = vmul.f32 %v2467, %v3231
        %v3233 = vsub.f32 1.0, %v3232
        %v3234 = vmul.f32 %v3231, %v3233
        %v3235 = vadd.f32 %v3231, %v3234
        %vm3236 = vweird.f32 %v2467
        %vm3237 = vweird.f32 %v3231
        %vm3238 = vmor %vm3236, %vm3237
        %v3239 = vsel %vm3238, %v3231, %v3235
        %v3240 = vand.u32 2147483647, %v2467
        %vm3241 = vcmp.eq.f32.partialorder %v3240, 8.507059e+37
        %v3242 = vand.u32 %v2467, 2147483648
        %v3243 = vor.u32 1.1754944e-38, %v3242
        %v3244 = vsel %vm3241, %v3243, %v3239
        %v3245 = vmul.f32 1.0, %v3244
        %v3246 = vrcp.pop %v2468
        %v3247 = vmul.f32 %v2468, %v3246
        %v3248 = vsub.f32 1.0, %v3247
        %v3249 = vmul.f32 %v3246, %v3248
        %v3250 = vadd.f32 %v3246, %v3249
        %vm3251 = vweird.f32 %v2468
        %vm3252 = vweird.f32 %v3246
        %vm3253 = vmor %vm3251, %vm3252
        %v3254 = vsel %vm3253, %v3246, %v3250
        %v3255 = vand.u32 2147483647, %v2468
        %vm3256 = vcmp.eq.f32.partialorder %v3255, 8.507059e+37
        %v3257 = vand.u32 %v2468, 2147483648
        %v3258 = vor.u32 1.1754944e-38, %v3257
        %v3259 = vsel %vm3256, %v3258, %v3254
        %v3260 = vmul.f32 1.0, %v3259
        %v3261 = vrcp.pop %v2469
        %v3262 = vmul.f32 %v2469, %v3261
        %v3263 = vsub.f32 1.0, %v3262
        %v3264 = vmul.f32 %v3261, %v3263
        %v3265 = vadd.f32 %v3261, %v3264
        %vm3266 = vweird.f32 %v2469
        %vm3267 = vweird.f32 %v3261
        %vm3268 = vmor %vm3266, %vm3267
        %v3269 = vsel %vm3268, %v3261, %v3265
        %v3270 = vand.u32 2147483647, %v2469
        %vm3271 = vcmp.eq.f32.partialorder %v3270, 8.507059e+37
        %v3272 = vand.u32 %v2469, 2147483648
        %v3273 = vor.u32 1.1754944e-38, %v3272
        %v3274 = vsel %vm3271, %v3273, %v3269
        %v3275 = vmul.f32 1.0, %v3274
        %v3276 = vrcp.pop %v2470
        %v3277 = vmul.f32 %v2470, %v3276
        %v3278 = vsub.f32 1.0, %v3277
        %v3279 = vmul.f32 %v3276, %v3278
        %v3280 = vadd.f32 %v3276, %v3279
        %vm3281 = vweird.f32 %v2470
        %vm3282 = vweird.f32 %v3276
        %vm3283 = vmor %vm3281, %vm3282
        %v3284 = vsel %vm3283, %v3276, %v3280
        %v3285 = vand.u32 2147483647, %v2470
        %vm3286 = vcmp.eq.f32.partialorder %v3285, 8.507059e+37
        %v3287 = vand.u32 %v2470, 2147483648
        %v3288 = vor.u32 1.1754944e-38, %v3287
        %v3289 = vsel %vm3286, %v3288, %v3284
        %v3290 = vmul.f32 1.0, %v3289
        %v3291 = vrcp.pop %v2471
        %v3292 = vmul.f32 %v2471, %v3291
        %v3293 = vsub.f32 1.0, %v3292
        %v3294 = vmul.f32 %v3291, %v3293
        %v3295 = vadd.f32 %v3291, %v3294
        %vm3296 = vweird.f32 %v2471
        %vm3297 = vweird.f32 %v3291
        %vm3298 = vmor %vm3296, %vm3297
        %v3299 = vsel %vm3298, %v3291, %v3295
        %v3300 = vand.u32 2147483647, %v2471
        %vm3301 = vcmp.eq.f32.partialorder %v3300, 8.507059e+37
        %v3302 = vand.u32 %v2471, 2147483648
        %v3303 = vor.u32 1.1754944e-38, %v3302
        %v3304 = vsel %vm3301, %v3303, %v3299
        %v3305 = vmul.f32 1.0, %v3304
        %v3306 = vrcp.pop %v2472
        %v3307 = vmul.f32 %v2472, %v3306
        %v3308 = vsub.f32 1.0, %v3307
        %v3309 = vmul.f32 %v3306, %v3308
        %v3310 = vadd.f32 %v3306, %v3309
        %vm3311 = vweird.f32 %v2472
        %vm3312 = vweird.f32 %v3306
        %vm3313 = vmor %vm3311, %vm3312
        %v3314 = vsel %vm3313, %v3306, %v3310
        %v3315 = vand.u32 2147483647, %v2472
        %vm3316 = vcmp.eq.f32.partialorder %v3315, 8.507059e+37
        %v3317 = vand.u32 %v2472, 2147483648
        %v3318 = vor.u32 1.1754944e-38, %v3317
        %v3319 = vsel %vm3316, %v3318, %v3314
        %v3320 = vmul.f32 1.0, %v3319
        %v3321 = vrcp.pop %v2473
        %v3322 = vmul.f32 %v2473, %v3321
        %v3323 = vsub.f32 1.0, %v3322
        %v3324 = vmul.f32 %v3321, %v3323
        %v3325 = vadd.f32 %v3321, %v3324
        %vm3326 = vweird.f32 %v2473
        %vm3327 = vweird.f32 %v3321
        %vm3328 = vmor %vm3326, %vm3327
        %v3329 = vsel %vm3328, %v3321, %v3325
        %v3330 = vand.u32 2147483647, %v2473
        %vm3331 = vcmp.eq.f32.partialorder %v3330, 8.507059e+37
        %v3332 = vand.u32 %v2473, 2147483648
        %v3333 = vor.u32 1.1754944e-38, %v3332
        %v3334 = vsel %vm3331, %v3333, %v3329
        %v3335 = vmul.f32 1.0, %v3334
        %v3336 = vrcp.pop %v2474
        %v3337 = vmul.f32 %v2474, %v3336
        %v3338 = vsub.f32 1.0, %v3337
        %v3339 = vmul.f32 %v3336, %v3338
        %v3340 = vadd.f32 %v3336, %v3339
        %vm3341 = vweird.f32 %v2474
        %vm3342 = vweird.f32 %v3336
        %vm3343 = vmor %vm3341, %vm3342
        %v3344 = vsel %vm3343, %v3336, %v3340
        %v3345 = vand.u32 2147483647, %v2474
        %vm3346 = vcmp.eq.f32.partialorder %v3345, 8.507059e+37
        %v3347 = vand.u32 %v2474, 2147483648
        %v3348 = vor.u32 1.1754944e-38, %v3347
        %v3349 = vsel %vm3346, %v3348, %v3344
        %v3350 = vmul.f32 1.0, %v3349
        %v3351 = vrcp.pop %v2475
        %v3352 = vmul.f32 %v2475, %v3351
        %v3353 = vsub.f32 1.0, %v3352
        %v3354 = vmul.f32 %v3351, %v3353
        %v3355 = vadd.f32 %v3351, %v3354
        %vm3356 = vweird.f32 %v2475
        %vm3357 = vweird.f32 %v3351
        %vm3358 = vmor %vm3356, %vm3357
        %v3359 = vsel %vm3358, %v3351, %v3355
        %v3360 = vand.u32 2147483647, %v2475
        %vm3361 = vcmp.eq.f32.partialorder %v3360, 8.507059e+37
        %v3362 = vand.u32 %v2475, 2147483648
        %v3363 = vor.u32 1.1754944e-38, %v3362
        %v3364 = vsel %vm3361, %v3363, %v3359
        %v3365 = vmul.f32 1.0, %v3364
        %v3366 = vrcp.pop %v2476
        %v3367 = vmul.f32 %v2476, %v3366
        %v3368 = vsub.f32 1.0, %v3367
        %v3369 = vmul.f32 %v3366, %v3368
        %v3370 = vadd.f32 %v3366, %v3369
        %vm3371 = vweird.f32 %v2476
        %vm3372 = vweird.f32 %v3366
        %vm3373 = vmor %vm3371, %vm3372
        %v3374 = vsel %vm3373, %v3366, %v3370
        %v3375 = vand.u32 2147483647, %v2476
        %vm3376 = vcmp.eq.f32.partialorder %v3375, 8.507059e+37
        %v3377 = vand.u32 %v2476, 2147483648
        %v3378 = vor.u32 1.1754944e-38, %v3377
        %v3379 = vsel %vm3376, %v3378, %v3374
        %v3380 = vmul.f32 1.0, %v3379
        %v3381 = vrcp.pop %v2477
        %v3382 = vmul.f32 %v2477, %v3381
        %v3383 = vsub.f32 1.0, %v3382
        %v3384 = vmul.f32 %v3381, %v3383
        %v3385 = vadd.f32 %v3381, %v3384
        %vm3386 = vweird.f32 %v2477
        %vm3387 = vweird.f32 %v3381
        %vm3388 = vmor %vm3386, %vm3387
        %v3389 = vsel %vm3388, %v3381, %v3385
        %v3390 = vand.u32 2147483647, %v2477
        %vm3391 = vcmp.eq.f32.partialorder %v3390, 8.507059e+37
        %v3392 = vand.u32 %v2477, 2147483648
        %v3393 = vor.u32 1.1754944e-38, %v3392
        %v3394 = vsel %vm3391, %v3393, %v3389
        %v3395 = vmul.f32 1.0, %v3394
        %v3396 = vrcp.pop %v2478
        %v3397 = vmul.f32 %v2478, %v3396
        %v3398 = vsub.f32 1.0, %v3397
        %v3399 = vmul.f32 %v3396, %v3398
        %v3400 = vadd.f32 %v3396, %v3399
        %vm3401 = vweird.f32 %v2478
        %vm3402 = vweird.f32 %v3396
        %vm3403 = vmor %vm3401, %vm3402
        %v3404 = vsel %vm3403, %v3396, %v3400
        %v3405 = vand.u32 2147483647, %v2478
        %vm3406 = vcmp.eq.f32.partialorder %v3405, 8.507059e+37
        %v3407 = vand.u32 %v2478, 2147483648
        %v3408 = vor.u32 1.1754944e-38, %v3407
        %v3409 = vsel %vm3406, %v3408, %v3404
        %v3410 = vmul.f32 1.0, %v3409
        %v3411 = vrcp.pop %v2479
        %v3412 = vmul.f32 %v2479, %v3411
        %v3413 = vsub.f32 1.0, %v3412
        %v3414 = vmul.f32 %v3411, %v3413
        %v3415 = vadd.f32 %v3411, %v3414
        %vm3416 = vweird.f32 %v2479
        %vm3417 = vweird.f32 %v3411
        %vm3418 = vmor %vm3416, %vm3417
        %v3419 = vsel %vm3418, %v3411, %v3415
        %v3420 = vand.u32 2147483647, %v2479
        %vm3421 = vcmp.eq.f32.partialorder %v3420, 8.507059e+37
        %v3422 = vand.u32 %v2479, 2147483648
        %v3423 = vor.u32 1.1754944e-38, %v3422
        %v3424 = vsel %vm3421, %v3423, %v3419
        %v3425 = vmul.f32 1.0, %v3424
        %v3426 = vrcp.pop %v2480
        %v3427 = vmul.f32 %v2480, %v3426
        %v3428 = vsub.f32 1.0, %v3427
        %v3429 = vmul.f32 %v3426, %v3428
        %v3430 = vadd.f32 %v3426, %v3429
        %vm3431 = vweird.f32 %v2480
        %vm3432 = vweird.f32 %v3426
        %vm3433 = vmor %vm3431, %vm3432
        %v3434 = vsel %vm3433, %v3426, %v3430
        %v3435 = vand.u32 2147483647, %v2480
        %vm3436 = vcmp.eq.f32.partialorder %v3435, 8.507059e+37
        %v3437 = vand.u32 %v2480, 2147483648
        %v3438 = vor.u32 1.1754944e-38, %v3437
        %v3439 = vsel %vm3436, %v3438, %v3434
        %v3440 = vmul.f32 1.0, %v3439
        %vm3441 = vcmask 7168
        %3442 = vst.msk [vmem:[%s364] sm:$0xff] %vm3441, %v2495
        %3443 = vst.msk [vmem:[%s364 + $0x8] sm:$0xff] %vm3441, %v2510
        %3444 = vst.msk [vmem:[%s364 + $0x10] sm:$0xff] %vm3441, %v2525
        %3445 = vst.msk [vmem:[%s364 + $0x18] sm:$0xff] %vm3441, %v2540
        %3446 = vst.msk [vmem:[%s364 + $0x20] sm:$0xff] %vm3441, %v2555
        %3447 = vst.msk [vmem:[%s364 + $0x28] sm:$0xff] %vm3441, %v2570
        %3448 = vst.msk [vmem:[%s364 + $0x30] sm:$0xff] %vm3441, %v2585
        %3449 = vst.msk [vmem:[%s364 + $0x38] sm:$0xff] %vm3441, %v2600
        %3450 = vst.msk [vmem:[%s364 + $0x40] sm:$0xff] %vm3441, %v2615
        %3451 = vst.msk [vmem:[%s364 + $0x48] sm:$0xff] %vm3441, %v2630
        %3452 = vst.msk [vmem:[%s364 + $0x50] sm:$0xff] %vm3441, %v2645
        %3453 = vst.msk [vmem:[%s364 + $0x58] sm:$0xff] %vm3441, %v2660
        %3454 = vst.msk [vmem:[%s364 + $0x60] sm:$0xff] %vm3441, %v2675
        %3455 = vst.msk [vmem:[%s364 + $0x68] sm:$0xff] %vm3441, %v2690
        %3456 = vst.msk [vmem:[%s364 + $0x70] sm:$0xff] %vm3441, %v2705
        %3457 = vst.msk [vmem:[%s364 + $0x78] sm:$0xff] %vm3441, %v2720
        %3458 = vst.msk [vmem:[%s364 + $0x80] sm:$0xff] %vm3441, %v2735
        %3459 = vst.msk [vmem:[%s364 + $0x88] sm:$0xff] %vm3441, %v2750
        %3460 = vst.msk [vmem:[%s364 + $0x90] sm:$0xff] %vm3441, %v2765
        %3461 = vst.msk [vmem:[%s364 + $0x98] sm:$0xff] %vm3441, %v2780
        %3462 = vst.msk [vmem:[%s364 + $0xa0] sm:$0xff] %vm3441, %v2795
        %3463 = vst.msk [vmem:[%s364 + $0xa8] sm:$0xff] %vm3441, %v2810
        %3464 = vst.msk [vmem:[%s364 + $0xb0] sm:$0xff] %vm3441, %v2825
        %3465 = vst.msk [vmem:[%s364 + $0xb8] sm:$0xff] %vm3441, %v2840
        %3466 = vst.msk [vmem:[%s364 + $0xc0] sm:$0xff] %vm3441, %v2855
        %3467 = vst.msk [vmem:[%s364 + $0xc8] sm:$0xff] %vm3441, %v2870
        %3468 = vst.msk [vmem:[%s364 + $0xd0] sm:$0xff] %vm3441, %v2885
        %3469 = vst.msk [vmem:[%s364 + $0xd8] sm:$0xff] %vm3441, %v2900
        %3470 = vst.msk [vmem:[%s364 + $0xe0] sm:$0xff] %vm3441, %v2915
        %3471 = vst.msk [vmem:[%s364 + $0xe8] sm:$0xff] %vm3441, %v2930
        %3472 = vst.msk [vmem:[%s364 + $0xf0] sm:$0xff] %vm3441, %v2945
        %3473 = vst.msk [vmem:[%s364 + $0xf8] sm:$0xff] %vm3441, %v2960
        %3474 = vst.msk [vmem:[%s364 + $0x100] sm:$0xff] %vm3441, %v2975
        %3475 = vst.msk [vmem:[%s364 + $0x108] sm:$0xff] %vm3441, %v2990
        %3476 = vst.msk [vmem:[%s364 + $0x110] sm:$0xff] %vm3441, %v3005
        %3477 = vst.msk [vmem:[%s364 + $0x118] sm:$0xff] %vm3441, %v3020
        %3478 = vst.msk [vmem:[%s364 + $0x120] sm:$0xff] %vm3441, %v3035
        %3479 = vst.msk [vmem:[%s364 + $0x128] sm:$0xff] %vm3441, %v3050
        %3480 = vst.msk [vmem:[%s364 + $0x130] sm:$0xff] %vm3441, %v3065
        %3481 = vst.msk [vmem:[%s364 + $0x138] sm:$0xff] %vm3441, %v3080
        %3482 = vst.msk [vmem:[%s364 + $0x140] sm:$0xff] %vm3441, %v3095
        %3483 = vst.msk [vmem:[%s364 + $0x148] sm:$0xff] %vm3441, %v3110
        %3484 = vst.msk [vmem:[%s364 + $0x150] sm:$0xff] %vm3441, %v3125
        %3485 = vst.msk [vmem:[%s364 + $0x158] sm:$0xff] %vm3441, %v3140
        %3486 = vst.msk [vmem:[%s364 + $0x160] sm:$0xff] %vm3441, %v3155
        %3487 = vst.msk [vmem:[%s364 + $0x168] sm:$0xff] %vm3441, %v3170
        %3488 = vst.msk [vmem:[%s364 + $0x170] sm:$0xff] %vm3441, %v3185
        %3489 = vst.msk [vmem:[%s364 + $0x178] sm:$0xff] %vm3441, %v3200
        %3490 = vst.msk [vmem:[%s364 + $0x180] sm:$0xff] %vm3441, %v3215
        %3491 = vst.msk [vmem:[%s364 + $0x188] sm:$0xff] %vm3441, %v3230
        %3492 = vst.msk [vmem:[%s364 + $0x190] sm:$0xff] %vm3441, %v3245
        %3493 = vst.msk [vmem:[%s364 + $0x198] sm:$0xff] %vm3441, %v3260
        %3494 = vst.msk [vmem:[%s364 + $0x1a0] sm:$0xff] %vm3441, %v3275
        %3495 = vst.msk [vmem:[%s364 + $0x1a8] sm:$0xff] %vm3441, %v3290
        %3496 = vst.msk [vmem:[%s364 + $0x1b0] sm:$0xff] %vm3441, %v3305
        %3497 = vst.msk [vmem:[%s364 + $0x1b8] sm:$0xff] %vm3441, %v3320
        %3498 = vst.msk [vmem:[%s364 + $0x1c0] sm:$0xff] %vm3441, %v3335
        %3499 = vst.msk [vmem:[%s364 + $0x1c8] sm:$0xff] %vm3441, %v3350
        %3500 = vst.msk [vmem:[%s364 + $0x1d0] sm:$0xff] %vm3441, %v3365
        %3501 = vst.msk [vmem:[%s364 + $0x1d8] sm:$0xff] %vm3441, %v3380
        %3502 = vst.msk [vmem:[%s364 + $0x1e0] sm:$0xff] %vm3441, %v3395
        %3503 = vst.msk [vmem:[%s364 + $0x1e8] sm:$0xff] %vm3441, %v3410
        %3504 = vst.msk [vmem:[%s364 + $0x1f0] sm:$0xff] %vm3441, %v3425
        %3505 = vst.msk [vmem:[%s364 + $0x1f8] sm:$0xff] %vm3441, %v3440
        %s3506 = sand.u32 %s229, 1
        %s3507 = sand.u32 %s229, 1
        %s3508 = smul.addr %s3507, 512
        %s3509 = scalar_lea.vmem [#allocation3], %s3508
        // Predicated region
        $region57: #{tpu_custom_call.1} parent=55 // pred_check
          %p3510 = pneg %p239
        $region58: #{tpu_custom_call.1} parent=55 // pred_check_branch
          %3512 = sbr.rel (%p3510) target = $region60
        $region59: #{tpu_custom_call.1} parent=55 // pred_region
          %s3513 = smul.u32 64, %s22
          %s3514 = ssub.s32 75, %s3513
          %p3515 = scmp.lt.s32.totalorder %s3514, 64
          %s3516 = scalar_select %p3515, %s3514, 64
          %s3517 = smul.u32 8, %s3516
          %p3518 = scmp.ne.s32.totalorder 0, %s3517
          %s3519 = smul.addr %s3513, 8
          %s3520 = scalar_lea.vmem %s9, %s3519
          // Predicated region
          $region61: #{tpu_custom_call.1} parent=59 // pred_check
            %p3521 = pneg %p3518
          $region62: #{tpu_custom_call.1} parent=59 // pred_check_branch
            %3523 = sbr.rel (%p3521) target = $region64
          $region63: #{tpu_custom_call.1} parent=59 // pred_region
            // Predicated region
            $region65: #{tpu_custom_call.1} parent=63 // pred_check
              _
            $region66: #{tpu_custom_call.1} parent=63 // pred_check_branch
              %3525 = sbr.rel (0) target = $region68
            $region67: #{tpu_custom_call.1} parent=63 // pred_region
              // Predicated region
              $region87: #{tpu_custom_call.1} parent=67 // pred_check
                _
              $region88: #{tpu_custom_call.1} parent=67 // pred_check_branch
                %3637 = sbr.rel (0) target = $region90
              $region89: #{tpu_custom_call.1} parent=67 // pred_region
                %s3638 = sshrl.u32 %s3516, 5
                // While loop
                $region91: #{tpu_custom_call.1} parent=89 // loop_pre_header
                  _
                $region92: #{tpu_custom_call.1} parent=89 // loop_header
                  %s3640 = sphi 0, %s3642
                  %p3641 = scmp.ge.s32.totalorder %s3640, %s3638
                  %s3645 = sphi 0, %s3714
                  %s3646 = sphi %s3509, %s3717
                  %s3647 = sphi %s3520, %s3718
                $region93: #{tpu_custom_call.1} parent=89 // loop_header_branch
                  %3644 = sbr.rel (%p3641) target = $region97
                $region94: #{tpu_custom_call.1} parent=89 // loop_body
                  %v3648 = vld [vmem:[%s3646] sm:$0xff]
                  %3649 = vst [vmem:[%s3647] sm:$0xff] %v3648
                  %v3650 = vld [vmem:[%s3646 + $0x8] sm:$0xff]
                  %3651 = vst [vmem:[%s3647 + $0x8] sm:$0xff] %v3650
                  %v3652 = vld [vmem:[%s3646 + $0x10] sm:$0xff]
                  %3653 = vst [vmem:[%s3647 + $0x10] sm:$0xff] %v3652
                  %v3654 = vld [vmem:[%s3646 + $0x18] sm:$0xff]
                  %3655 = vst [vmem:[%s3647 + $0x18] sm:$0xff] %v3654
                  %v3656 = vld [vmem:[%s3646 + $0x20] sm:$0xff]
                  %3657 = vst [vmem:[%s3647 + $0x20] sm:$0xff] %v3656
                  %v3658 = vld [vmem:[%s3646 + $0x28] sm:$0xff]
                  %3659 = vst [vmem:[%s3647 + $0x28] sm:$0xff] %v3658
                  %v3660 = vld [vmem:[%s3646 + $0x30] sm:$0xff]
                  %3661 = vst [vmem:[%s3647 + $0x30] sm:$0xff] %v3660
                  %v3662 = vld [vmem:[%s3646 + $0x38] sm:$0xff]
                  %3663 = vst [vmem:[%s3647 + $0x38] sm:$0xff] %v3662
                  %v3664 = vld [vmem:[%s3646 + $0x40] sm:$0xff]
                  %3665 = vst [vmem:[%s3647 + $0x40] sm:$0xff] %v3664
                  %v3666 = vld [vmem:[%s3646 + $0x48] sm:$0xff]
                  %3667 = vst [vmem:[%s3647 + $0x48] sm:$0xff] %v3666
                  %v3668 = vld [vmem:[%s3646 + $0x50] sm:$0xff]
                  %3669 = vst [vmem:[%s3647 + $0x50] sm:$0xff] %v3668
                  %v3670 = vld [vmem:[%s3646 + $0x58] sm:$0xff]
                  %3671 = vst [vmem:[%s3647 + $0x58] sm:$0xff] %v3670
                  %v3672 = vld [vmem:[%s3646 + $0x60] sm:$0xff]
                  %3673 = vst [vmem:[%s3647 + $0x60] sm:$0xff] %v3672
                  %v3674 = vld [vmem:[%s3646 + $0x68] sm:$0xff]
                  %3675 = vst [vmem:[%s3647 + $0x68] sm:$0xff] %v3674
                  %v3676 = vld [vmem:[%s3646 + $0x70] sm:$0xff]
                  %3677 = vst [vmem:[%s3647 + $0x70] sm:$0xff] %v3676
                  %v3678 = vld [vmem:[%s3646 + $0x78] sm:$0xff]
                  %3679 = vst [vmem:[%s3647 + $0x78] sm:$0xff] %v3678
                  %v3680 = vld [vmem:[%s3646 + $0x80] sm:$0xff]
                  %3681 = vst [vmem:[%s3647 + $0x80] sm:$0xff] %v3680
                  %v3682 = vld [vmem:[%s3646 + $0x88] sm:$0xff]
                  %3683 = vst [vmem:[%s3647 + $0x88] sm:$0xff] %v3682
                  %v3684 = vld [vmem:[%s3646 + $0x90] sm:$0xff]
                  %3685 = vst [vmem:[%s3647 + $0x90] sm:$0xff] %v3684
                  %v3686 = vld [vmem:[%s3646 + $0x98] sm:$0xff]
                  %3687 = vst [vmem:[%s3647 + $0x98] sm:$0xff] %v3686
                  %v3688 = vld [vmem:[%s3646 + $0xa0] sm:$0xff]
                  %3689 = vst [vmem:[%s3647 + $0xa0] sm:$0xff] %v3688
                  %v3690 = vld [vmem:[%s3646 + $0xa8] sm:$0xff]
                  %3691 = vst [vmem:[%s3647 + $0xa8] sm:$0xff] %v3690
                  %v3692 = vld [vmem:[%s3646 + $0xb0] sm:$0xff]
                  %3693 = vst [vmem:[%s3647 + $0xb0] sm:$0xff] %v3692
                  %v3694 = vld [vmem:[%s3646 + $0xb8] sm:$0xff]
                  %3695 = vst [vmem:[%s3647 + $0xb8] sm:$0xff] %v3694
                  %v3696 = vld [vmem:[%s3646 + $0xc0] sm:$0xff]
                  %3697 = vst [vmem:[%s3647 + $0xc0] sm:$0xff] %v3696
                  %v3698 = vld [vmem:[%s3646 + $0xc8] sm:$0xff]
                  %3699 = vst [vmem:[%s3647 + $0xc8] sm:$0xff] %v3698
                  %v3700 = vld [vmem:[%s3646 + $0xd0] sm:$0xff]
                  %3701 = vst [vmem:[%s3647 + $0xd0] sm:$0xff] %v3700
                  %v3702 = vld [vmem:[%s3646 + $0xd8] sm:$0xff]
                  %3703 = vst [vmem:[%s3647 + $0xd8] sm:$0xff] %v3702
                  %v3704 = vld [vmem:[%s3646 + $0xe0] sm:$0xff]
                  %3705 = vst [vmem:[%s3647 + $0xe0] sm:$0xff] %v3704
                  %v3706 = vld [vmem:[%s3646 + $0xe8] sm:$0xff]
                  %3707 = vst [vmem:[%s3647 + $0xe8] sm:$0xff] %v3706
                  %v3708 = vld [vmem:[%s3646 + $0xf0] sm:$0xff]
                  %3709 = vst [vmem:[%s3647 + $0xf0] sm:$0xff] %v3708
                  %v3710 = vld [vmem:[%s3646 + $0xf8] sm:$0xff]
                  %3711 = vst [vmem:[%s3647 + $0xf8] sm:$0xff] %v3710
                  %s3712 = sadd.s32 1, %s3645
                  %p3713 = scmp.ge.s32.totalorder %s3712, %s3638
                  %s3714 = scalar_select %p3713, 0, %s3712
                  %s3715 = smul.u32 %s3714, 256
                  %s3716 = smul.u32 %s3714, 256
                  %s3717 = scalar_lea.vmem %s3509, %s3715 [#allocation3]
                  %s3718 = scalar_lea.vmem %s3520, %s3716
                $region95: #{tpu_custom_call.1} parent=89 // loop_footer
                  %s3642 = sadd.s32 %s3640, 1
                $region96: #{tpu_custom_call.1} parent=89 // loop_footer_branch
                  %3639 = sbr.rel target = $region92
                $region97: #{tpu_custom_call.1} parent=89 // loop_exit
                  _
                %s3719 = sshrl.u32 %s3516, 5
                %s3720 = sand.u32 %s3516, 31
                %s3721 = smul.u32 %s3719, 32
                %s3722 = smul.u32 8, %s3721
                %s3723 = scalar_lea.vmem %s3509, %s3722 [#allocation3]
                %s3724 = smul.u32 8, %s3721
                %s3725 = scalar_lea.vmem %s3520, %s3724
                // While loop
                $region98: #{tpu_custom_call.1} parent=89 // loop_pre_header
                  _
                $region99: #{tpu_custom_call.1} parent=89 // loop_header
                  %s3727 = sphi 0, %s3729
                  %p3728 = scmp.ge.s32.totalorder %s3727, %s3720
                  %s3732 = sphi 0, %s3739
                  %s3733 = sphi %s3723, %s3742
                  %s3734 = sphi %s3725, %s3743
                $region100: #{tpu_custom_call.1} parent=89 // loop_header_branch
                  %3731 = sbr.rel (%p3728) target = $region104
                $region101: #{tpu_custom_call.1} parent=89 // loop_body
                  %v3735 = vld [vmem:[%s3733] sm:$0xff]
                  %3736 = vst [vmem:[%s3734] sm:$0xff] %v3735
                  %s3737 = sadd.s32 1, %s3732
                  %p3738 = scmp.ge.s32.totalorder %s3737, %s3720
                  %s3739 = scalar_select %p3738, 0, %s3737
                  %s3740 = smul.u32 %s3739, 8
                  %s3741 = smul.u32 %s3739, 8
                  %s3742 = scalar_lea.vmem %s3723, %s3740 [#allocation3]
                  %s3743 = scalar_lea.vmem %s3725, %s3741
                $region102: #{tpu_custom_call.1} parent=89 // loop_footer
                  %s3729 = sadd.s32 %s3727, 1
                $region103: #{tpu_custom_call.1} parent=89 // loop_footer_branch
                  %3726 = sbr.rel target = $region99
                $region104: #{tpu_custom_call.1} parent=89 // loop_exit
                  _
              $region90: #{tpu_custom_call.1} parent=67 // pred_fallthru
                _
              // Predicated region
              $region105: #{tpu_custom_call.1} parent=67 // pred_check
                _
              $region106: #{tpu_custom_call.1} parent=67 // pred_check_branch
                %3745 = sbr.rel target = $region108
              $region107: #{tpu_custom_call.1} parent=67 // pred_region
                _
              $region108: #{tpu_custom_call.1} parent=67 // pred_fallthru
                _
            $region68: #{tpu_custom_call.1} parent=63 // pred_fallthru
              _
            // Predicated region
            $region69: #{tpu_custom_call.1} parent=63 // pred_check
              _
            $region70: #{tpu_custom_call.1} parent=63 // pred_check_branch
              %3527 = sbr.rel target = $region72
            $region71: #{tpu_custom_call.1} parent=63 // pred_region
              %s3529 = ssub.s32 256, 1
              %s3530 = sshrl.u32 %s3516, 5
              // While loop
              $region73: #{tpu_custom_call.1} parent=71 // loop_pre_header
                _
              $region74: #{tpu_custom_call.1} parent=71 // loop_header
                %s3532 = sphi 0, %s3534
                %p3533 = scmp.ge.s32.totalorder %s3532, %s3530
                %s3537 = sphi 0, %s3606
                %s3538 = sphi %s3509, %s3609
                %s3539 = sphi %s3520, %s3610
              $region75: #{tpu_custom_call.1} parent=71 // loop_header_branch
                %3536 = sbr.rel (%p3533) target = $region79
              $region76: #{tpu_custom_call.1} parent=71 // loop_body
                %v3540 = vld [vmem:[%s3538] sm:%s3529]
                %3541 = vst [vmem:[%s3539] sm:%s3529] %v3540
                %v3542 = vld [vmem:[%s3538 + $0x8] sm:%s3529]
                %3543 = vst [vmem:[%s3539 + $0x8] sm:%s3529] %v3542
                %v3544 = vld [vmem:[%s3538 + $0x10] sm:%s3529]
                %3545 = vst [vmem:[%s3539 + $0x10] sm:%s3529] %v3544
                %v3546 = vld [vmem:[%s3538 + $0x18] sm:%s3529]
                %3547 = vst [vmem:[%s3539 + $0x18] sm:%s3529] %v3546
                %v3548 = vld [vmem:[%s3538 + $0x20] sm:%s3529]
                %3549 = vst [vmem:[%s3539 + $0x20] sm:%s3529] %v3548
                %v3550 = vld [vmem:[%s3538 + $0x28] sm:%s3529]
                %3551 = vst [vmem:[%s3539 + $0x28] sm:%s3529] %v3550
                %v3552 = vld [vmem:[%s3538 + $0x30] sm:%s3529]
                %3553 = vst [vmem:[%s3539 + $0x30] sm:%s3529] %v3552
                %v3554 = vld [vmem:[%s3538 + $0x38] sm:%s3529]
                %3555 = vst [vmem:[%s3539 + $0x38] sm:%s3529] %v3554
                %v3556 = vld [vmem:[%s3538 + $0x40] sm:%s3529]
                %3557 = vst [vmem:[%s3539 + $0x40] sm:%s3529] %v3556
                %v3558 = vld [vmem:[%s3538 + $0x48] sm:%s3529]
                %3559 = vst [vmem:[%s3539 + $0x48] sm:%s3529] %v3558
                %v3560 = vld [vmem:[%s3538 + $0x50] sm:%s3529]
                %3561 = vst [vmem:[%s3539 + $0x50] sm:%s3529] %v3560
                %v3562 = vld [vmem:[%s3538 + $0x58] sm:%s3529]
                %3563 = vst [vmem:[%s3539 + $0x58] sm:%s3529] %v3562
                %v3564 = vld [vmem:[%s3538 + $0x60] sm:%s3529]
                %3565 = vst [vmem:[%s3539 + $0x60] sm:%s3529] %v3564
                %v3566 = vld [vmem:[%s3538 + $0x68] sm:%s3529]
                %3567 = vst [vmem:[%s3539 + $0x68] sm:%s3529] %v3566
                %v3568 = vld [vmem:[%s3538 + $0x70] sm:%s3529]
                %3569 = vst [vmem:[%s3539 + $0x70] sm:%s3529] %v3568
                %v3570 = vld [vmem:[%s3538 + $0x78] sm:%s3529]
                %3571 = vst [vmem:[%s3539 + $0x78] sm:%s3529] %v3570
                %v3572 = vld [vmem:[%s3538 + $0x80] sm:%s3529]
                %3573 = vst [vmem:[%s3539 + $0x80] sm:%s3529] %v3572
                %v3574 = vld [vmem:[%s3538 + $0x88] sm:%s3529]
                %3575 = vst [vmem:[%s3539 + $0x88] sm:%s3529] %v3574
                %v3576 = vld [vmem:[%s3538 + $0x90] sm:%s3529]
                %3577 = vst [vmem:[%s3539 + $0x90] sm:%s3529] %v3576
                %v3578 = vld [vmem:[%s3538 + $0x98] sm:%s3529]
                %3579 = vst [vmem:[%s3539 + $0x98] sm:%s3529] %v3578
                %v3580 = vld [vmem:[%s3538 + $0xa0] sm:%s3529]
                %3581 = vst [vmem:[%s3539 + $0xa0] sm:%s3529] %v3580
                %v3582 = vld [vmem:[%s3538 + $0xa8] sm:%s3529]
                %3583 = vst [vmem:[%s3539 + $0xa8] sm:%s3529] %v3582
                %v3584 = vld [vmem:[%s3538 + $0xb0] sm:%s3529]
                %3585 = vst [vmem:[%s3539 + $0xb0] sm:%s3529] %v3584
                %v3586 = vld [vmem:[%s3538 + $0xb8] sm:%s3529]
                %3587 = vst [vmem:[%s3539 + $0xb8] sm:%s3529] %v3586
                %v3588 = vld [vmem:[%s3538 + $0xc0] sm:%s3529]
                %3589 = vst [vmem:[%s3539 + $0xc0] sm:%s3529] %v3588
                %v3590 = vld [vmem:[%s3538 + $0xc8] sm:%s3529]
                %3591 = vst [vmem:[%s3539 + $0xc8] sm:%s3529] %v3590
                %v3592 = vld [vmem:[%s3538 + $0xd0] sm:%s3529]
                %3593 = vst [vmem:[%s3539 + $0xd0] sm:%s3529] %v3592
                %v3594 = vld [vmem:[%s3538 + $0xd8] sm:%s3529]
                %3595 = vst [vmem:[%s3539 + $0xd8] sm:%s3529] %v3594
                %v3596 = vld [vmem:[%s3538 + $0xe0] sm:%s3529]
                %3597 = vst [vmem:[%s3539 + $0xe0] sm:%s3529] %v3596
                %v3598 = vld [vmem:[%s3538 + $0xe8] sm:%s3529]
                %3599 = vst [vmem:[%s3539 + $0xe8] sm:%s3529] %v3598
                %v3600 = vld [vmem:[%s3538 + $0xf0] sm:%s3529]
                %3601 = vst [vmem:[%s3539 + $0xf0] sm:%s3529] %v3600
                %v3602 = vld [vmem:[%s3538 + $0xf8] sm:%s3529]
                %3603 = vst [vmem:[%s3539 + $0xf8] sm:%s3529] %v3602
                %s3604 = sadd.s32 1, %s3537
                %p3605 = scmp.ge.s32.totalorder %s3604, %s3530
                %s3606 = scalar_select %p3605, 0, %s3604
                %s3607 = smul.u32 %s3606, 256
                %s3608 = smul.u32 %s3606, 256
                %s3609 = scalar_lea.vmem %s3509, %s3607 [#allocation3]
                %s3610 = scalar_lea.vmem %s3520, %s3608
              $region77: #{tpu_custom_call.1} parent=71 // loop_footer
                %s3534 = sadd.s32 %s3532, 1
              $region78: #{tpu_custom_call.1} parent=71 // loop_footer_branch
                %3531 = sbr.rel target = $region74
              $region79: #{tpu_custom_call.1} parent=71 // loop_exit
                _
              %s3611 = sshrl.u32 %s3516, 5
              %s3612 = sand.u32 %s3516, 31
              %s3613 = smul.u32 %s3611, 32
              %s3614 = smul.u32 8, %s3613
              %s3615 = scalar_lea.vmem %s3509, %s3614 [#allocation3]
              %s3616 = smul.u32 8, %s3613
              %s3617 = scalar_lea.vmem %s3520, %s3616
              // While loop
              $region80: #{tpu_custom_call.1} parent=71 // loop_pre_header
                _
              $region81: #{tpu_custom_call.1} parent=71 // loop_header
                %s3619 = sphi 0, %s3621
                %p3620 = scmp.ge.s32.totalorder %s3619, %s3612
                %s3624 = sphi 0, %s3631
                %s3625 = sphi %s3615, %s3634
                %s3626 = sphi %s3617, %s3635
              $region82: #{tpu_custom_call.1} parent=71 // loop_header_branch
                %3623 = sbr.rel (%p3620) target = $region86
              $region83: #{tpu_custom_call.1} parent=71 // loop_body
                %v3627 = vld [vmem:[%s3625] sm:%s3529]
                %3628 = vst [vmem:[%s3626] sm:%s3529] %v3627
                %s3629 = sadd.s32 1, %s3624
                %p3630 = scmp.ge.s32.totalorder %s3629, %s3612
                %s3631 = scalar_select %p3630, 0, %s3629
                %s3632 = smul.u32 %s3631, 8
                %s3633 = smul.u32 %s3631, 8
                %s3634 = scalar_lea.vmem %s3615, %s3632 [#allocation3]
                %s3635 = scalar_lea.vmem %s3617, %s3633
              $region84: #{tpu_custom_call.1} parent=71 // loop_footer
                %s3621 = sadd.s32 %s3619, 1
              $region85: #{tpu_custom_call.1} parent=71 // loop_footer_branch
                %3618 = sbr.rel target = $region81
              $region86: #{tpu_custom_call.1} parent=71 // loop_exit
                _
            $region72: #{tpu_custom_call.1} parent=63 // pred_fallthru
              _
          $region64: #{tpu_custom_call.1} parent=59 // pred_fallthru
            _
          %3746 = vnop
        $region60: #{tpu_custom_call.1} parent=55 // pred_fallthru
          _
      $region56: #{tpu_custom_call.1} parent=5 // pred_fallthru
        _
      %p3747 = scmp.le.s32.totalorder 2, %s17
      // Predicated region
      $region109: #{tpu_custom_call.1} parent=5 // pred_check
        %p3748 = pneg %p3747
      $region110: #{tpu_custom_call.1} parent=5 // pred_check_branch
        %3750 = sbr.rel (%p3748) target = $region112
      $region111: #{tpu_custom_call.1} parent=5 // pred_region
        %s3751 = ssub.s32 %s17, 2
        // Predicated region
        $region113: #{tpu_custom_call.1} parent=111 // pred_check
          %p3752 = pneg %p245
        $region114: #{tpu_custom_call.1} parent=111 // pred_check_branch
          %3754 = sbr.rel (%p3752) target = $region116
        $region115: #{tpu_custom_call.1} parent=111 // pred_region
          %s3755 = sand.u32 %s230, 1
          %s3756 = sand.u32 %s230, 1
          %s3757 = smul.addr %s3756, 512
          %s3758 = scalar_lea.vmem [#allocation3], %s3757
        $region116: #{tpu_custom_call.1} parent=111 // pred_fallthru
          _
      $region112: #{tpu_custom_call.1} parent=5 // pred_fallthru
        _
    $region6: #{tpu_custom_call.1} parent=1 // loop_footer
      %s21 = sadd.s32 1, %s17
    $region7: #{tpu_custom_call.1} parent=1 // loop_footer_branch
      %16 = sbr.rel target = $region3
    $region8: #{tpu_custom_call.1} parent=1 // loop_exit
      _

</llo_original>
